<compile_context>
chip_gen: v5e
topology: v5e:2x2
jax: 0.10.0
libtpu: 0.0.40
codegen_flags: <defaults>
</compile_context>

<pallas_src>
import functools

import jax
import jax.numpy as jnp
from jax.experimental import pallas as pl
from jax.experimental.pallas import tpu as pltpu


# Slab indices for the packed weight/bias operand.
_W1S, _B1S = 0, 1          # slow stem   3 -> 32
_W1F, _B1F = 2, 3          # fast stem   3 -> 8
_WFU, _BFU = 4, 5          # lateral     8 -> 16
_W2SA, _W2SB, _B2S = 6, 7, 8   # slow stage2 (32 + 16) -> 64 (split weights)
_W2F, _B2F = 9, 10         # fast stage2 8 -> 16
_N_SLAB = 11
_SLAB_DIM = 64


# ----------------------------- fused Pallas kernel -----------------------------

def _fused_slowfast_kernel(
    xs_ref, xf_ref, w_ref,             # inputs: slow slab, fast slab, packed weights
    slow_out_ref, fast_out_ref,        # outputs: (1, 64, 1), (1, 16, 1)
    slow_acc_ref, fast_acc_ref,        # VMEM scratch: lane-dense accumulators
    *, alpha, dt, hw, acc_lanes, inv_slow, inv_fast,
):
    tb = pl.program_id(1)
    n_tb = pl.num_programs(1)

    @pl.when(tb == 0)
    def _():
        slow_acc_ref[...] = jnp.zeros_like(slow_acc_ref)
        fast_acc_ref[...] = jnp.zeros_like(fast_acc_ref)

    def conv(w_idx, b_idx, cout, cin, x):
        # channels-on-sublanes pointwise conv + ReLU: (Cout, Cin) @ (Cin, M)
        w = w_ref[w_idx, :cout, :cin]
        b = w_ref[b_idx, :cout, 0:1]
        acc = jnp.dot(w, x, preferred_element_type=jnp.float32)
        return jnp.maximum(acc + b, 0.0)

    def partial_sum(x):
        # Fold positions down to acc_lanes lanes with aligned VPU adds; the
        # final (XLU) reduce to width 1 happens once, in the finalize branch.
        c, m = x.shape
        if acc_lanes == 1:
            return jnp.sum(x, axis=1, keepdims=True)
        acc = x[:, :acc_lanes]
        for k in range(1, m // acc_lanes):
            acc = acc + x[:, k * acc_lanes:(k + 1) * acc_lanes]
        return acc

    # ---- fast pathway (computed first so its large intermediates stay short-lived) ----
    xf = xf_ref[0]                                   # (3, tm_f)
    fast1 = conv(_W1F, _B1F, 8, 3, xf)               # (8, tm_f)
    fast2 = conv(_W2F, _B2F, 16, 8, fast1)           # (16, tm_f)
    fast_acc_ref[...] += partial_sum(fast2)

    # ---- lateral: slice the stride-alpha frames straight out of fast1 ----
    # Within this tile the subsampled frames sit at local lane offsets
    # k*alpha*hw (k = 0..dt-1), each hw lanes wide — static, lane-aligned slices.
    chunks = [fast1[:, k * alpha * hw: k * alpha * hw + hw] for k in range(dt)]
    fast1_sub = chunks[0] if dt == 1 else jnp.concatenate(chunks, axis=1)  # (8, tm_s)
    lateral = conv(_WFU, _BFU, 16, 8, fast1_sub)     # (16, tm_s)

    # ---- slow pathway; concat([slow1, lateral]) expressed as split-weight sum ----
    xs = xs_ref[0]                                   # (3, tm_s)
    slow1 = conv(_W1S, _B1S, 32, 3, xs)              # (32, tm_s)
    s2 = jnp.dot(w_ref[_W2SA, :64, :32], slow1, preferred_element_type=jnp.float32)
    s2 = s2 + jnp.dot(w_ref[_W2SB, :64, :16], lateral, preferred_element_type=jnp.float32)
    slow2 = jnp.maximum(s2 + w_ref[_B2S, :64, 0:1], 0.0)   # (64, tm_s)
    slow_acc_ref[...] += partial_sum(slow2)

    # ---- finalize global mean (AvgPool3d full window + AdaptiveAvgPool3d(1)) ----
    @pl.when(tb == n_tb - 1)
    def _():
        slow_tot = jnp.sum(slow_acc_ref[...], axis=1, keepdims=True)   # (64, 1)
        fast_tot = jnp.sum(fast_acc_ref[...], axis=1, keepdims=True)   # (16, 1)
        slow_out_ref[...] = (slow_tot * inv_slow)[None]
        fast_out_ref[...] = (fast_tot * inv_fast)[None]


# ------------------------------- wrapper / glue -------------------------------

def _step_vmem_bytes(dt, hw, alpha):
    """Rough per-grid-step VMEM footprint (bytes) for the tile picker."""
    tm_s = dt * hw
    tm_f = alpha * tm_s
    inputs = 2 * 3 * (tm_s + tm_f) * 4                              # double-buffered xs/xf
    inter = ((8 + 16) * tm_f + (8 + 16 + 32 + 64 + 64) * tm_s) * 4  # live f32 temporaries
    return inputs + inter + (1 << 20)                               # weights/accs/slack


def _pick_time_tile(ts, hw, alpha, vmem_budget, max_fast_lanes=128 * 1024):
    """Largest temporal tile (in slow frames) whose lane width is a multiple of
    128 (or the full T axis) and whose per-step footprint fits the VMEM budget."""
    valid = [d for d in range(1, ts + 1)
             if ts % d == 0 and ((d * hw) % 128 == 0 or d == ts)]
    fits = [d for d in valid if _step_vmem_bytes(d, hw, alpha) <= vmem_budget]
    if not fits:
        return valid[0]
    capped = [d for d in fits if d * alpha * hw <= max_fast_lanes]
    return max(capped) if capped else min(fits)


def init_params(key):
    ks = jax.random.split(key, 5)

    def w_init(k, cin, cout):
        return jax.random.normal(k, (cin, cout), jnp.float32) * (2.0 / cin) ** 0.5

    return {
        "slow_w1": w_init(ks[0], 3, 32), "slow_b1": jnp.zeros((32,), jnp.float32),
        "fast_w1": w_init(ks[1], 3, 8), "fast_b1": jnp.zeros((8,), jnp.float32),
        "fuse_w": w_init(ks[2], 8, 16), "fuse_b": jnp.zeros((16,), jnp.float32),
        "slow_w2": w_init(ks[3], 48, 64), "slow_b2": jnp.zeros((64,), jnp.float32),
        "fast_w2": w_init(ks[4], 8, 16), "fast_b2": jnp.zeros((16,), jnp.float32),
    }


def _pack_weights(params):
    """All transposed (Cout, Cin) weights and (Cout, 1) biases in one f32 slab."""
    w2 = params["slow_w2"]
    mats = [None] * _N_SLAB
    mats[_W1S], mats[_B1S] = params["slow_w1"].T, params["slow_b1"].reshape(-1, 1)
    mats[_W1F], mats[_B1F] = params["fast_w1"].T, params["fast_b1"].reshape(-1, 1)
    mats[_WFU], mats[_BFU] = params["fuse_w"].T, params["fuse_b"].reshape(-1, 1)
    mats[_W2SA], mats[_W2SB] = w2[:32].T, w2[32:].T
    mats[_B2S] = params["slow_b2"].reshape(-1, 1)
    mats[_W2F], mats[_B2F] = params["fast_w2"].T, params["fast_b2"].reshape(-1, 1)

    slab = jnp.zeros((_N_SLAB, _SLAB_DIM, _SLAB_DIM), jnp.float32)
    for i, m in enumerate(mats):
        slab = slab.at[i, :m.shape[0], :m.shape[1]].set(m.astype(jnp.float32))
    return slab


def slowfast_forward(params, slow_x, fast_x, *, alpha=4):
    """Mirrors slowfast.forward: feature_extraction -> pathway avg pools -> adaptive pool.

    slow_x: (N, 3, T_slow, H, W), fast_x: (N, 3, T_fast, H, W), T_fast = alpha * T_slow.
    Returns (slow_feature (N, 64, 1, 1, 1), fast_feature (N, 16, 1, 1, 1)).
    """
    n, cin, ts, h, w = slow_x.shape
    tf = fast_x.shape[2]
    assert tf == alpha * ts, (tf, alpha, ts)
    hw = h * w

    # Generation-aware VMEM budget (v7x: 64 MiB/TC, v5e/v6e: 128 MiB), with
    # headroom; the scoped default (16/32 MiB) would otherwise cap tile growth.
    vmem_cap = 64 << 20
    try:
        vmem_cap = int(pltpu.get_tpu_info().vmem_capacity_bytes)
    except Exception:
        pass
    vmem_limit = int(min(vmem_cap - (8 << 20), 100 << 20))

    dt = _pick_time_tile(ts, hw, alpha, int(vmem_limit * 0.75))
    t_blocks = ts // dt
    tm_s = dt * hw
    tm_f = alpha * tm_s
    acc_lanes = 128 if tm_s % 128 == 0 else 1

    # Channels-on-sublanes slabs: pure reshapes, no transposes, no extra HBM pass.
    # NOTE: inputs are consumed in their given dtype; on v5e, handing them over
    # already in bf16 would halve HBM bytes (do NOT cast here — extra HBM pass).
    xs = slow_x.reshape(n, cin, ts * hw)
    xf = fast_x.reshape(n, cin, tf * hw)
    slab = _pack_weights(params)

    kernel = functools.partial(
        _fused_slowfast_kernel,
        alpha=alpha, dt=dt, hw=hw, acc_lanes=acc_lanes,
        inv_slow=1.0 / float(ts * hw),
        inv_fast=1.0 / float(tf * hw),
    )

    grid_spec = pltpu.PrefetchScalarGridSpec(
        num_scalar_prefetch=0,
        grid=(n, t_blocks),
        in_specs=[
            pl.BlockSpec((1, cin, tm_s), lambda i, j: (i, 0, j)),
            pl.BlockSpec((1, cin, tm_f), lambda i, j: (i, 0, j)),
            pl.BlockSpec(slab.shape, lambda i, j: (0, 0, 0)),
        ],
        out_specs=[
            pl.BlockSpec((1, 64, 1), lambda i, j: (i, 0, 0)),
            pl.BlockSpec((1, 16, 1), lambda i, j: (i, 0, 0)),
        ],
        scratch_shapes=[
            pltpu.VMEM((64, acc_lanes), jnp.float32),
            pltpu.VMEM((16, acc_lanes), jnp.float32),
        ],
    )

    slow_feat, fast_feat = pl.pallas_call(
        kernel,
        out_shape=(jax.ShapeDtypeStruct((n, 64, 1), jnp.float32),
                   jax.ShapeDtypeStruct((n, 16, 1), jnp.float32)),
        grid_spec=grid_spec,
        compiler_params=pltpu.CompilerParams(
            dimension_semantics=("parallel", "arbitrary"),
            vmem_limit_bytes=vmem_limit),
    )(xs, xf, slab)

    return (slow_feat.reshape(n, 64, 1, 1, 1),
            fast_feat.reshape(n, 16, 1, 1, 1))


# ------------------------------ pure-JAX reference -----------------------------

def _reference_forward(params, slow_x, fast_x, alpha):
    def pw(x, w, b):
        y = jnp.einsum("ncthw,cd->ndthw", x, w)
        return jnp.maximum(y + b[None, :, None, None, None], 0.0)

    slow1 = pw(slow_x, params["slow_w1"], params["slow_b1"])
    fast1 = pw(fast_x, params["fast_w1"], params["fast_b1"])
    lateral = pw(fast1[:, :, ::alpha], params["fuse_w"], params["fuse_b"])
    slow_cat = jnp.concatenate([slow1, lateral], axis=1)
    slow2 = pw(slow_cat, params["slow_w2"], params["slow_b2"])
    fast2 = pw(fast1, params["fast_w2"], params["fast_b2"])
    sf = slow2.mean(axis=(2, 3, 4)).reshape(slow2.shape[0], -1, 1, 1, 1)
    ff = fast2.mean(axis=(2, 3, 4)).reshape(fast2.shape[0], -1, 1, 1, 1)
    return sf, ff


if __name__ == "__main__":
    key = jax.random.PRNGKey(0)
    k_slow, k_fast, k_par = jax.random.split(key, 3)

    N, C, T_SLOW, T_FAST, H, W = 2, 3, 4, 16, 16, 16
    slow_x = jax.random.normal(k_slow, (N, C, T_SLOW, H, W), jnp.float32)
    fast_x = jax.random.normal(k_fast, (N, C, T_FAST, H, W), jnp.float32)
    params = init_params(k_par)

    fwd = jax.jit(functools.partial(slowfast_forward, params,
                                    alpha=T_FAST // T_SLOW))
    slow_feature, fast_feature = fwd(slow_x, fast_x)
    jax.block_until_ready((slow_feature, fast_feature))

    assert slow_feature.shape == (N, 64, 1, 1, 1), slow_feature.shape
    assert fast_feature.shape == (N, 16, 1, 1, 1), fast_feature.shape
    assert jnp.all(jnp.isfinite(slow_feature)) and jnp.all(jnp.isfinite(fast_feature))

    sf_ref, ff_ref = _reference_forward(params, slow_x, fast_x, T_FAST // T_SLOW)
    assert jnp.allclose(slow_feature, sf_ref, rtol=1e-2, atol=1e-2)
    assert jnp.allclose(fast_feature, ff_ref, rtol=1e-2, atol=1e-2)

    print("KERNEL_OK")
</pallas_src>

<mosaic_0001>
module attributes {stable_mosaic.version = 11 : i64} {
  func.func @_fused_slowfast_kernel(%arg0: i32, %arg1: i32, %arg2: memref<1x3x1024xf32, #tpu.memory_space<vmem>>, %arg3: memref<1x3x4096xf32, #tpu.memory_space<vmem>>, %arg4: memref<11x64x64xf32, #tpu.memory_space<vmem>>, %arg5: memref<1x64x1xf32, #tpu.memory_space<vmem>>, %arg6: memref<1x16x1xf32, #tpu.memory_space<vmem>>, %arg7: memref<64x128xf32, #tpu.memory_space<vmem>>, %arg8: memref<16x128xf32, #tpu.memory_space<vmem>>) attributes {dimension_semantics = [#tpu.dimension_semantics<parallel>, #tpu.dimension_semantics<arbitrary>], iteration_bounds = array<i64: 2, 1>, scalar_prefetch = 0 : i64, scratch_operands = 2 : i64, tpu.core_type = #tpu.core_type<tc>, window_params = [{transform_indices = @transform_0, window_bounds = array<i64: 1, 3, 1024>}, {transform_indices = @transform_1, window_bounds = array<i64: 1, 3, 4096>}, {pipeline_mode = #tpu.pipeline_mode<synchronous>, transform_indices = @transform_2, window_bounds = array<i64: 11, 64, 64>}, {transform_indices = @transform_3, window_bounds = array<i64: 1, 64, 1>}, {transform_indices = @transform_4, window_bounds = array<i64: 1, 16, 1>}]} {
    %c0_i32 = arith.constant 0 : i32
    %0 = arith.cmpi eq, %arg1, %c0_i32 : i32
    %1 = arith.extui %0 : i1 to i32
    %c0_i32_0 = arith.constant 0 : i32
    %2 = arith.cmpi ne, %1, %c0_i32_0 : i32
    scf.if %2 {
      %cst_49 = arith.constant 0.000000e+00 : f32
      %148 = vector.broadcast %cst_49 : f32 to vector<64x128xf32>
      %c0_50 = arith.constant 0 : index
      %c0_51 = arith.constant 0 : index
      %149 = vector.load %arg7[%c0_50, %c0_51] : memref<64x128xf32, #tpu.memory_space<vmem>>, vector<64x128xf32>
      tpu.vector_store %arg7[%c0_50, %c0_51], %148 {strides = array<i32>} : memref<64x128xf32, #tpu.memory_space<vmem>>, vector<64x128xf32>,
      %cst_52 = arith.constant 0.000000e+00 : f32
      %150 = vector.broadcast %cst_52 : f32 to vector<16x128xf32>
      %c0_53 = arith.constant 0 : index
      %c0_54 = arith.constant 0 : index
      %151 = vector.load %arg8[%c0_53, %c0_54] : memref<16x128xf32, #tpu.memory_space<vmem>>, vector<16x128xf32>
      tpu.vector_store %arg8[%c0_53, %c0_54], %150 {strides = array<i32>} : memref<16x128xf32, #tpu.memory_space<vmem>>, vector<16x128xf32>,
    } else {
    }
    %c0 = arith.constant 0 : index
    %c0_1 = arith.constant 0 : index
    %c0_2 = arith.constant 0 : index
    %3 = vector.load %arg3[%c0, %c0_1, %c0_2] : memref<1x3x4096xf32, #tpu.memory_space<vmem>>, vector<1x3x4096xf32>
    %4 = vector.shape_cast %3 : vector<1x3x4096xf32> to vector<3x4096xf32>
    %c2 = arith.constant 2 : index
    %c0_3 = arith.constant 0 : index
    %c0_4 = arith.constant 0 : index
    %5 = vector.load %arg4[%c2, %c0_3, %c0_4] : memref<11x64x64xf32, #tpu.memory_space<vmem>>, vector<1x8x3xf32>
    %6 = vector.shape_cast %5 : vector<1x8x3xf32> to vector<8x3xf32>
    %c3 = arith.constant 3 : index
    %c0_5 = arith.constant 0 : index
    %c0_6 = arith.constant 0 : index
    %7 = vector.load %arg4[%c3, %c0_5, %c0_6] : memref<11x64x64xf32, #tpu.memory_space<vmem>>, vector<1x8x1xf32>
    %8 = vector.shape_cast %7 : vector<1x8x1xf32> to vector<8x1xf32>
    %cst = arith.constant dense<0.000000e+00> : vector<8x4096xf32>
    %9 = tpu.matmul %6, %4, %cst {dimension_numbers = #tpu.dot_dimension_numbers<[1], [0], [0], [1], [0, 0, 1, 1], [], []>} : vector<8x3xf32>, vector<3x4096xf32>, vector<8x4096xf32> -> vector<8x4096xf32>
    %10 = vector.broadcast %8 : vector<8x1xf32> to vector<8x4096xf32>
    %11 = arith.addf %9, %10 : vector<8x4096xf32>
    %cst_7 = arith.constant 0.000000e+00 : f32
    %12 = vector.broadcast %cst_7 : f32 to vector<8x4096xf32>
    %13 = arith.maximumf %11, %12 : vector<8x4096xf32>
    %c9 = arith.constant 9 : index
    %c0_8 = arith.constant 0 : index
    %c0_9 = arith.constant 0 : index
    %14 = vector.load %arg4[%c9, %c0_8, %c0_9] : memref<11x64x64xf32, #tpu.memory_space<vmem>>, vector<1x16x8xf32>
    %15 = vector.shape_cast %14 : vector<1x16x8xf32> to vector<16x8xf32>
    %c10 = arith.constant 10 : index
    %c0_10 = arith.constant 0 : index
    %c0_11 = arith.constant 0 : index
    %16 = vector.load %arg4[%c10, %c0_10, %c0_11] : memref<11x64x64xf32, #tpu.memory_space<vmem>>, vector<1x16x1xf32>
    %17 = vector.shape_cast %16 : vector<1x16x1xf32> to vector<16x1xf32>
    %cst_12 = arith.constant dense<0.000000e+00> : vector<16x4096xf32>
    %18 = tpu.matmul %15, %13, %cst_12 {dimension_numbers = #tpu.dot_dimension_numbers<[1], [0], [0], [1], [0, 0, 1, 1], [], []>} : vector<16x8xf32>, vector<8x4096xf32>, vector<16x4096xf32> -> vector<16x4096xf32>
    %19 = vector.broadcast %17 : vector<16x1xf32> to vector<16x4096xf32>
    %20 = arith.addf %18, %19 : vector<16x4096xf32>
    %cst_13 = arith.constant 0.000000e+00 : f32
    %21 = vector.broadcast %cst_13 : f32 to vector<16x4096xf32>
    %22 = arith.maximumf %20, %21 : vector<16x4096xf32>
    %c0_14 = arith.constant 0 : index
    %c0_15 = arith.constant 0 : index
    %23 = vector.load %arg8[%c0_14, %c0_15] : memref<16x128xf32, #tpu.memory_space<vmem>>, vector<16x128xf32>
    %24 = vector.extract_strided_slice %22 {offsets = [0, 0], sizes = [16, 128], strides = [1, 1]} : vector<16x4096xf32> to vector<16x128xf32>
    %25 = vector.extract_strided_slice %22 {offsets = [0, 128], sizes = [16, 128], strides = [1, 1]} : vector<16x4096xf32> to vector<16x128xf32>
    %26 = arith.addf %24, %25 : vector<16x128xf32>
    %27 = vector.extract_strided_slice %22 {offsets = [0, 256], sizes = [16, 128], strides = [1, 1]} : vector<16x4096xf32> to vector<16x128xf32>
    %28 = arith.addf %26, %27 : vector<16x128xf32>
    %29 = vector.extract_strided_slice %22 {offsets = [0, 384], sizes = [16, 128], strides = [1, 1]} : vector<16x4096xf32> to vector<16x128xf32>
    %30 = arith.addf %28, %29 : vector<16x128xf32>
    %31 = vector.extract_strided_slice %22 {offsets = [0, 512], sizes = [16, 128], strides = [1, 1]} : vector<16x4096xf32> to vector<16x128xf32>
    %32 = arith.addf %30, %31 : vector<16x128xf32>
    %33 = vector.extract_strided_slice %22 {offsets = [0, 640], sizes = [16, 128], strides = [1, 1]} : vector<16x4096xf32> to vector<16x128xf32>
    %34 = arith.addf %32, %33 : vector<16x128xf32>
    %35 = vector.extract_strided_slice %22 {offsets = [0, 768], sizes = [16, 128], strides = [1, 1]} : vector<16x4096xf32> to vector<16x128xf32>
    %36 = arith.addf %34, %35 : vector<16x128xf32>
    %37 = vector.extract_strided_slice %22 {offsets = [0, 896], sizes = [16, 128], strides = [1, 1]} : vector<16x4096xf32> to vector<16x128xf32>
    %38 = arith.addf %36, %37 : vector<16x128xf32>
    %39 = vector.extract_strided_slice %22 {offsets = [0, 1024], sizes = [16, 128], strides = [1, 1]} : vector<16x4096xf32> to vector<16x128xf32>
    %40 = arith.addf %38, %39 : vector<16x128xf32>
    %41 = vector.extract_strided_slice %22 {offsets = [0, 1152], sizes = [16, 128], strides = [1, 1]} : vector<16x4096xf32> to vector<16x128xf32>
    %42 = arith.addf %40, %41 : vector<16x128xf32>
    %43 = vector.extract_strided_slice %22 {offsets = [0, 1280], sizes = [16, 128], strides = [1, 1]} : vector<16x4096xf32> to vector<16x128xf32>
    %44 = arith.addf %42, %43 : vector<16x128xf32>
    %45 = vector.extract_strided_slice %22 {offsets = [0, 1408], sizes = [16, 128], strides = [1, 1]} : vector<16x4096xf32> to vector<16x128xf32>
    %46 = arith.addf %44, %45 : vector<16x128xf32>
    %47 = vector.extract_strided_slice %22 {offsets = [0, 1536], sizes = [16, 128], strides = [1, 1]} : vector<16x4096xf32> to vector<16x128xf32>
    %48 = arith.addf %46, %47 : vector<16x128xf32>
    %49 = vector.extract_strided_slice %22 {offsets = [0, 1664], sizes = [16, 128], strides = [1, 1]} : vector<16x4096xf32> to vector<16x128xf32>
    %50 = arith.addf %48, %49 : vector<16x128xf32>
    %51 = vector.extract_strided_slice %22 {offsets = [0, 1792], sizes = [16, 128], strides = [1, 1]} : vector<16x4096xf32> to vector<16x128xf32>
    %52 = arith.addf %50, %51 : vector<16x128xf32>
    %53 = vector.extract_strided_slice %22 {offsets = [0, 1920], sizes = [16, 128], strides = [1, 1]} : vector<16x4096xf32> to vector<16x128xf32>
    %54 = arith.addf %52, %53 : vector<16x128xf32>
    %55 = vector.extract_strided_slice %22 {offsets = [0, 2048], sizes = [16, 128], strides = [1, 1]} : vector<16x4096xf32> to vector<16x128xf32>
    %56 = arith.addf %54, %55 : vector<16x128xf32>
    %57 = vector.extract_strided_slice %22 {offsets = [0, 2176], sizes = [16, 128], strides = [1, 1]} : vector<16x4096xf32> to vector<16x128xf32>
    %58 = arith.addf %56, %57 : vector<16x128xf32>
    %59 = vector.extract_strided_slice %22 {offsets = [0, 2304], sizes = [16, 128], strides = [1, 1]} : vector<16x4096xf32> to vector<16x128xf32>
    %60 = arith.addf %58, %59 : vector<16x128xf32>
    %61 = vector.extract_strided_slice %22 {offsets = [0, 2432], sizes = [16, 128], strides = [1, 1]} : vector<16x4096xf32> to vector<16x128xf32>
    %62 = arith.addf %60, %61 : vector<16x128xf32>
    %63 = vector.extract_strided_slice %22 {offsets = [0, 2560], sizes = [16, 128], strides = [1, 1]} : vector<16x4096xf32> to vector<16x128xf32>
    %64 = arith.addf %62, %63 : vector<16x128xf32>
    %65 = vector.extract_strided_slice %22 {offsets = [0, 2688], sizes = [16, 128], strides = [1, 1]} : vector<16x4096xf32> to vector<16x128xf32>
    %66 = arith.addf %64, %65 : vector<16x128xf32>
    %67 = vector.extract_strided_slice %22 {offsets = [0, 2816], sizes = [16, 128], strides = [1, 1]} : vector<16x4096xf32> to vector<16x128xf32>
    %68 = arith.addf %66, %67 : vector<16x128xf32>
    %69 = vector.extract_strided_slice %22 {offsets = [0, 2944], sizes = [16, 128], strides = [1, 1]} : vector<16x4096xf32> to vector<16x128xf32>
    %70 = arith.addf %68, %69 : vector<16x128xf32>
    %71 = vector.extract_strided_slice %22 {offsets = [0, 3072], sizes = [16, 128], strides = [1, 1]} : vector<16x4096xf32> to vector<16x128xf32>
    %72 = arith.addf %70, %71 : vector<16x128xf32>
    %73 = vector.extract_strided_slice %22 {offsets = [0, 3200], sizes = [16, 128], strides = [1, 1]} : vector<16x4096xf32> to vector<16x128xf32>
    %74 = arith.addf %72, %73 : vector<16x128xf32>
    %75 = vector.extract_strided_slice %22 {offsets = [0, 3328], sizes = [16, 128], strides = [1, 1]} : vector<16x4096xf32> to vector<16x128xf32>
    %76 = arith.addf %74, %75 : vector<16x128xf32>
    %77 = vector.extract_strided_slice %22 {offsets = [0, 3456], sizes = [16, 128], strides = [1, 1]} : vector<16x4096xf32> to vector<16x128xf32>
    %78 = arith.addf %76, %77 : vector<16x128xf32>
    %79 = vector.extract_strided_slice %22 {offsets = [0, 3584], sizes = [16, 128], strides = [1, 1]} : vector<16x4096xf32> to vector<16x128xf32>
    %80 = arith.addf %78, %79 : vector<16x128xf32>
    %81 = vector.extract_strided_slice %22 {offsets = [0, 3712], sizes = [16, 128], strides = [1, 1]} : vector<16x4096xf32> to vector<16x128xf32>
    %82 = arith.addf %80, %81 : vector<16x128xf32>
    %83 = vector.extract_strided_slice %22 {offsets = [0, 3840], sizes = [16, 128], strides = [1, 1]} : vector<16x4096xf32> to vector<16x128xf32>
    %84 = arith.addf %82, %83 : vector<16x128xf32>
    %85 = vector.extract_strided_slice %22 {offsets = [0, 3968], sizes = [16, 128], strides = [1, 1]} : vector<16x4096xf32> to vector<16x128xf32>
    %86 = arith.addf %84, %85 : vector<16x128xf32>
    %87 = arith.addf %23, %86 : vector<16x128xf32>
    %c0_16 = arith.constant 0 : index
    %c0_17 = arith.constant 0 : index
    %88 = vector.load %arg8[%c0_16, %c0_17] : memref<16x128xf32, #tpu.memory_space<vmem>>, vector<16x128xf32>
    tpu.vector_store %arg8[%c0_16, %c0_17], %87 {strides = array<i32>} : memref<16x128xf32, #tpu.memory_space<vmem>>, vector<16x128xf32>,
    %89 = vector.extract_strided_slice %13 {offsets = [0, 0], sizes = [8, 256], strides = [1, 1]} : vector<8x4096xf32> to vector<8x256xf32>
    %90 = vector.extract_strided_slice %13 {offsets = [0, 1024], sizes = [8, 256], strides = [1, 1]} : vector<8x4096xf32> to vector<8x256xf32>
    %91 = vector.extract_strided_slice %13 {offsets = [0, 2048], sizes = [8, 256], strides = [1, 1]} : vector<8x4096xf32> to vector<8x256xf32>
    %92 = vector.extract_strided_slice %13 {offsets = [0, 3072], sizes = [8, 256], strides = [1, 1]} : vector<8x4096xf32> to vector<8x256xf32>
    %93 = tpu.concatenate %89, %90, %91, %92 in 1 : vector<8x256xf32>, vector<8x256xf32>, vector<8x256xf32>, vector<8x256xf32> -> vector<8x1024xf32>
    %c4 = arith.constant 4 : index
    %c0_18 = arith.constant 0 : index
    %c0_19 = arith.constant 0 : index
    %94 = vector.load %arg4[%c4, %c0_18, %c0_19] : memref<11x64x64xf32, #tpu.memory_space<vmem>>, vector<1x16x8xf32>
    %95 = vector.shape_cast %94 : vector<1x16x8xf32> to vector<16x8xf32>
    %c5 = arith.constant 5 : index
    %c0_20 = arith.constant 0 : index
    %c0_21 = arith.constant 0 : index
    %96 = vector.load %arg4[%c5, %c0_20, %c0_21] : memref<11x64x64xf32, #tpu.memory_space<vmem>>, vector<1x16x1xf32>
    %97 = vector.shape_cast %96 : vector<1x16x1xf32> to vector<16x1xf32>
    %cst_22 = arith.constant dense<0.000000e+00> : vector<16x1024xf32>
    %98 = tpu.matmul %95, %93, %cst_22 {dimension_numbers = #tpu.dot_dimension_numbers<[1], [0], [0], [1], [0, 0, 1, 1], [], []>} : vector<16x8xf32>, vector<8x1024xf32>, vector<16x1024xf32> -> vector<16x1024xf32>
    %99 = vector.broadcast %97 : vector<16x1xf32> to vector<16x1024xf32>
    %100 = arith.addf %98, %99 : vector<16x1024xf32>
    %cst_23 = arith.constant 0.000000e+00 : f32
    %101 = vector.broadcast %cst_23 : f32 to vector<16x1024xf32>
    %102 = arith.maximumf %100, %101 : vector<16x1024xf32>
    %c0_24 = arith.constant 0 : index
    %c0_25 = arith.constant 0 : index
    %c0_26 = arith.constant 0 : index
    %103 = vector.load %arg2[%c0_24, %c0_25, %c0_26] : memref<1x3x1024xf32, #tpu.memory_space<vmem>>, vector<1x3x1024xf32>
    %104 = vector.shape_cast %103 : vector<1x3x1024xf32> to vector<3x1024xf32>
    %c0_27 = arith.constant 0 : index
    %c0_28 = arith.constant 0 : index
    %c0_29 = arith.constant 0 : index
    %105 = vector.load %arg4[%c0_27, %c0_28, %c0_29] : memref<11x64x64xf32, #tpu.memory_space<vmem>>, vector<1x32x3xf32>
    %106 = vector.shape_cast %105 : vector<1x32x3xf32> to vector<32x3xf32>
    %c1 = arith.constant 1 : index
    %c0_30 = arith.constant 0 : index
    %c0_31 = arith.constant 0 : index
    %107 = vector.load %arg4[%c1, %c0_30, %c0_31] : memref<11x64x64xf32, #tpu.memory_space<vmem>>, vector<1x32x1xf32>
    %108 = vector.shape_cast %107 : vector<1x32x1xf32> to vector<32x1xf32>
    %cst_32 = arith.constant dense<0.000000e+00> : vector<32x1024xf32>
    %109 = tpu.matmul %106, %104, %cst_32 {dimension_numbers = #tpu.dot_dimension_numbers<[1], [0], [0], [1], [0, 0, 1, 1], [], []>} : vector<32x3xf32>, vector<3x1024xf32>, vector<32x1024xf32> -> vector<32x1024xf32>
    %110 = vector.broadcast %108 : vector<32x1xf32> to vector<32x1024xf32>
    %111 = arith.addf %109, %110 : vector<32x1024xf32>
    %cst_33 = arith.constant 0.000000e+00 : f32
    %112 = vector.broadcast %cst_33 : f32 to vector<32x1024xf32>
    %113 = arith.maximumf %111, %112 : vector<32x1024xf32>
    %c6 = arith.constant 6 : index
    %c0_34 = arith.constant 0 : index
    %c0_35 = arith.constant 0 : index
    %114 = vector.load %arg4[%c6, %c0_34, %c0_35] : memref<11x64x64xf32, #tpu.memory_space<vmem>>, vector<1x64x32xf32>
    %115 = vector.shape_cast %114 : vector<1x64x32xf32> to vector<64x32xf32>
    %cst_36 = arith.constant dense<0.000000e+00> : vector<64x1024xf32>
    %116 = tpu.matmul %115, %113, %cst_36 {dimension_numbers = #tpu.dot_dimension_numbers<[1], [0], [0], [1], [0, 0, 1, 1], [], []>} : vector<64x32xf32>, vector<32x1024xf32>, vector<64x1024xf32> -> vector<64x1024xf32>
    %c7 = arith.constant 7 : index
    %c0_37 = arith.constant 0 : index
    %c0_38 = arith.constant 0 : index
    %117 = vector.load %arg4[%c7, %c0_37, %c0_38] : memref<11x64x64xf32, #tpu.memory_space<vmem>>, vector<1x64x16xf32>
    %118 = vector.shape_cast %117 : vector<1x64x16xf32> to vector<64x16xf32>
    %cst_39 = arith.constant dense<0.000000e+00> : vector<64x1024xf32>
    %119 = tpu.matmul %118, %102, %cst_39 {dimension_numbers = #tpu.dot_dimension_numbers<[1], [0], [0], [1], [0, 0, 1, 1], [], []>} : vector<64x16xf32>, vector<16x1024xf32>, vector<64x1024xf32> -> vector<64x1024xf32>
    %120 = arith.addf %116, %119 : vector<64x1024xf32>
    %c8 = arith.constant 8 : index
    %c0_40 = arith.constant 0 : index
    %c0_41 = arith.constant 0 : index
    %121 = vector.load %arg4[%c8, %c0_40, %c0_41] : memref<11x64x64xf32, #tpu.memory_space<vmem>>, vector<1x64x1xf32>
    %122 = vector.shape_cast %121 : vector<1x64x1xf32> to vector<64x1xf32>
    %123 = vector.broadcast %122 : vector<64x1xf32> to vector<64x1024xf32>
    %124 = arith.addf %120, %123 : vector<64x1024xf32>
    %cst_42 = arith.constant 0.000000e+00 : f32
    %125 = vector.broadcast %cst_42 : f32 to vector<64x1024xf32>
    %126 = arith.maximumf %124, %125 : vector<64x1024xf32>
    %c0_43 = arith.constant 0 : index
    %c0_44 = arith.constant 0 : index
    %127 = vector.load %arg7[%c0_43, %c0_44] : memref<64x128xf32, #tpu.memory_space<vmem>>, vector<64x128xf32>
    %128 = vector.extract_strided_slice %126 {offsets = [0, 0], sizes = [64, 128], strides = [1, 1]} : vector<64x1024xf32> to vector<64x128xf32>
    %129 = vector.extract_strided_slice %126 {offsets = [0, 128], sizes = [64, 128], strides = [1, 1]} : vector<64x1024xf32> to vector<64x128xf32>
    %130 = arith.addf %128, %129 : vector<64x128xf32>
    %131 = vector.extract_strided_slice %126 {offsets = [0, 256], sizes = [64, 128], strides = [1, 1]} : vector<64x1024xf32> to vector<64x128xf32>
    %132 = arith.addf %130, %131 : vector<64x128xf32>
    %133 = vector.extract_strided_slice %126 {offsets = [0, 384], sizes = [64, 128], strides = [1, 1]} : vector<64x1024xf32> to vector<64x128xf32>
    %134 = arith.addf %132, %133 : vector<64x128xf32>
    %135 = vector.extract_strided_slice %126 {offsets = [0, 512], sizes = [64, 128], strides = [1, 1]} : vector<64x1024xf32> to vector<64x128xf32>
    %136 = arith.addf %134, %135 : vector<64x128xf32>
    %137 = vector.extract_strided_slice %126 {offsets = [0, 640], sizes = [64, 128], strides = [1, 1]} : vector<64x1024xf32> to vector<64x128xf32>
    %138 = arith.addf %136, %137 : vector<64x128xf32>
    %139 = vector.extract_strided_slice %126 {offsets = [0, 768], sizes = [64, 128], strides = [1, 1]} : vector<64x1024xf32> to vector<64x128xf32>
    %140 = arith.addf %138, %139 : vector<64x128xf32>
    %141 = vector.extract_strided_slice %126 {offsets = [0, 896], sizes = [64, 128], strides = [1, 1]} : vector<64x1024xf32> to vector<64x128xf32>
    %142 = arith.addf %140, %141 : vector<64x128xf32>
    %143 = arith.addf %127, %142 : vector<64x128xf32>
    %c0_45 = arith.constant 0 : index
    %c0_46 = arith.constant 0 : index
    %144 = vector.load %arg7[%c0_45, %c0_46] : memref<64x128xf32, #tpu.memory_space<vmem>>, vector<64x128xf32>
    tpu.vector_store %arg7[%c0_45, %c0_46], %143 {strides = array<i32>} : memref<64x128xf32, #tpu.memory_space<vmem>>, vector<64x128xf32>,
    %c0_i32_47 = arith.constant 0 : i32
    %145 = arith.cmpi eq, %arg1, %c0_i32_47 : i32
    %146 = arith.extui %145 : i1 to i32
    %c0_i32_48 = arith.constant 0 : i32
    %147 = arith.cmpi ne, %146, %c0_i32_48 : i32
    scf.if %147 {
      %c0_49 = arith.constant 0 : index
      %c0_50 = arith.constant 0 : index
      %148 = vector.load %arg7[%c0_49, %c0_50] : memref<64x128xf32, #tpu.memory_space<vmem>>, vector<64x128xf32>
      %cst_51 = arith.constant dense<0.000000e+00> : vector<64xf32>
      %149 = vector.multi_reduction <add>, %148, %cst_51 [1] : vector<64x128xf32> to vector<64xf32>
      %150 = vector.shape_cast %149 : vector<64xf32> to vector<64x1xf32>
      %c0_52 = arith.constant 0 : index
      %c0_53 = arith.constant 0 : index
      %151 = vector.load %arg8[%c0_52, %c0_53] : memref<16x128xf32, #tpu.memory_space<vmem>>, vector<16x128xf32>
      %cst_54 = arith.constant dense<0.000000e+00> : vector<16xf32>
      %152 = vector.multi_reduction <add>, %151, %cst_54 [1] : vector<16x128xf32> to vector<16xf32>
      %153 = vector.shape_cast %152 : vector<16xf32> to vector<16x1xf32>
      %cst_55 = arith.constant 9.765625E-4 : f32
      %154 = vector.broadcast %cst_55 : f32 to vector<64x1xf32>
      %155 = arith.mulf %150, %154 : vector<64x1xf32>
      %156 = vector.shape_cast %155 : vector<64x1xf32> to vector<1x64x1xf32>
      %c0_56 = arith.constant 0 : index
      %c0_57 = arith.constant 0 : index
      %c0_58 = arith.constant 0 : index
      %157 = vector.load %arg5[%c0_56, %c0_57, %c0_58] : memref<1x64x1xf32, #tpu.memory_space<vmem>>, vector<1x64x1xf32>
      tpu.vector_store %arg5[%c0_56, %c0_57, %c0_58], %156 {strides = array<i32>} : memref<1x64x1xf32, #tpu.memory_space<vmem>>, vector<1x64x1xf32>,
      %cst_59 = arith.constant 2.44140625E-4 : f32
      %158 = vector.broadcast %cst_59 : f32 to vector<16x1xf32>
      %159 = arith.mulf %153, %158 : vector<16x1xf32>
      %160 = vector.shape_cast %159 : vector<16x1xf32> to vector<1x16x1xf32>
      %c0_60 = arith.constant 0 : index
      %c0_61 = arith.constant 0 : index
      %c0_62 = arith.constant 0 : index
      %161 = vector.load %arg6[%c0_60, %c0_61, %c0_62] : memref<1x16x1xf32, #tpu.memory_space<vmem>>, vector<1x16x1xf32>
      tpu.vector_store %arg6[%c0_60, %c0_61, %c0_62], %160 {strides = array<i32>} : memref<1x16x1xf32, #tpu.memory_space<vmem>>, vector<1x16x1xf32>,
    } else {
    }
    return
  }
  func.func @transform_0(%arg0: i32, %arg1: i32) -> (i32, i32, i32) {
    %c0_i32 = arith.constant 0 : i32
    %c0_i32_0 = arith.constant 0 : i32
    return %arg0, %c0_i32, %arg1 : i32, i32, i32
  }
  func.func @transform_1(%arg0: i32, %arg1: i32) -> (i32, i32, i32) {
    %c0_i32 = arith.constant 0 : i32
    %c0_i32_0 = arith.constant 0 : i32
    return %arg0, %c0_i32, %arg1 : i32, i32, i32
  }
  func.func @transform_2(%arg0: i32, %arg1: i32) -> (i32, i32, i32) {
    %c0_i32 = arith.constant 0 : i32
    %c0_i32_0 = arith.constant 0 : i32
    %c0_i32_1 = arith.constant 0 : i32
    %c0_i32_2 = arith.constant 0 : i32
    return %c0_i32, %c0_i32_0, %c0_i32_1 : i32, i32, i32
  }
  func.func @transform_3(%arg0: i32, %arg1: i32) -> (i32, i32, i32) {
    %c0_i32 = arith.constant 0 : i32
    %c0_i32_0 = arith.constant 0 : i32
    %c0_i32_1 = arith.constant 0 : i32
    return %arg0, %c0_i32, %c0_i32_0 : i32, i32, i32
  }
  func.func @transform_4(%arg0: i32, %arg1: i32) -> (i32, i32, i32) {
    %c0_i32 = arith.constant 0 : i32
    %c0_i32_0 = arith.constant 0 : i32
    %c0_i32_1 = arith.constant 0 : i32
    return %arg0, %c0_i32, %c0_i32_0 : i32, i32, i32
  }
}

</mosaic_0001>

<llo_original>
// kernel: slowfast_forward.1
$region0: #{slowfast_forward.1}
  #allocation0 [shape = 'u32[]', space=smem, size = 0x4, offset = 0x4, fixed_abs, tag = 'smem constant byte address 0x4 - core index']
  #allocation1 [shape = 'u32[72,128]{1,0:T(1,128)}', space=vmem, size = 0x9000, scoped, tag = 'internal scratch']
  #allocation2 [shape = 'f32[64,128]{1,0:T(8,128)}', space=vmem, size = 0x8000, scoped, tag = 'scratch operand']
  #allocation3 [shape = 'f32[16,128]{1,0:T(8,128)}', space=vmem, size = 0x2000, scoped, tag = 'scratch operand']
  %s0 = inlined_call_operand.vmem [shape: f32[2,3,1024], index: 0, kind: input, shape index: {}]
  %s1 = inlined_call_operand.vmem [shape: f32[2,3,4096], index: 1, kind: input, shape index: {}]
  %s2 = inlined_call_operand.vmem [shape: f32[11,64,64], index: 2, kind: input, shape index: {}]
  %s3 = inlined_call_operand.vmem [shape: f32[2,64,1], index: 3, kind: output, shape index: {0}]
  %s4 = inlined_call_operand.vmem [shape: f32[2,16,1], index: 4, kind: output, shape index: {1}]
  %5 = xla_tuple %s3, %s4
  %s6 = sld [smem:[#allocation0]]
  $region61: #{slowfast_forward.1} parent=0
    _
  %s8 = ssub.s32 1, %s6
  %s9 = scalar_select 0, %s8, %s6
  loop: start=0, step=1, limit=4
  $region2: #{slowfast_forward.1} parent=0 // loop_pre_header
    _
  $region3: #{slowfast_forward.1} parent=0 // loop_header
    %s11 = sphi 0, %s15
    %p12 = scmp.ge.s32.totalorder %s11, 4
    %s18 = sphi 0, %s30
    %s19 = sphi 0, %s26
    %s20 = sphi 0, %s18
    %s21 = sphi 0, %s19
    %s22 = sphi 0, %s20
    %s23 = sphi 0, %s21
    %s35 = sphi 0, %s37
    %s38 = sphi 0, %s35
    %s39 = sphi 0, %s38
    %s55 = sphi 0, %s39
    %s63 = sphi 0, %s65
    %s66 = sphi 0, %s63
    %s67 = sphi 0, %s66
    %s83 = sphi 0, %s67
    %s87 = sphi 0, %s87
    %s89 = sphi 0, %s87
    %s90 = sphi 0, %s89
    %s104 = sphi 0, %s90
    %s110 = sphi 0, %s112
    %s113 = sphi 0, %s110
    %s114 = sphi 0, %s113
    %s130 = sphi 0, %s114
    %s136 = sphi 0, %s138
    %s139 = sphi 0, %s136
    %s140 = sphi 0, %s139
    %s156 = sphi 0, %s140
  $region4: #{slowfast_forward.1} parent=0 // loop_header_branch
    %14 = sbr.rel (%p12) target = $region8
  $region5: #{slowfast_forward.1} parent=0 // loop_body
    %s16 = ssub.s32 %s11, 1
    %s17 = ssub.s32 %s11, 2
    %s24 = sadd.s32 1, %s19
    %p25 = scmp.ge.s32.totalorder %s24, 1
    %s26 = scalar_select %p25, 0, %s24
    %s27 = sadd.s32 1, %s18
    %s28 = scalar_select %p25, %s27, %s18
    %p29 = scmp.ge.s32.totalorder %s28, 2
    %s30 = scalar_select %p29, 0, %s28
    %s31 = ssub.s32 %s18, %s30
    %s32 = ssub.s32 %s19, %s26
    %s33 = sor.u32 %s31, %s32
    %p34 = scmp.eq.s32.totalorder %s33, 0
    %s36 = sadd.s32 %s35, 1
    %s37 = scalar_select %p34, %s35, %s36
    %p40 = pneg %p34
    %p41 = scmp.eq.s32.totalorder %s11, 1
    %p42 = por %p40, %p41
    %p43 = scmp.ne.s32.totalorder %s35, %s38
    %p44 = scmp.eq.s32.totalorder %s11, 0
    %p45 = por %p43, %p44
    %p46 = scmp.ne.s32.totalorder %s35, %s38
    %p47 = scmp.eq.s32.totalorder %s16, 1
    %p48 = por %p46, %p47
    %p49 = scmp.ne.s32.totalorder %s38, %s39
    %p50 = scmp.eq.s32.totalorder %s16, 0
    %p51 = por %p49, %p50
    %p52 = scmp.ne.s32.totalorder %s38, %s39
    %p53 = scmp.eq.s32.totalorder %s17, 1
    %p54 = por %p52, %p53
    %p56 = scmp.ne.s32.totalorder %s39, %s55
    %p57 = scmp.eq.s32.totalorder %s17, 0
    %p58 = por %p56, %p57
    %s59 = ssub.s32 %s18, %s30
    %s60 = ssub.s32 %s19, %s26
    %s61 = sor.u32 %s59, %s60
    %p62 = scmp.eq.s32.totalorder %s61, 0
    %s64 = sadd.s32 %s63, 1
    %s65 = scalar_select %p62, %s63, %s64
    %p68 = pneg %p62
    %p69 = scmp.eq.s32.totalorder %s11, 1
    %p70 = por %p68, %p69
    %p71 = scmp.ne.s32.totalorder %s63, %s66
    %p72 = scmp.eq.s32.totalorder %s11, 0
    %p73 = por %p71, %p72
    %p74 = scmp.ne.s32.totalorder %s63, %s66
    %p75 = scmp.eq.s32.totalorder %s16, 1
    %p76 = por %p74, %p75
    %p77 = scmp.ne.s32.totalorder %s66, %s67
    %p78 = scmp.eq.s32.totalorder %s16, 0
    %p79 = por %p77, %p78
    %p80 = scmp.ne.s32.totalorder %s66, %s67
    %p81 = scmp.eq.s32.totalorder %s17, 1
    %p82 = por %p80, %p81
    %p84 = scmp.ne.s32.totalorder %s67, %s83
    %p85 = scmp.eq.s32.totalorder %s17, 0
    %p86 = por %p84, %p85
    %s88 = sadd.s32 %s87, 1
    %p91 = scmp.eq.s32.totalorder %s11, 1
    %p92 = scmp.ne.s32.totalorder %s87, %s89
    %p93 = scmp.eq.s32.totalorder %s11, 0
    %p94 = por %p92, %p93
    %p95 = scmp.ne.s32.totalorder %s87, %s89
    %p96 = scmp.eq.s32.totalorder %s16, 1
    %p97 = por %p95, %p96
    %p98 = scmp.ne.s32.totalorder %s89, %s90
    %p99 = scmp.eq.s32.totalorder %s16, 0
    %p100 = por %p98, %p99
    %p101 = scmp.ne.s32.totalorder %s89, %s90
    %p102 = scmp.eq.s32.totalorder %s17, 1
    %p103 = por %p101, %p102
    %p105 = scmp.ne.s32.totalorder %s90, %s104
    %p106 = scmp.eq.s32.totalorder %s17, 0
    %p107 = por %p105, %p106
    %s108 = ssub.s32 %s18, %s30
    %p109 = scmp.eq.s32.totalorder %s108, 0
    %s111 = sadd.s32 %s110, 1
    %s112 = scalar_select %p109, %s110, %s111
    %p115 = pneg %p109
    %p116 = scmp.eq.s32.totalorder %s11, 1
    %p117 = por %p115, %p116
    %p118 = scmp.ne.s32.totalorder %s110, %s113
    %p119 = scmp.eq.s32.totalorder %s11, 0
    %p120 = por %p118, %p119
    %p121 = scmp.ne.s32.totalorder %s110, %s113
    %p122 = scmp.eq.s32.totalorder %s16, 1
    %p123 = por %p121, %p122
    %p124 = scmp.ne.s32.totalorder %s113, %s114
    %p125 = scmp.eq.s32.totalorder %s16, 0
    %p126 = por %p124, %p125
    %p127 = scmp.ne.s32.totalorder %s113, %s114
    %p128 = scmp.eq.s32.totalorder %s17, 1
    %p129 = por %p127, %p128
    %p131 = scmp.ne.s32.totalorder %s114, %s130
    %p132 = scmp.eq.s32.totalorder %s17, 0
    %p133 = por %p131, %p132
    %s134 = ssub.s32 %s18, %s30
    %p135 = scmp.eq.s32.totalorder %s134, 0
    %s137 = sadd.s32 %s136, 1
    %s138 = scalar_select %p135, %s136, %s137
    %p141 = pneg %p135
    %p142 = scmp.eq.s32.totalorder %s11, 1
    %p143 = por %p141, %p142
    %p144 = scmp.ne.s32.totalorder %s136, %s139
    %p145 = scmp.eq.s32.totalorder %s11, 0
    %p146 = por %p144, %p145
    %p147 = scmp.ne.s32.totalorder %s136, %s139
    %p148 = scmp.eq.s32.totalorder %s16, 1
    %p149 = por %p147, %p148
    %p150 = scmp.ne.s32.totalorder %s139, %s140
    %p151 = scmp.eq.s32.totalorder %s16, 0
    %p152 = por %p150, %p151
    %p153 = scmp.ne.s32.totalorder %s139, %s140
    %p154 = scmp.eq.s32.totalorder %s17, 1
    %p155 = por %p153, %p154
    %p157 = scmp.ne.s32.totalorder %s140, %s156
    %p158 = scmp.eq.s32.totalorder %s17, 0
    %p159 = por %p157, %p158
    %p160 = scmp.le.s32.totalorder 1, %s11
    %p161 = scmp.lt.s32.totalorder %s11, 3
    %p162 = pnand %p160, %p161
    %p163 = pneg %p162
    // Predicated region
    $region9: #{slowfast_forward.1} parent=5 // pred_check
      _
    $region10: #{slowfast_forward.1} parent=5 // pred_check_branch
      %165 = sbr.rel (%p162) target = $region12
    $region11: #{slowfast_forward.1} parent=5 // pred_region
      %s166 = ssub.s32 %s11, 1
      // Predicated region
      $region13: #{slowfast_forward.1} parent=11 // pred_check
        %p167 = pneg %p100
      $region14: #{slowfast_forward.1} parent=11 // pred_check_branch
        %169 = sbr.rel (%p167) target = $region16
      $region15: #{slowfast_forward.1} parent=11 // pred_region
        _
      $region16: #{slowfast_forward.1} parent=11 // pred_fallthru
        _
    $region12: #{slowfast_forward.1} parent=5 // pred_fallthru
      _
    %p170 = scmp.lt.s32.totalorder %s11, 2
    // Predicated region
    $region17: #{slowfast_forward.1} parent=5 // pred_check
      %p171 = pneg %p170
    $region18: #{slowfast_forward.1} parent=5 // pred_check_branch
      %173 = sbr.rel (%p171) target = $region20
    $region19: #{slowfast_forward.1} parent=5 // pred_region
      // Predicated region
      $region21: #{slowfast_forward.1} parent=19 // pred_check
        %p174 = pneg %p45
      $region22: #{slowfast_forward.1} parent=19 // pred_check_branch
        %176 = sbr.rel (%p174) target = $region24
      $region23: #{slowfast_forward.1} parent=19 // pred_region
        %s177 = smul.u32 8, %s19
        %p178 = scmp.lt.s32.totalorder %s18, 1
        %s179 = scalar_select %p178, %s18, 1
        %p180 = scmp.lt.s32.totalorder %s177, 7
        %s181 = scalar_select %p180, %s177, 7
        %s182 = smul.addr %s179, 8
        %s183 = sadd.s32 %s181, %s182
        %s184 = smul.addr %s183, 4
        %s185 = scalar_lea.vmem %s0, %s184
        %s186 = smul.u32 8, %s19
      $region24: #{slowfast_forward.1} parent=19 // pred_fallthru
        _
      // Predicated region
      $region25: #{slowfast_forward.1} parent=19 // pred_check
        %p187 = pneg %p73
      $region26: #{slowfast_forward.1} parent=19 // pred_check_branch
        %189 = sbr.rel (%p187) target = $region28
      $region27: #{slowfast_forward.1} parent=19 // pred_region
        %s190 = smul.u32 32, %s19
        %p191 = scmp.lt.s32.totalorder %s18, 1
        %s192 = scalar_select %p191, %s18, 1
        %p193 = scmp.lt.s32.totalorder %s190, 31
        %s194 = scalar_select %p193, %s190, 31
        %s195 = smul.addr %s192, 32
        %s196 = sadd.s32 %s194, %s195
        %s197 = smul.addr %s196, 4
        %s198 = scalar_lea.vmem %s1, %s197
        %s199 = smul.u32 32, %s19
      $region28: #{slowfast_forward.1} parent=19 // pred_fallthru
        _
    $region20: #{slowfast_forward.1} parent=5 // pred_fallthru
      _
    %p200 = scmp.le.s32.totalorder 1, %s11
    %p201 = scmp.lt.s32.totalorder %s11, 3
    %p202 = pnand %p200, %p201
    %p203 = pneg %p202
    // Predicated region
    $region29: #{slowfast_forward.1} parent=5 // pred_check
      _
    $region30: #{slowfast_forward.1} parent=5 // pred_check_branch
      %205 = sbr.rel (%p202) target = $region32
    $region31: #{slowfast_forward.1} parent=5 // pred_region
      %s206 = ssub.s32 %s11, 1
      %s207 = smul.u32 8, %s21
      %p208 = scmp.lt.s32.totalorder %s20, 1
      %s209 = scalar_select %p208, %s20, 1
      %p210 = scmp.lt.s32.totalorder %s207, 7
      %s211 = scalar_select %p210, %s207, 7
      %s212 = smul.addr %s209, 8
      %s213 = sadd.s32 %s211, %s212
      %s214 = smul.addr %s213, 4
      %s215 = scalar_lea.vmem %s0, %s214
      %p216 = pneg %p51
      %p217 = pneg %p48
      %s218 = smul.u32 32, %s21
      %p219 = scmp.lt.s32.totalorder %s20, 1
      %s220 = scalar_select %p219, %s20, 1
      %p221 = scmp.lt.s32.totalorder %s218, 31
      %s222 = scalar_select %p221, %s218, 31
      %s223 = smul.addr %s220, 32
      %s224 = sadd.s32 %s222, %s223
      %s225 = smul.addr %s224, 4
      %s226 = scalar_lea.vmem %s1, %s225
      %p227 = pneg %p79
      %p228 = pneg %p76
      %p229 = pneg %p100
      %p230 = pneg %p97
      %p231 = pneg %p126
      %p232 = pneg %p123
      %p233 = scmp.lt.s32.totalorder %s20, 1
      %s234 = scalar_select %p233, %s20, 1
      %s235 = smul.addr %s234, 8
      %s236 = smul.addr %s235, 8
      %s237 = scalar_lea.vmem %s3, %s236
      %p238 = pneg %p152
      %p239 = pneg %p149
      %p240 = scmp.lt.s32.totalorder %s20, 1
      %s241 = scalar_select %p240, %s20, 1
      %s242 = smul.addr %s241, 2
      %s243 = smul.addr %s242, 8
      %s244 = scalar_lea.vmem %s4, %s243
      %s245 = smul.u32 8, %s21
      %p246 = scmp.lt.s32.totalorder %s20, 1
      %s247 = scalar_select %p246, %s20, 1
      %p248 = scmp.lt.s32.totalorder %s245, 7
      %s249 = scalar_select %p248, %s245, 7
      %s250 = smul.addr %s247, 8
      %s251 = sadd.s32 %s249, %s250
      %s252 = smul.addr %s251, 4
      %s253 = scalar_lea.vmem %s0, %s252
      %s254 = smul.u32 8, %s21
      %s255 = smul.u32 32, %s21
      %p256 = scmp.lt.s32.totalorder %s20, 1
      %s257 = scalar_select %p256, %s20, 1
      %p258 = scmp.lt.s32.totalorder %s255, 31
      %s259 = scalar_select %p258, %s255, 31
      %s260 = smul.addr %s257, 32
      %s261 = sadd.s32 %s259, %s260
      %s262 = smul.addr %s261, 4
      %s263 = scalar_lea.vmem %s1, %s262
      %s264 = smul.u32 32, %s21
      %p265 = scmp.lt.s32.totalorder %s20, 1
      %s266 = scalar_select %p265, %s20, 1
      %s267 = smul.addr %s266, 8
      %s268 = smul.addr %s267, 8
      %s269 = scalar_lea.vmem %s3, %s268
      %p270 = scmp.lt.s32.totalorder %s20, 1
      %s271 = scalar_select %p270, %s20, 1
      %s272 = smul.addr %s271, 2
      %s273 = smul.addr %s272, 8
      %s274 = scalar_lea.vmem %s4, %s273
      %p275 = scmp.eq.s32.totalorder %s21, 0
      // Predicated region
      $region33: #{slowfast_forward.1} parent=31 // pred_check
        %p276 = pneg %p275
      $region34: #{slowfast_forward.1} parent=31 // pred_check_branch
        %278 = sbr.rel (%p276) target = $region36
      $region35: #{slowfast_forward.1} parent=31 // pred_region
        %279 = vst [vmem:[#allocation2] sm:$0xff] 0.0
        %280 = vst [vmem:[#allocation2 + $0x8] sm:$0xff] 0.0
        %281 = vst [vmem:[#allocation2 + $0x10] sm:$0xff] 0.0
        %282 = vst [vmem:[#allocation2 + $0x18] sm:$0xff] 0.0
        %283 = vst [vmem:[#allocation2 + $0x20] sm:$0xff] 0.0
        %284 = vst [vmem:[#allocation2 + $0x28] sm:$0xff] 0.0
        %285 = vst [vmem:[#allocation2 + $0x30] sm:$0xff] 0.0
        %286 = vst [vmem:[#allocation2 + $0x38] sm:$0xff] 0.0
        %287 = vst [vmem:[#allocation3] sm:$0xff] 0.0
        %288 = vst [vmem:[#allocation3 + $0x8] sm:$0xff] 0.0
      $region36: #{slowfast_forward.1} parent=31 // pred_fallthru
        _
      %v289 = vld [vmem:[%s263] sm:$0x77]
      %v290 = vld [vmem:[%s263 + $0x8] sm:$0x77]
      %v291 = vld [vmem:[%s263 + $0x10] sm:$0x77]
      %v292 = vld [vmem:[%s263 + $0x18] sm:$0x77]
      %v293 = vld [vmem:[%s263 + $0x20] sm:$0x77]
      %v294 = vld [vmem:[%s263 + $0x28] sm:$0x77]
      %v295 = vld [vmem:[%s263 + $0x30] sm:$0x77]
      %v296 = vld [vmem:[%s263 + $0x38] sm:$0x77]
      %v297 = vld [vmem:[%s263 + $0x40] sm:$0x77]
      %v298 = vld [vmem:[%s263 + $0x48] sm:$0x77]
      %v299 = vld [vmem:[%s263 + $0x50] sm:$0x77]
      %v300 = vld [vmem:[%s263 + $0x58] sm:$0x77]
      %v301 = vld [vmem:[%s263 + $0x60] sm:$0x77]
      %v302 = vld [vmem:[%s263 + $0x68] sm:$0x77]
      %v303 = vld [vmem:[%s263 + $0x70] sm:$0x77]
      %v304 = vld [vmem:[%s263 + $0x78] sm:$0x77]
      %s305 = scalar_lea.vmem %s2, 128
      %v306 = vld [vmem:[%s305] sm:$0xff]
      %s307 = scalar_lea.vmem %s2, 192
      %v308 = vld [vmem:[%s307] sm:$0xff]
      %310 = vset.pattern.permute.xlu0 0
      %311 = vperm.xlu0 %310, %v308
      %v312 = vpop.permute.xlu0 %311
      %330 = vst [vmem:[#allocation1] ss:$2 sm:$0xff] %v289
      %s331 = scalar_lea.vmem [#allocation1], 16
      %332 = vst [vmem:[%s331] ss:$2 sm:$0xff] %v290
      %s333 = scalar_lea.vmem [#allocation1], 32
      %334 = vst [vmem:[%s333] ss:$2 sm:$0xff] %v291
      %s335 = scalar_lea.vmem [#allocation1], 48
      %336 = vst [vmem:[%s335] ss:$2 sm:$0xff] %v292
      %v337 = vld.sshfl [vmem:[#allocation1] sm:$0xff pattern:$0x75316420]
      %v338 = vld.sshfl [vmem:[#allocation1 + $0x8] sm:$0xff pattern:$0x75316420]
      %v339 = vld.sshfl [vmem:[#allocation1 + $0x10] sm:$0xff pattern:$0x75316420]
      %v340 = vld.sshfl [vmem:[#allocation1 + $0x18] sm:$0xff pattern:$0x75316420]
      %v341 = vld.sshfl [vmem:[#allocation1 + $0x20] sm:$0xff pattern:$0x75316420]
      %v342 = vld.sshfl [vmem:[#allocation1 + $0x28] sm:$0xff pattern:$0x75316420]
      %v343 = vld.sshfl [vmem:[#allocation1 + $0x30] sm:$0xff pattern:$0x75316420]
      %v344 = vld.sshfl [vmem:[#allocation1 + $0x38] sm:$0xff pattern:$0x75316420]
      %345 = vst [vmem:[#allocation1] ss:$2 sm:$0xff] %v293
      %346 = vst [vmem:[%s331] ss:$2 sm:$0xff] %v294
      %347 = vst [vmem:[%s333] ss:$2 sm:$0xff] %v295
      %348 = vst [vmem:[%s335] ss:$2 sm:$0xff] %v296
      %v349 = vld.sshfl [vmem:[#allocation1] sm:$0xff pattern:$0x75316420]
      %v350 = vld.sshfl [vmem:[#allocation1 + $0x8] sm:$0xff pattern:$0x75316420]
      %v351 = vld.sshfl [vmem:[#allocation1 + $0x10] sm:$0xff pattern:$0x75316420]
      %v352 = vld.sshfl [vmem:[#allocation1 + $0x18] sm:$0xff pattern:$0x75316420]
      %v353 = vld.sshfl [vmem:[#allocation1 + $0x20] sm:$0xff pattern:$0x75316420]
      %v354 = vld.sshfl [vmem:[#allocation1 + $0x28] sm:$0xff pattern:$0x75316420]
      %v355 = vld.sshfl [vmem:[#allocation1 + $0x30] sm:$0xff pattern:$0x75316420]
      %v356 = vld.sshfl [vmem:[#allocation1 + $0x38] sm:$0xff pattern:$0x75316420]
      %357 = vst [vmem:[#allocation1] ss:$2 sm:$0xff] %v297
      %358 = vst [vmem:[%s331] ss:$2 sm:$0xff] %v298
      %359 = vst [vmem:[%s333] ss:$2 sm:$0xff] %v299
      %360 = vst [vmem:[%s335] ss:$2 sm:$0xff] %v300
      %v361 = vld.sshfl [vmem:[#allocation1] sm:$0xff pattern:$0x75316420]
      %v362 = vld.sshfl [vmem:[#allocation1 + $0x8] sm:$0xff pattern:$0x75316420]
      %v363 = vld.sshfl [vmem:[#allocation1 + $0x10] sm:$0xff pattern:$0x75316420]
      %v364 = vld.sshfl [vmem:[#allocation1 + $0x18] sm:$0xff pattern:$0x75316420]
      %v365 = vld.sshfl [vmem:[#allocation1 + $0x20] sm:$0xff pattern:$0x75316420]
      %v366 = vld.sshfl [vmem:[#allocation1 + $0x28] sm:$0xff pattern:$0x75316420]
      %v367 = vld.sshfl [vmem:[#allocation1 + $0x30] sm:$0xff pattern:$0x75316420]
      %v368 = vld.sshfl [vmem:[#allocation1 + $0x38] sm:$0xff pattern:$0x75316420]
      %369 = vst [vmem:[#allocation1] ss:$2 sm:$0xff] %v301
      %370 = vst [vmem:[%s331] ss:$2 sm:$0xff] %v302
      %371 = vst [vmem:[%s333] ss:$2 sm:$0xff] %v303
      %372 = vst [vmem:[%s335] ss:$2 sm:$0xff] %v304
      %v373 = vld.sshfl [vmem:[#allocation1] sm:$0xff pattern:$0x75316420]
      %v374 = vld.sshfl [vmem:[#allocation1 + $0x8] sm:$0xff pattern:$0x75316420]
      %v375 = vld.sshfl [vmem:[#allocation1 + $0x10] sm:$0xff pattern:$0x75316420]
      %v376 = vld.sshfl [vmem:[#allocation1 + $0x18] sm:$0xff pattern:$0x75316420]
      %v377 = vld.sshfl [vmem:[#allocation1 + $0x20] sm:$0xff pattern:$0x75316420]
      %v378 = vld.sshfl [vmem:[#allocation1 + $0x28] sm:$0xff pattern:$0x75316420]
      %v379 = vld.sshfl [vmem:[#allocation1 + $0x30] sm:$0xff pattern:$0x75316420]
      %v380 = vld.sshfl [vmem:[#allocation1 + $0x38] sm:$0xff pattern:$0x75316420]
      %vm381 = vcmask 23552
      %v383 = vsel %vm381, %v306, 0
      %vm385 = vcmask 1042432
      %v386 = vsel %vm385, %v337, 0
      %v388 = vsel %vm385, %v338, 0
      %v390 = vsel %vm385, %v339, 0
      %v392 = vsel %vm385, %v340, 0
      %v394 = vsel %vm385, %v341, 0
      %v396 = vsel %vm385, %v342, 0
      %v398 = vsel %vm385, %v343, 0
      %v400 = vsel %vm385, %v344, 0
      %v402 = vsel %vm385, %v349, 0
      %v404 = vsel %vm385, %v350, 0
      %v406 = vsel %vm385, %v351, 0
      %v408 = vsel %vm385, %v352, 0
      %v410 = vsel %vm385, %v353, 0
      %v412 = vsel %vm385, %v354, 0
      %v414 = vsel %vm385, %v355, 0
      %v416 = vsel %vm385, %v356, 0
      %v418 = vsel %vm385, %v361, 0
      %v420 = vsel %vm385, %v362, 0
      %v422 = vsel %vm385, %v363, 0
      %v424 = vsel %vm385, %v364, 0
      %v426 = vsel %vm385, %v365, 0
      %v428 = vsel %vm385, %v366, 0
      %v430 = vsel %vm385, %v367, 0
      %v432 = vsel %vm385, %v368, 0
      %v434 = vsel %vm385, %v373, 0
      %v436 = vsel %vm385, %v374, 0
      %v438 = vsel %vm385, %v375, 0
      %v440 = vsel %vm385, %v376, 0
      %v442 = vsel %vm385, %v377, 0
      %v444 = vsel %vm385, %v378, 0
      %v446 = vsel %vm385, %v379, 0
      %v448 = vsel %vm385, %v380, 0
      %450 = vmatpush.msra.mxu0 0.0
      %451 = vmatpush.msra.mxu0 0.0
      %452 = vmatpush.msra.mxu0 0.0
      %453 = vmatpush.msra.mxu0 0.0
      %454 = vmatpush.msra.mxu0 0.0
      %455 = vmatpush.msra.mxu0 0.0
      %456 = vmatpush.msra.mxu0 0.0
      %457 = vmatpush.msra.mxu0 0.0
      %458 = vmatpush.msra.mxu0 0.0
      %459 = vmatpush.msra.mxu0 0.0
      %460 = vmatpush.msra.mxu0 0.0
      %461 = vmatpush.msra.mxu0 0.0
      %462 = vmatpush.msra.mxu0 0.0
      %463 = vmatpush.msra.mxu0 0.0
      %464 = vmatpush.msra.mxu0 0.0
      %465 = vmatpush.msra.mxu0 %v386
      %466 = vmatmul.f32.gmra.mxu0 %v383
      %v467 = vpop.f32.mrf.mxu0
      %v468 = vadd.f32 %v312, %v467
      %469 = vdwg.mxu0
      %470 = vmatpush.msra.mxu0 0.0
      %471 = vmatpush.msra.mxu0 0.0
      %472 = vmatpush.msra.mxu0 0.0
      %473 = vmatpush.msra.mxu0 0.0
      %474 = vmatpush.msra.mxu0 0.0
      %475 = vmatpush.msra.mxu0 0.0
      %476 = vmatpush.msra.mxu0 0.0
      %477 = vmatpush.msra.mxu0 0.0
      %478 = vmatpush.msra.mxu0 0.0
      %479 = vmatpush.msra.mxu0 0.0
      %480 = vmatpush.msra.mxu0 0.0
      %481 = vmatpush.msra.mxu0 0.0
      %482 = vmatpush.msra.mxu0 0.0
      %483 = vmatpush.msra.mxu0 0.0
      %484 = vmatpush.msra.mxu0 0.0
      %485 = vmatpush.msra.mxu0 %v388
      %486 = vmatmul.f32.gmra.mxu0 %v383
      %v487 = vpop.f32.mrf.mxu0
      %v488 = vadd.f32 %v312, %v487
      %489 = vdwg.mxu0
      %490 = vmatpush.msra.mxu0 0.0
      %491 = vmatpush.msra.mxu0 0.0
      %492 = vmatpush.msra.mxu0 0.0
      %493 = vmatpush.msra.mxu0 0.0
      %494 = vmatpush.msra.mxu0 0.0
      %495 = vmatpush.msra.mxu0 0.0
      %496 = vmatpush.msra.mxu0 0.0
      %497 = vmatpush.msra.mxu0 0.0
      %498 = vmatpush.msra.mxu0 0.0
      %499 = vmatpush.msra.mxu0 0.0
      %500 = vmatpush.msra.mxu0 0.0
      %501 = vmatpush.msra.mxu0 0.0
      %502 = vmatpush.msra.mxu0 0.0
      %503 = vmatpush.msra.mxu0 0.0
      %504 = vmatpush.msra.mxu0 0.0
      %505 = vmatpush.msra.mxu0 %v390
      %506 = vmatmul.f32.gmra.mxu0 %v383
      %v507 = vpop.f32.mrf.mxu0
      %v508 = vadd.f32 %v312, %v507
      %509 = vdwg.mxu0
      %510 = vmatpush.msra.mxu0 0.0
      %511 = vmatpush.msra.mxu0 0.0
      %512 = vmatpush.msra.mxu0 0.0
      %513 = vmatpush.msra.mxu0 0.0
      %514 = vmatpush.msra.mxu0 0.0
      %515 = vmatpush.msra.mxu0 0.0
      %516 = vmatpush.msra.mxu0 0.0
      %517 = vmatpush.msra.mxu0 0.0
      %518 = vmatpush.msra.mxu0 0.0
      %519 = vmatpush.msra.mxu0 0.0
      %520 = vmatpush.msra.mxu0 0.0
      %521 = vmatpush.msra.mxu0 0.0
      %522 = vmatpush.msra.mxu0 0.0
      %523 = vmatpush.msra.mxu0 0.0
      %524 = vmatpush.msra.mxu0 0.0
      %525 = vmatpush.msra.mxu0 %v392
      %526 = vmatmul.f32.gmra.mxu0 %v383
      %v527 = vpop.f32.mrf.mxu0
      %v528 = vadd.f32 %v312, %v527
      %529 = vdwg.mxu0
      %530 = vmatpush.msra.mxu0 0.0
      %531 = vmatpush.msra.mxu0 0.0
      %532 = vmatpush.msra.mxu0 0.0
      %533 = vmatpush.msra.mxu0 0.0
      %534 = vmatpush.msra.mxu0 0.0
      %535 = vmatpush.msra.mxu0 0.0
      %536 = vmatpush.msra.mxu0 0.0
      %537 = vmatpush.msra.mxu0 0.0
      %538 = vmatpush.msra.mxu0 0.0
      %539 = vmatpush.msra.mxu0 0.0
      %540 = vmatpush.msra.mxu0 0.0
      %541 = vmatpush.msra.mxu0 0.0
      %542 = vmatpush.msra.mxu0 0.0
      %543 = vmatpush.msra.mxu0 0.0
      %544 = vmatpush.msra.mxu0 0.0
      %545 = vmatpush.msra.mxu0 %v394
      %546 = vmatmul.f32.gmra.mxu0 %v383
      %v547 = vpop.f32.mrf.mxu0
      %v548 = vadd.f32 %v312, %v547
      %549 = vdwg.mxu0
      %550 = vmatpush.msra.mxu0 0.0
      %551 = vmatpush.msra.mxu0 0.0
      %552 = vmatpush.msra.mxu0 0.0
      %553 = vmatpush.msra.mxu0 0.0
      %554 = vmatpush.msra.mxu0 0.0
      %555 = vmatpush.msra.mxu0 0.0
      %556 = vmatpush.msra.mxu0 0.0
      %557 = vmatpush.msra.mxu0 0.0
      %558 = vmatpush.msra.mxu0 0.0
      %559 = vmatpush.msra.mxu0 0.0
      %560 = vmatpush.msra.mxu0 0.0
      %561 = vmatpush.msra.mxu0 0.0
      %562 = vmatpush.msra.mxu0 0.0
      %563 = vmatpush.msra.mxu0 0.0
      %564 = vmatpush.msra.mxu0 0.0
      %565 = vmatpush.msra.mxu0 %v396
      %566 = vmatmul.f32.gmra.mxu0 %v383
      %v567 = vpop.f32.mrf.mxu0
      %v568 = vadd.f32 %v312, %v567
      %569 = vdwg.mxu0
      %570 = vmatpush.msra.mxu0 0.0
      %571 = vmatpush.msra.mxu0 0.0
      %572 = vmatpush.msra.mxu0 0.0
      %573 = vmatpush.msra.mxu0 0.0
      %574 = vmatpush.msra.mxu0 0.0
      %575 = vmatpush.msra.mxu0 0.0
      %576 = vmatpush.msra.mxu0 0.0
      %577 = vmatpush.msra.mxu0 0.0
      %578 = vmatpush.msra.mxu0 0.0
      %579 = vmatpush.msra.mxu0 0.0
      %580 = vmatpush.msra.mxu0 0.0
      %581 = vmatpush.msra.mxu0 0.0
      %582 = vmatpush.msra.mxu0 0.0
      %583 = vmatpush.msra.mxu0 0.0
      %584 = vmatpush.msra.mxu0 0.0
      %585 = vmatpush.msra.mxu0 %v398
      %586 = vmatmul.f32.gmra.mxu0 %v383
      %v587 = vpop.f32.mrf.mxu0
      %v588 = vadd.f32 %v312, %v587
      %589 = vdwg.mxu0
      %590 = vmatpush.msra.mxu0 0.0
      %591 = vmatpush.msra.mxu0 0.0
      %592 = vmatpush.msra.mxu0 0.0
      %593 = vmatpush.msra.mxu0 0.0
      %594 = vmatpush.msra.mxu0 0.0
      %595 = vmatpush.msra.mxu0 0.0
      %596 = vmatpush.msra.mxu0 0.0
      %597 = vmatpush.msra.mxu0 0.0
      %598 = vmatpush.msra.mxu0 0.0
      %599 = vmatpush.msra.mxu0 0.0
      %600 = vmatpush.msra.mxu0 0.0
      %601 = vmatpush.msra.mxu0 0.0
      %602 = vmatpush.msra.mxu0 0.0
      %603 = vmatpush.msra.mxu0 0.0
      %604 = vmatpush.msra.mxu0 0.0
      %605 = vmatpush.msra.mxu0 %v400
      %606 = vmatmul.f32.gmra.mxu0 %v383
      %v607 = vpop.f32.mrf.mxu0
      %v608 = vadd.f32 %v312, %v607
      %609 = vdwg.mxu0
      %610 = vmatpush.msra.mxu0 0.0
      %611 = vmatpush.msra.mxu0 0.0
      %612 = vmatpush.msra.mxu0 0.0
      %613 = vmatpush.msra.mxu0 0.0
      %614 = vmatpush.msra.mxu0 0.0
      %615 = vmatpush.msra.mxu0 0.0
      %616 = vmatpush.msra.mxu0 0.0
      %617 = vmatpush.msra.mxu0 0.0
      %618 = vmatpush.msra.mxu0 0.0
      %619 = vmatpush.msra.mxu0 0.0
      %620 = vmatpush.msra.mxu0 0.0
      %621 = vmatpush.msra.mxu0 0.0
      %622 = vmatpush.msra.mxu0 0.0
      %623 = vmatpush.msra.mxu0 0.0
      %624 = vmatpush.msra.mxu0 0.0
      %625 = vmatpush.msra.mxu0 %v402
      %626 = vmatmul.f32.gmra.mxu0 %v383
      %v627 = vpop.f32.mrf.mxu0
      %v628 = vadd.f32 %v312, %v627
      %629 = vdwg.mxu0
      %630 = vmatpush.msra.mxu0 0.0
      %631 = vmatpush.msra.mxu0 0.0
      %632 = vmatpush.msra.mxu0 0.0
      %633 = vmatpush.msra.mxu0 0.0
      %634 = vmatpush.msra.mxu0 0.0
      %635 = vmatpush.msra.mxu0 0.0
      %636 = vmatpush.msra.mxu0 0.0
      %637 = vmatpush.msra.mxu0 0.0
      %638 = vmatpush.msra.mxu0 0.0
      %639 = vmatpush.msra.mxu0 0.0
      %640 = vmatpush.msra.mxu0 0.0
      %641 = vmatpush.msra.mxu0 0.0
      %642 = vmatpush.msra.mxu0 0.0
      %643 = vmatpush.msra.mxu0 0.0
      %644 = vmatpush.msra.mxu0 0.0
      %645 = vmatpush.msra.mxu0 %v404
      %646 = vmatmul.f32.gmra.mxu0 %v383
      %v647 = vpop.f32.mrf.mxu0
      %v648 = vadd.f32 %v312, %v647
      %649 = vdwg.mxu0
      %650 = vmatpush.msra.mxu0 0.0
      %651 = vmatpush.msra.mxu0 0.0
      %652 = vmatpush.msra.mxu0 0.0
      %653 = vmatpush.msra.mxu0 0.0
      %654 = vmatpush.msra.mxu0 0.0
      %655 = vmatpush.msra.mxu0 0.0
      %656 = vmatpush.msra.mxu0 0.0
      %657 = vmatpush.msra.mxu0 0.0
      %658 = vmatpush.msra.mxu0 0.0
      %659 = vmatpush.msra.mxu0 0.0
      %660 = vmatpush.msra.mxu0 0.0
      %661 = vmatpush.msra.mxu0 0.0
      %662 = vmatpush.msra.mxu0 0.0
      %663 = vmatpush.msra.mxu0 0.0
      %664 = vmatpush.msra.mxu0 0.0
      %665 = vmatpush.msra.mxu0 %v406
      %666 = vmatmul.f32.gmra.mxu0 %v383
      %v667 = vpop.f32.mrf.mxu0
      %v668 = vadd.f32 %v312, %v667
      %669 = vdwg.mxu0
      %670 = vmatpush.msra.mxu0 0.0
      %671 = vmatpush.msra.mxu0 0.0
      %672 = vmatpush.msra.mxu0 0.0
      %673 = vmatpush.msra.mxu0 0.0
      %674 = vmatpush.msra.mxu0 0.0
      %675 = vmatpush.msra.mxu0 0.0
      %676 = vmatpush.msra.mxu0 0.0
      %677 = vmatpush.msra.mxu0 0.0
      %678 = vmatpush.msra.mxu0 0.0
      %679 = vmatpush.msra.mxu0 0.0
      %680 = vmatpush.msra.mxu0 0.0
      %681 = vmatpush.msra.mxu0 0.0
      %682 = vmatpush.msra.mxu0 0.0
      %683 = vmatpush.msra.mxu0 0.0
      %684 = vmatpush.msra.mxu0 0.0
      %685 = vmatpush.msra.mxu0 %v408
      %686 = vmatmul.f32.gmra.mxu0 %v383
      %v687 = vpop.f32.mrf.mxu0
      %v688 = vadd.f32 %v312, %v687
      %689 = vdwg.mxu0
      %690 = vmatpush.msra.mxu0 0.0
      %691 = vmatpush.msra.mxu0 0.0
      %692 = vmatpush.msra.mxu0 0.0
      %693 = vmatpush.msra.mxu0 0.0
      %694 = vmatpush.msra.mxu0 0.0
      %695 = vmatpush.msra.mxu0 0.0
      %696 = vmatpush.msra.mxu0 0.0
      %697 = vmatpush.msra.mxu0 0.0
      %698 = vmatpush.msra.mxu0 0.0
      %699 = vmatpush.msra.mxu0 0.0
      %700 = vmatpush.msra.mxu0 0.0
      %701 = vmatpush.msra.mxu0 0.0
      %702 = vmatpush.msra.mxu0 0.0
      %703 = vmatpush.msra.mxu0 0.0
      %704 = vmatpush.msra.mxu0 0.0
      %705 = vmatpush.msra.mxu0 %v410
      %706 = vmatmul.f32.gmra.mxu0 %v383
      %v707 = vpop.f32.mrf.mxu0
      %v708 = vadd.f32 %v312, %v707
      %709 = vdwg.mxu0
      %710 = vmatpush.msra.mxu0 0.0
      %711 = vmatpush.msra.mxu0 0.0
      %712 = vmatpush.msra.mxu0 0.0
      %713 = vmatpush.msra.mxu0 0.0
      %714 = vmatpush.msra.mxu0 0.0
      %715 = vmatpush.msra.mxu0 0.0
      %716 = vmatpush.msra.mxu0 0.0
      %717 = vmatpush.msra.mxu0 0.0
      %718 = vmatpush.msra.mxu0 0.0
      %719 = vmatpush.msra.mxu0 0.0
      %720 = vmatpush.msra.mxu0 0.0
      %721 = vmatpush.msra.mxu0 0.0
      %722 = vmatpush.msra.mxu0 0.0
      %723 = vmatpush.msra.mxu0 0.0
      %724 = vmatpush.msra.mxu0 0.0
      %725 = vmatpush.msra.mxu0 %v412
      %726 = vmatmul.f32.gmra.mxu0 %v383
      %v727 = vpop.f32.mrf.mxu0
      %v728 = vadd.f32 %v312, %v727
      %729 = vdwg.mxu0
      %730 = vmatpush.msra.mxu0 0.0
      %731 = vmatpush.msra.mxu0 0.0
      %732 = vmatpush.msra.mxu0 0.0
      %733 = vmatpush.msra.mxu0 0.0
      %734 = vmatpush.msra.mxu0 0.0
      %735 = vmatpush.msra.mxu0 0.0
      %736 = vmatpush.msra.mxu0 0.0
      %737 = vmatpush.msra.mxu0 0.0
      %738 = vmatpush.msra.mxu0 0.0
      %739 = vmatpush.msra.mxu0 0.0
      %740 = vmatpush.msra.mxu0 0.0
      %741 = vmatpush.msra.mxu0 0.0
      %742 = vmatpush.msra.mxu0 0.0
      %743 = vmatpush.msra.mxu0 0.0
      %744 = vmatpush.msra.mxu0 0.0
      %745 = vmatpush.msra.mxu0 %v414
      %746 = vmatmul.f32.gmra.mxu0 %v383
      %v747 = vpop.f32.mrf.mxu0
      %v748 = vadd.f32 %v312, %v747
      %749 = vdwg.mxu0
      %750 = vmatpush.msra.mxu0 0.0
      %751 = vmatpush.msra.mxu0 0.0
      %752 = vmatpush.msra.mxu0 0.0
      %753 = vmatpush.msra.mxu0 0.0
      %754 = vmatpush.msra.mxu0 0.0
      %755 = vmatpush.msra.mxu0 0.0
      %756 = vmatpush.msra.mxu0 0.0
      %757 = vmatpush.msra.mxu0 0.0
      %758 = vmatpush.msra.mxu0 0.0
      %759 = vmatpush.msra.mxu0 0.0
      %760 = vmatpush.msra.mxu0 0.0
      %761 = vmatpush.msra.mxu0 0.0
      %762 = vmatpush.msra.mxu0 0.0
      %763 = vmatpush.msra.mxu0 0.0
      %764 = vmatpush.msra.mxu0 0.0
      %765 = vmatpush.msra.mxu0 %v416
      %766 = vmatmul.f32.gmra.mxu0 %v383
      %v767 = vpop.f32.mrf.mxu0
      %v768 = vadd.f32 %v312, %v767
      %769 = vdwg.mxu0
      %770 = vmatpush.msra.mxu0 0.0
      %771 = vmatpush.msra.mxu0 0.0
      %772 = vmatpush.msra.mxu0 0.0
      %773 = vmatpush.msra.mxu0 0.0
      %774 = vmatpush.msra.mxu0 0.0
      %775 = vmatpush.msra.mxu0 0.0
      %776 = vmatpush.msra.mxu0 0.0
      %777 = vmatpush.msra.mxu0 0.0
      %778 = vmatpush.msra.mxu0 0.0
      %779 = vmatpush.msra.mxu0 0.0
      %780 = vmatpush.msra.mxu0 0.0
      %781 = vmatpush.msra.mxu0 0.0
      %782 = vmatpush.msra.mxu0 0.0
      %783 = vmatpush.msra.mxu0 0.0
      %784 = vmatpush.msra.mxu0 0.0
      %785 = vmatpush.msra.mxu0 %v418
      %786 = vmatmul.f32.gmra.mxu0 %v383
      %v787 = vpop.f32.mrf.mxu0
      %v788 = vadd.f32 %v312, %v787
      %789 = vdwg.mxu0
      %790 = vmatpush.msra.mxu0 0.0
      %791 = vmatpush.msra.mxu0 0.0
      %792 = vmatpush.msra.mxu0 0.0
      %793 = vmatpush.msra.mxu0 0.0
      %794 = vmatpush.msra.mxu0 0.0
      %795 = vmatpush.msra.mxu0 0.0
      %796 = vmatpush.msra.mxu0 0.0
      %797 = vmatpush.msra.mxu0 0.0
      %798 = vmatpush.msra.mxu0 0.0
      %799 = vmatpush.msra.mxu0 0.0
      %800 = vmatpush.msra.mxu0 0.0
      %801 = vmatpush.msra.mxu0 0.0
      %802 = vmatpush.msra.mxu0 0.0
      %803 = vmatpush.msra.mxu0 0.0
      %804 = vmatpush.msra.mxu0 0.0
      %805 = vmatpush.msra.mxu0 %v420
      %806 = vmatmul.f32.gmra.mxu0 %v383
      %v807 = vpop.f32.mrf.mxu0
      %v808 = vadd.f32 %v312, %v807
      %809 = vdwg.mxu0
      %810 = vmatpush.msra.mxu0 0.0
      %811 = vmatpush.msra.mxu0 0.0
      %812 = vmatpush.msra.mxu0 0.0
      %813 = vmatpush.msra.mxu0 0.0
      %814 = vmatpush.msra.mxu0 0.0
      %815 = vmatpush.msra.mxu0 0.0
      %816 = vmatpush.msra.mxu0 0.0
      %817 = vmatpush.msra.mxu0 0.0
      %818 = vmatpush.msra.mxu0 0.0
      %819 = vmatpush.msra.mxu0 0.0
      %820 = vmatpush.msra.mxu0 0.0
      %821 = vmatpush.msra.mxu0 0.0
      %822 = vmatpush.msra.mxu0 0.0
      %823 = vmatpush.msra.mxu0 0.0
      %824 = vmatpush.msra.mxu0 0.0
      %825 = vmatpush.msra.mxu0 %v422
      %826 = vmatmul.f32.gmra.mxu0 %v383
      %v827 = vpop.f32.mrf.mxu0
      %v828 = vadd.f32 %v312, %v827
      %829 = vdwg.mxu0
      %830 = vmatpush.msra.mxu0 0.0
      %831 = vmatpush.msra.mxu0 0.0
      %832 = vmatpush.msra.mxu0 0.0
      %833 = vmatpush.msra.mxu0 0.0
      %834 = vmatpush.msra.mxu0 0.0
      %835 = vmatpush.msra.mxu0 0.0
      %836 = vmatpush.msra.mxu0 0.0
      %837 = vmatpush.msra.mxu0 0.0
      %838 = vmatpush.msra.mxu0 0.0
      %839 = vmatpush.msra.mxu0 0.0
      %840 = vmatpush.msra.mxu0 0.0
      %841 = vmatpush.msra.mxu0 0.0
      %842 = vmatpush.msra.mxu0 0.0
      %843 = vmatpush.msra.mxu0 0.0
      %844 = vmatpush.msra.mxu0 0.0
      %845 = vmatpush.msra.mxu0 %v424
      %846 = vmatmul.f32.gmra.mxu0 %v383
      %v847 = vpop.f32.mrf.mxu0
      %v848 = vadd.f32 %v312, %v847
      %849 = vdwg.mxu0
      %850 = vmatpush.msra.mxu0 0.0
      %851 = vmatpush.msra.mxu0 0.0
      %852 = vmatpush.msra.mxu0 0.0
      %853 = vmatpush.msra.mxu0 0.0
      %854 = vmatpush.msra.mxu0 0.0
      %855 = vmatpush.msra.mxu0 0.0
      %856 = vmatpush.msra.mxu0 0.0
      %857 = vmatpush.msra.mxu0 0.0
      %858 = vmatpush.msra.mxu0 0.0
      %859 = vmatpush.msra.mxu0 0.0
      %860 = vmatpush.msra.mxu0 0.0
      %861 = vmatpush.msra.mxu0 0.0
      %862 = vmatpush.msra.mxu0 0.0
      %863 = vmatpush.msra.mxu0 0.0
      %864 = vmatpush.msra.mxu0 0.0
      %865 = vmatpush.msra.mxu0 %v426
      %866 = vmatmul.f32.gmra.mxu0 %v383
      %v867 = vpop.f32.mrf.mxu0
      %v868 = vadd.f32 %v312, %v867
      %869 = vdwg.mxu0
      %870 = vmatpush.msra.mxu0 0.0
      %871 = vmatpush.msra.mxu0 0.0
      %872 = vmatpush.msra.mxu0 0.0
      %873 = vmatpush.msra.mxu0 0.0
      %874 = vmatpush.msra.mxu0 0.0
      %875 = vmatpush.msra.mxu0 0.0
      %876 = vmatpush.msra.mxu0 0.0
      %877 = vmatpush.msra.mxu0 0.0
      %878 = vmatpush.msra.mxu0 0.0
      %879 = vmatpush.msra.mxu0 0.0
      %880 = vmatpush.msra.mxu0 0.0
      %881 = vmatpush.msra.mxu0 0.0
      %882 = vmatpush.msra.mxu0 0.0
      %883 = vmatpush.msra.mxu0 0.0
      %884 = vmatpush.msra.mxu0 0.0
      %885 = vmatpush.msra.mxu0 %v428
      %886 = vmatmul.f32.gmra.mxu0 %v383
      %v887 = vpop.f32.mrf.mxu0
      %v888 = vadd.f32 %v312, %v887
      %889 = vdwg.mxu0
      %890 = vmatpush.msra.mxu0 0.0
      %891 = vmatpush.msra.mxu0 0.0
      %892 = vmatpush.msra.mxu0 0.0
      %893 = vmatpush.msra.mxu0 0.0
      %894 = vmatpush.msra.mxu0 0.0
      %895 = vmatpush.msra.mxu0 0.0
      %896 = vmatpush.msra.mxu0 0.0
      %897 = vmatpush.msra.mxu0 0.0
      %898 = vmatpush.msra.mxu0 0.0
      %899 = vmatpush.msra.mxu0 0.0
      %900 = vmatpush.msra.mxu0 0.0
      %901 = vmatpush.msra.mxu0 0.0
      %902 = vmatpush.msra.mxu0 0.0
      %903 = vmatpush.msra.mxu0 0.0
      %904 = vmatpush.msra.mxu0 0.0
      %905 = vmatpush.msra.mxu0 %v430
      %906 = vmatmul.f32.gmra.mxu0 %v383
      %v907 = vpop.f32.mrf.mxu0
      %v908 = vadd.f32 %v312, %v907
      %909 = vdwg.mxu0
      %910 = vmatpush.msra.mxu0 0.0
      %911 = vmatpush.msra.mxu0 0.0
      %912 = vmatpush.msra.mxu0 0.0
      %913 = vmatpush.msra.mxu0 0.0
      %914 = vmatpush.msra.mxu0 0.0
      %915 = vmatpush.msra.mxu0 0.0
      %916 = vmatpush.msra.mxu0 0.0
      %917 = vmatpush.msra.mxu0 0.0
      %918 = vmatpush.msra.mxu0 0.0
      %919 = vmatpush.msra.mxu0 0.0
      %920 = vmatpush.msra.mxu0 0.0
      %921 = vmatpush.msra.mxu0 0.0
      %922 = vmatpush.msra.mxu0 0.0
      %923 = vmatpush.msra.mxu0 0.0
      %924 = vmatpush.msra.mxu0 0.0
      %925 = vmatpush.msra.mxu0 %v432
      %926 = vmatmul.f32.gmra.mxu0 %v383
      %v927 = vpop.f32.mrf.mxu0
      %v928 = vadd.f32 %v312, %v927
      %929 = vdwg.mxu0
      %930 = vmatpush.msra.mxu0 0.0
      %931 = vmatpush.msra.mxu0 0.0
      %932 = vmatpush.msra.mxu0 0.0
      %933 = vmatpush.msra.mxu0 0.0
      %934 = vmatpush.msra.mxu0 0.0
      %935 = vmatpush.msra.mxu0 0.0
      %936 = vmatpush.msra.mxu0 0.0
      %937 = vmatpush.msra.mxu0 0.0
      %938 = vmatpush.msra.mxu0 0.0
      %939 = vmatpush.msra.mxu0 0.0
      %940 = vmatpush.msra.mxu0 0.0
      %941 = vmatpush.msra.mxu0 0.0
      %942 = vmatpush.msra.mxu0 0.0
      %943 = vmatpush.msra.mxu0 0.0
      %944 = vmatpush.msra.mxu0 0.0
      %945 = vmatpush.msra.mxu0 %v434
      %946 = vmatmul.f32.gmra.mxu0 %v383
      %v947 = vpop.f32.mrf.mxu0
      %v948 = vadd.f32 %v312, %v947
      %949 = vdwg.mxu0
      %950 = vmatpush.msra.mxu0 0.0
      %951 = vmatpush.msra.mxu0 0.0
      %952 = vmatpush.msra.mxu0 0.0
      %953 = vmatpush.msra.mxu0 0.0
      %954 = vmatpush.msra.mxu0 0.0
      %955 = vmatpush.msra.mxu0 0.0
      %956 = vmatpush.msra.mxu0 0.0
      %957 = vmatpush.msra.mxu0 0.0
      %958 = vmatpush.msra.mxu0 0.0
      %959 = vmatpush.msra.mxu0 0.0
      %960 = vmatpush.msra.mxu0 0.0
      %961 = vmatpush.msra.mxu0 0.0
      %962 = vmatpush.msra.mxu0 0.0
      %963 = vmatpush.msra.mxu0 0.0
      %964 = vmatpush.msra.mxu0 0.0
      %965 = vmatpush.msra.mxu0 %v436
      %966 = vmatmul.f32.gmra.mxu0 %v383
      %v967 = vpop.f32.mrf.mxu0
      %v968 = vadd.f32 %v312, %v967
      %969 = vdwg.mxu0
      %970 = vmatpush.msra.mxu0 0.0
      %971 = vmatpush.msra.mxu0 0.0
      %972 = vmatpush.msra.mxu0 0.0
      %973 = vmatpush.msra.mxu0 0.0
      %974 = vmatpush.msra.mxu0 0.0
      %975 = vmatpush.msra.mxu0 0.0
      %976 = vmatpush.msra.mxu0 0.0
      %977 = vmatpush.msra.mxu0 0.0
      %978 = vmatpush.msra.mxu0 0.0
      %979 = vmatpush.msra.mxu0 0.0
      %980 = vmatpush.msra.mxu0 0.0
      %981 = vmatpush.msra.mxu0 0.0
      %982 = vmatpush.msra.mxu0 0.0
      %983 = vmatpush.msra.mxu0 0.0
      %984 = vmatpush.msra.mxu0 0.0
      %985 = vmatpush.msra.mxu0 %v438
      %986 = vmatmul.f32.gmra.mxu0 %v383
      %v987 = vpop.f32.mrf.mxu0
      %v988 = vadd.f32 %v312, %v987
      %989 = vdwg.mxu0
      %990 = vmatpush.msra.mxu0 0.0
      %991 = vmatpush.msra.mxu0 0.0
      %992 = vmatpush.msra.mxu0 0.0
      %993 = vmatpush.msra.mxu0 0.0
      %994 = vmatpush.msra.mxu0 0.0
      %995 = vmatpush.msra.mxu0 0.0
      %996 = vmatpush.msra.mxu0 0.0
      %997 = vmatpush.msra.mxu0 0.0
      %998 = vmatpush.msra.mxu0 0.0
      %999 = vmatpush.msra.mxu0 0.0
      %1000 = vmatpush.msra.mxu0 0.0
      %1001 = vmatpush.msra.mxu0 0.0
      %1002 = vmatpush.msra.mxu0 0.0
      %1003 = vmatpush.msra.mxu0 0.0
      %1004 = vmatpush.msra.mxu0 0.0
      %1005 = vmatpush.msra.mxu0 %v440
      %1006 = vmatmul.f32.gmra.mxu0 %v383
      %v1007 = vpop.f32.mrf.mxu0
      %v1008 = vadd.f32 %v312, %v1007
      %1009 = vdwg.mxu0
      %1010 = vmatpush.msra.mxu0 0.0
      %1011 = vmatpush.msra.mxu0 0.0
      %1012 = vmatpush.msra.mxu0 0.0
      %1013 = vmatpush.msra.mxu0 0.0
      %1014 = vmatpush.msra.mxu0 0.0
      %1015 = vmatpush.msra.mxu0 0.0
      %1016 = vmatpush.msra.mxu0 0.0
      %1017 = vmatpush.msra.mxu0 0.0
      %1018 = vmatpush.msra.mxu0 0.0
      %1019 = vmatpush.msra.mxu0 0.0
      %1020 = vmatpush.msra.mxu0 0.0
      %1021 = vmatpush.msra.mxu0 0.0
      %1022 = vmatpush.msra.mxu0 0.0
      %1023 = vmatpush.msra.mxu0 0.0
      %1024 = vmatpush.msra.mxu0 0.0
      %1025 = vmatpush.msra.mxu0 %v442
      %1026 = vmatmul.f32.gmra.mxu0 %v383
      %v1027 = vpop.f32.mrf.mxu0
      %v1028 = vadd.f32 %v312, %v1027
      %1029 = vdwg.mxu0
      %1030 = vmatpush.msra.mxu0 0.0
      %1031 = vmatpush.msra.mxu0 0.0
      %1032 = vmatpush.msra.mxu0 0.0
      %1033 = vmatpush.msra.mxu0 0.0
      %1034 = vmatpush.msra.mxu0 0.0
      %1035 = vmatpush.msra.mxu0 0.0
      %1036 = vmatpush.msra.mxu0 0.0
      %1037 = vmatpush.msra.mxu0 0.0
      %1038 = vmatpush.msra.mxu0 0.0
      %1039 = vmatpush.msra.mxu0 0.0
      %1040 = vmatpush.msra.mxu0 0.0
      %1041 = vmatpush.msra.mxu0 0.0
      %1042 = vmatpush.msra.mxu0 0.0
      %1043 = vmatpush.msra.mxu0 0.0
      %1044 = vmatpush.msra.mxu0 0.0
      %1045 = vmatpush.msra.mxu0 %v444
      %1046 = vmatmul.f32.gmra.mxu0 %v383
      %v1047 = vpop.f32.mrf.mxu0
      %v1048 = vadd.f32 %v312, %v1047
      %1049 = vdwg.mxu0
      %1050 = vmatpush.msra.mxu0 0.0
      %1051 = vmatpush.msra.mxu0 0.0
      %1052 = vmatpush.msra.mxu0 0.0
      %1053 = vmatpush.msra.mxu0 0.0
      %1054 = vmatpush.msra.mxu0 0.0
      %1055 = vmatpush.msra.mxu0 0.0
      %1056 = vmatpush.msra.mxu0 0.0
      %1057 = vmatpush.msra.mxu0 0.0
      %1058 = vmatpush.msra.mxu0 0.0
      %1059 = vmatpush.msra.mxu0 0.0
      %1060 = vmatpush.msra.mxu0 0.0
      %1061 = vmatpush.msra.mxu0 0.0
      %1062 = vmatpush.msra.mxu0 0.0
      %1063 = vmatpush.msra.mxu0 0.0
      %1064 = vmatpush.msra.mxu0 0.0
      %1065 = vmatpush.msra.mxu0 %v446
      %1066 = vmatmul.f32.gmra.mxu0 %v383
      %v1067 = vpop.f32.mrf.mxu0
      %v1068 = vadd.f32 %v312, %v1067
      %1069 = vdwg.mxu0
      %1070 = vmatpush.msra.mxu0 0.0
      %1071 = vmatpush.msra.mxu0 0.0
      %1072 = vmatpush.msra.mxu0 0.0
      %1073 = vmatpush.msra.mxu0 0.0
      %1074 = vmatpush.msra.mxu0 0.0
      %1075 = vmatpush.msra.mxu0 0.0
      %1076 = vmatpush.msra.mxu0 0.0
      %1077 = vmatpush.msra.mxu0 0.0
      %1078 = vmatpush.msra.mxu0 0.0
      %1079 = vmatpush.msra.mxu0 0.0
      %1080 = vmatpush.msra.mxu0 0.0
      %1081 = vmatpush.msra.mxu0 0.0
      %1082 = vmatpush.msra.mxu0 0.0
      %1083 = vmatpush.msra.mxu0 0.0
      %1084 = vmatpush.msra.mxu0 0.0
      %1085 = vmatpush.msra.mxu0 %v448
      %1086 = vmatmul.f32.gmra.mxu0 %v383
      %v1087 = vpop.f32.mrf.mxu0
      %v1088 = vadd.f32 %v312, %v1087
      %1089 = vdwg.mxu0
      %v1090 = vmax.f32 %v468, 0.0
      %v1091 = vmax.f32 %v488, 0.0
      %v1092 = vmax.f32 %v508, 0.0
      %v1093 = vmax.f32 %v528, 0.0
      %v1094 = vmax.f32 %v548, 0.0
      %v1095 = vmax.f32 %v568, 0.0
      %v1096 = vmax.f32 %v588, 0.0
      %v1097 = vmax.f32 %v608, 0.0
      %v1098 = vmax.f32 %v628, 0.0
      %v1099 = vmax.f32 %v648, 0.0
      %v1100 = vmax.f32 %v668, 0.0
      %v1101 = vmax.f32 %v688, 0.0
      %v1102 = vmax.f32 %v708, 0.0
      %v1103 = vmax.f32 %v728, 0.0
      %v1104 = vmax.f32 %v748, 0.0
      %v1105 = vmax.f32 %v768, 0.0
      %v1106 = vmax.f32 %v788, 0.0
      %v1107 = vmax.f32 %v808, 0.0
      %v1108 = vmax.f32 %v828, 0.0
      %v1109 = vmax.f32 %v848, 0.0
      %v1110 = vmax.f32 %v868, 0.0
      %v1111 = vmax.f32 %v888, 0.0
      %v1112 = vmax.f32 %v908, 0.0
      %v1113 = vmax.f32 %v928, 0.0
      %v1114 = vmax.f32 %v948, 0.0
      %v1115 = vmax.f32 %v968, 0.0
      %v1116 = vmax.f32 %v988, 0.0
      %v1117 = vmax.f32 %v1008, 0.0
      %v1118 = vmax.f32 %v1028, 0.0
      %v1119 = vmax.f32 %v1048, 0.0
      %v1120 = vmax.f32 %v1068, 0.0
      %v1121 = vmax.f32 %v1088, 0.0
      %s1122 = scalar_lea.vmem %s2, 576
      %v1123 = vld [vmem:[%s1122] sm:$0xff]
      %v1124 = vld [vmem:[%s1122 + $0x8] sm:$0xff]
      %s1125 = scalar_lea.vmem %s2, 640
      %v1126 = vld [vmem:[%s1125] sm:$0xff]
      %v1127 = vld [vmem:[%s1125 + $0x8] sm:$0xff]
      %1129 = vset.pattern.permute.xlu0 0
      %1130 = vperm.xlu0 %1129, %v1126
      %v1131 = vpop.permute.xlu0 %1130
      %1134 = vset.pattern.permute.xlu0 0
      %1135 = vperm.xlu0 %1134, %v1127
      %v1136 = vpop.permute.xlu0 %1135
      %vm1138 = vcmask 64512
      %v1140 = vsel %vm1138, %v1123, 0
      %v1143 = vsel %vm1138, %v1124, 0
      %1145 = vmatpush.msra.mxu0 0.0
      %1146 = vmatpush.msra.mxu0 0.0
      %1147 = vmatpush.msra.mxu0 0.0
      %1148 = vmatpush.msra.mxu0 0.0
      %1149 = vmatpush.msra.mxu0 0.0
      %1150 = vmatpush.msra.mxu0 0.0
      %1151 = vmatpush.msra.mxu0 0.0
      %1152 = vmatpush.msra.mxu0 0.0
      %1153 = vmatpush.msra.mxu0 0.0
      %1154 = vmatpush.msra.mxu0 0.0
      %1155 = vmatpush.msra.mxu0 0.0
      %1156 = vmatpush.msra.mxu0 0.0
      %1157 = vmatpush.msra.mxu0 0.0
      %1158 = vmatpush.msra.mxu0 0.0
      %1159 = vmatpush.msra.mxu0 0.0
      %1160 = vmatpush.msra.mxu0 %v1090
      %1161 = vmatmul.f32.gmra.mxu0 %v1140
      %v1162 = vpop.f32.mrf.mxu0
      %v1163 = vadd.f32 %v1131, %v1162
      %1164 = vmatmul.f32.gmra.mxu0 %v1143
      %v1165 = vpop.f32.mrf.mxu0
      %v1166 = vadd.f32 %v1136, %v1165
      %1167 = vdwg.mxu0
      %1168 = vmatpush.msra.mxu0 0.0
      %1169 = vmatpush.msra.mxu0 0.0
      %1170 = vmatpush.msra.mxu0 0.0
      %1171 = vmatpush.msra.mxu0 0.0
      %1172 = vmatpush.msra.mxu0 0.0
      %1173 = vmatpush.msra.mxu0 0.0
      %1174 = vmatpush.msra.mxu0 0.0
      %1175 = vmatpush.msra.mxu0 0.0
      %1176 = vmatpush.msra.mxu0 0.0
      %1177 = vmatpush.msra.mxu0 0.0
      %1178 = vmatpush.msra.mxu0 0.0
      %1179 = vmatpush.msra.mxu0 0.0
      %1180 = vmatpush.msra.mxu0 0.0
      %1181 = vmatpush.msra.mxu0 0.0
      %1182 = vmatpush.msra.mxu0 0.0
      %1183 = vmatpush.msra.mxu0 %v1091
      %1184 = vmatmul.f32.gmra.mxu0 %v1140
      %v1185 = vpop.f32.mrf.mxu0
      %v1186 = vadd.f32 %v1131, %v1185
      %1187 = vmatmul.f32.gmra.mxu0 %v1143
      %v1188 = vpop.f32.mrf.mxu0
      %v1189 = vadd.f32 %v1136, %v1188
      %1190 = vdwg.mxu0
      %1191 = vmatpush.msra.mxu0 0.0
      %1192 = vmatpush.msra.mxu0 0.0
      %1193 = vmatpush.msra.mxu0 0.0
      %1194 = vmatpush.msra.mxu0 0.0
      %1195 = vmatpush.msra.mxu0 0.0
      %1196 = vmatpush.msra.mxu0 0.0
      %1197 = vmatpush.msra.mxu0 0.0
      %1198 = vmatpush.msra.mxu0 0.0
      %1199 = vmatpush.msra.mxu0 0.0
      %1200 = vmatpush.msra.mxu0 0.0
      %1201 = vmatpush.msra.mxu0 0.0
      %1202 = vmatpush.msra.mxu0 0.0
      %1203 = vmatpush.msra.mxu0 0.0
      %1204 = vmatpush.msra.mxu0 0.0
      %1205 = vmatpush.msra.mxu0 0.0
      %1206 = vmatpush.msra.mxu0 %v1092
      %1207 = vmatmul.f32.gmra.mxu0 %v1140
      %v1208 = vpop.f32.mrf.mxu0
      %v1209 = vadd.f32 %v1131, %v1208
      %1210 = vmatmul.f32.gmra.mxu0 %v1143
      %v1211 = vpop.f32.mrf.mxu0
      %v1212 = vadd.f32 %v1136, %v1211
      %1213 = vdwg.mxu0
      %1214 = vmatpush.msra.mxu0 0.0
      %1215 = vmatpush.msra.mxu0 0.0
      %1216 = vmatpush.msra.mxu0 0.0
      %1217 = vmatpush.msra.mxu0 0.0
      %1218 = vmatpush.msra.mxu0 0.0
      %1219 = vmatpush.msra.mxu0 0.0
      %1220 = vmatpush.msra.mxu0 0.0
      %1221 = vmatpush.msra.mxu0 0.0
      %1222 = vmatpush.msra.mxu0 0.0
      %1223 = vmatpush.msra.mxu0 0.0
      %1224 = vmatpush.msra.mxu0 0.0
      %1225 = vmatpush.msra.mxu0 0.0
      %1226 = vmatpush.msra.mxu0 0.0
      %1227 = vmatpush.msra.mxu0 0.0
      %1228 = vmatpush.msra.mxu0 0.0
      %1229 = vmatpush.msra.mxu0 %v1093
      %1230 = vmatmul.f32.gmra.mxu0 %v1140
      %v1231 = vpop.f32.mrf.mxu0
      %v1232 = vadd.f32 %v1131, %v1231
      %1233 = vmatmul.f32.gmra.mxu0 %v1143
      %v1234 = vpop.f32.mrf.mxu0
      %v1235 = vadd.f32 %v1136, %v1234
      %1236 = vdwg.mxu0
      %1237 = vmatpush.msra.mxu0 0.0
      %1238 = vmatpush.msra.mxu0 0.0
      %1239 = vmatpush.msra.mxu0 0.0
      %1240 = vmatpush.msra.mxu0 0.0
      %1241 = vmatpush.msra.mxu0 0.0
      %1242 = vmatpush.msra.mxu0 0.0
      %1243 = vmatpush.msra.mxu0 0.0
      %1244 = vmatpush.msra.mxu0 0.0
      %1245 = vmatpush.msra.mxu0 0.0
      %1246 = vmatpush.msra.mxu0 0.0
      %1247 = vmatpush.msra.mxu0 0.0
      %1248 = vmatpush.msra.mxu0 0.0
      %1249 = vmatpush.msra.mxu0 0.0
      %1250 = vmatpush.msra.mxu0 0.0
      %1251 = vmatpush.msra.mxu0 0.0
      %1252 = vmatpush.msra.mxu0 %v1094
      %1253 = vmatmul.f32.gmra.mxu0 %v1140
      %v1254 = vpop.f32.mrf.mxu0
      %v1255 = vadd.f32 %v1131, %v1254
      %1256 = vmatmul.f32.gmra.mxu0 %v1143
      %v1257 = vpop.f32.mrf.mxu0
      %v1258 = vadd.f32 %v1136, %v1257
      %1259 = vdwg.mxu0
      %1260 = vmatpush.msra.mxu0 0.0
      %1261 = vmatpush.msra.mxu0 0.0
      %1262 = vmatpush.msra.mxu0 0.0
      %1263 = vmatpush.msra.mxu0 0.0
      %1264 = vmatpush.msra.mxu0 0.0
      %1265 = vmatpush.msra.mxu0 0.0
      %1266 = vmatpush.msra.mxu0 0.0
      %1267 = vmatpush.msra.mxu0 0.0
      %1268 = vmatpush.msra.mxu0 0.0
      %1269 = vmatpush.msra.mxu0 0.0
      %1270 = vmatpush.msra.mxu0 0.0
      %1271 = vmatpush.msra.mxu0 0.0
      %1272 = vmatpush.msra.mxu0 0.0
      %1273 = vmatpush.msra.mxu0 0.0
      %1274 = vmatpush.msra.mxu0 0.0
      %1275 = vmatpush.msra.mxu0 %v1095
      %1276 = vmatmul.f32.gmra.mxu0 %v1140
      %v1277 = vpop.f32.mrf.mxu0
      %v1278 = vadd.f32 %v1131, %v1277
      %1279 = vmatmul.f32.gmra.mxu0 %v1143
      %v1280 = vpop.f32.mrf.mxu0
      %v1281 = vadd.f32 %v1136, %v1280
      %1282 = vdwg.mxu0
      %1283 = vmatpush.msra.mxu0 0.0
      %1284 = vmatpush.msra.mxu0 0.0
      %1285 = vmatpush.msra.mxu0 0.0
      %1286 = vmatpush.msra.mxu0 0.0
      %1287 = vmatpush.msra.mxu0 0.0
      %1288 = vmatpush.msra.mxu0 0.0
      %1289 = vmatpush.msra.mxu0 0.0
      %1290 = vmatpush.msra.mxu0 0.0
      %1291 = vmatpush.msra.mxu0 0.0
      %1292 = vmatpush.msra.mxu0 0.0
      %1293 = vmatpush.msra.mxu0 0.0
      %1294 = vmatpush.msra.mxu0 0.0
      %1295 = vmatpush.msra.mxu0 0.0
      %1296 = vmatpush.msra.mxu0 0.0
      %1297 = vmatpush.msra.mxu0 0.0
      %1298 = vmatpush.msra.mxu0 %v1096
      %1299 = vmatmul.f32.gmra.mxu0 %v1140
      %v1300 = vpop.f32.mrf.mxu0
      %v1301 = vadd.f32 %v1131, %v1300
      %1302 = vmatmul.f32.gmra.mxu0 %v1143
      %v1303 = vpop.f32.mrf.mxu0
      %v1304 = vadd.f32 %v1136, %v1303
      %1305 = vdwg.mxu0
      %1306 = vmatpush.msra.mxu0 0.0
      %1307 = vmatpush.msra.mxu0 0.0
      %1308 = vmatpush.msra.mxu0 0.0
      %1309 = vmatpush.msra.mxu0 0.0
      %1310 = vmatpush.msra.mxu0 0.0
      %1311 = vmatpush.msra.mxu0 0.0
      %1312 = vmatpush.msra.mxu0 0.0
      %1313 = vmatpush.msra.mxu0 0.0
      %1314 = vmatpush.msra.mxu0 0.0
      %1315 = vmatpush.msra.mxu0 0.0
      %1316 = vmatpush.msra.mxu0 0.0
      %1317 = vmatpush.msra.mxu0 0.0
      %1318 = vmatpush.msra.mxu0 0.0
      %1319 = vmatpush.msra.mxu0 0.0
      %1320 = vmatpush.msra.mxu0 0.0
      %1321 = vmatpush.msra.mxu0 %v1097
      %1322 = vmatmul.f32.gmra.mxu0 %v1140
      %v1323 = vpop.f32.mrf.mxu0
      %v1324 = vadd.f32 %v1131, %v1323
      %1325 = vmatmul.f32.gmra.mxu0 %v1143
      %v1326 = vpop.f32.mrf.mxu0
      %v1327 = vadd.f32 %v1136, %v1326
      %1328 = vdwg.mxu0
      %1329 = vmatpush.msra.mxu0 0.0
      %1330 = vmatpush.msra.mxu0 0.0
      %1331 = vmatpush.msra.mxu0 0.0
      %1332 = vmatpush.msra.mxu0 0.0
      %1333 = vmatpush.msra.mxu0 0.0
      %1334 = vmatpush.msra.mxu0 0.0
      %1335 = vmatpush.msra.mxu0 0.0
      %1336 = vmatpush.msra.mxu0 0.0
      %1337 = vmatpush.msra.mxu0 0.0
      %1338 = vmatpush.msra.mxu0 0.0
      %1339 = vmatpush.msra.mxu0 0.0
      %1340 = vmatpush.msra.mxu0 0.0
      %1341 = vmatpush.msra.mxu0 0.0
      %1342 = vmatpush.msra.mxu0 0.0
      %1343 = vmatpush.msra.mxu0 0.0
      %1344 = vmatpush.msra.mxu0 %v1098
      %1345 = vmatmul.f32.gmra.mxu0 %v1140
      %v1346 = vpop.f32.mrf.mxu0
      %v1347 = vadd.f32 %v1131, %v1346
      %1348 = vmatmul.f32.gmra.mxu0 %v1143
      %v1349 = vpop.f32.mrf.mxu0
      %v1350 = vadd.f32 %v1136, %v1349
      %1351 = vdwg.mxu0
      %1352 = vmatpush.msra.mxu0 0.0
      %1353 = vmatpush.msra.mxu0 0.0
      %1354 = vmatpush.msra.mxu0 0.0
      %1355 = vmatpush.msra.mxu0 0.0
      %1356 = vmatpush.msra.mxu0 0.0
      %1357 = vmatpush.msra.mxu0 0.0
      %1358 = vmatpush.msra.mxu0 0.0
      %1359 = vmatpush.msra.mxu0 0.0
      %1360 = vmatpush.msra.mxu0 0.0
      %1361 = vmatpush.msra.mxu0 0.0
      %1362 = vmatpush.msra.mxu0 0.0
      %1363 = vmatpush.msra.mxu0 0.0
      %1364 = vmatpush.msra.mxu0 0.0
      %1365 = vmatpush.msra.mxu0 0.0
      %1366 = vmatpush.msra.mxu0 0.0
      %1367 = vmatpush.msra.mxu0 %v1099
      %1368 = vmatmul.f32.gmra.mxu0 %v1140
      %v1369 = vpop.f32.mrf.mxu0
      %v1370 = vadd.f32 %v1131, %v1369
      %1371 = vmatmul.f32.gmra.mxu0 %v1143
      %v1372 = vpop.f32.mrf.mxu0
      %v1373 = vadd.f32 %v1136, %v1372
      %1374 = vdwg.mxu0
      %1375 = vmatpush.msra.mxu0 0.0
      %1376 = vmatpush.msra.mxu0 0.0
      %1377 = vmatpush.msra.mxu0 0.0
      %1378 = vmatpush.msra.mxu0 0.0
      %1379 = vmatpush.msra.mxu0 0.0
      %1380 = vmatpush.msra.mxu0 0.0
      %1381 = vmatpush.msra.mxu0 0.0
      %1382 = vmatpush.msra.mxu0 0.0
      %1383 = vmatpush.msra.mxu0 0.0
      %1384 = vmatpush.msra.mxu0 0.0
      %1385 = vmatpush.msra.mxu0 0.0
      %1386 = vmatpush.msra.mxu0 0.0
      %1387 = vmatpush.msra.mxu0 0.0
      %1388 = vmatpush.msra.mxu0 0.0
      %1389 = vmatpush.msra.mxu0 0.0
      %1390 = vmatpush.msra.mxu0 %v1100
      %1391 = vmatmul.f32.gmra.mxu0 %v1140
      %v1392 = vpop.f32.mrf.mxu0
      %v1393 = vadd.f32 %v1131, %v1392
      %1394 = vmatmul.f32.gmra.mxu0 %v1143
      %v1395 = vpop.f32.mrf.mxu0
      %v1396 = vadd.f32 %v1136, %v1395
      %1397 = vdwg.mxu0
      %1398 = vmatpush.msra.mxu0 0.0
      %1399 = vmatpush.msra.mxu0 0.0
      %1400 = vmatpush.msra.mxu0 0.0
      %1401 = vmatpush.msra.mxu0 0.0
      %1402 = vmatpush.msra.mxu0 0.0
      %1403 = vmatpush.msra.mxu0 0.0
      %1404 = vmatpush.msra.mxu0 0.0
      %1405 = vmatpush.msra.mxu0 0.0
      %1406 = vmatpush.msra.mxu0 0.0
      %1407 = vmatpush.msra.mxu0 0.0
      %1408 = vmatpush.msra.mxu0 0.0
      %1409 = vmatpush.msra.mxu0 0.0
      %1410 = vmatpush.msra.mxu0 0.0
      %1411 = vmatpush.msra.mxu0 0.0
      %1412 = vmatpush.msra.mxu0 0.0
      %1413 = vmatpush.msra.mxu0 %v1101
      %1414 = vmatmul.f32.gmra.mxu0 %v1140
      %v1415 = vpop.f32.mrf.mxu0
      %v1416 = vadd.f32 %v1131, %v1415
      %1417 = vmatmul.f32.gmra.mxu0 %v1143
      %v1418 = vpop.f32.mrf.mxu0
      %v1419 = vadd.f32 %v1136, %v1418
      %1420 = vdwg.mxu0
      %1421 = vmatpush.msra.mxu0 0.0
      %1422 = vmatpush.msra.mxu0 0.0
      %1423 = vmatpush.msra.mxu0 0.0
      %1424 = vmatpush.msra.mxu0 0.0
      %1425 = vmatpush.msra.mxu0 0.0
      %1426 = vmatpush.msra.mxu0 0.0
      %1427 = vmatpush.msra.mxu0 0.0
      %1428 = vmatpush.msra.mxu0 0.0
      %1429 = vmatpush.msra.mxu0 0.0
      %1430 = vmatpush.msra.mxu0 0.0
      %1431 = vmatpush.msra.mxu0 0.0
      %1432 = vmatpush.msra.mxu0 0.0
      %1433 = vmatpush.msra.mxu0 0.0
      %1434 = vmatpush.msra.mxu0 0.0
      %1435 = vmatpush.msra.mxu0 0.0
      %1436 = vmatpush.msra.mxu0 %v1102
      %1437 = vmatmul.f32.gmra.mxu0 %v1140
      %v1438 = vpop.f32.mrf.mxu0
      %v1439 = vadd.f32 %v1131, %v1438
      %1440 = vmatmul.f32.gmra.mxu0 %v1143
      %v1441 = vpop.f32.mrf.mxu0
      %v1442 = vadd.f32 %v1136, %v1441
      %1443 = vdwg.mxu0
      %1444 = vmatpush.msra.mxu0 0.0
      %1445 = vmatpush.msra.mxu0 0.0
      %1446 = vmatpush.msra.mxu0 0.0
      %1447 = vmatpush.msra.mxu0 0.0
      %1448 = vmatpush.msra.mxu0 0.0
      %1449 = vmatpush.msra.mxu0 0.0
      %1450 = vmatpush.msra.mxu0 0.0
      %1451 = vmatpush.msra.mxu0 0.0
      %1452 = vmatpush.msra.mxu0 0.0
      %1453 = vmatpush.msra.mxu0 0.0
      %1454 = vmatpush.msra.mxu0 0.0
      %1455 = vmatpush.msra.mxu0 0.0
      %1456 = vmatpush.msra.mxu0 0.0
      %1457 = vmatpush.msra.mxu0 0.0
      %1458 = vmatpush.msra.mxu0 0.0
      %1459 = vmatpush.msra.mxu0 %v1103
      %1460 = vmatmul.f32.gmra.mxu0 %v1140
      %v1461 = vpop.f32.mrf.mxu0
      %v1462 = vadd.f32 %v1131, %v1461
      %1463 = vmatmul.f32.gmra.mxu0 %v1143
      %v1464 = vpop.f32.mrf.mxu0
      %v1465 = vadd.f32 %v1136, %v1464
      %1466 = vdwg.mxu0
      %1467 = vmatpush.msra.mxu0 0.0
      %1468 = vmatpush.msra.mxu0 0.0
      %1469 = vmatpush.msra.mxu0 0.0
      %1470 = vmatpush.msra.mxu0 0.0
      %1471 = vmatpush.msra.mxu0 0.0
      %1472 = vmatpush.msra.mxu0 0.0
      %1473 = vmatpush.msra.mxu0 0.0
      %1474 = vmatpush.msra.mxu0 0.0
      %1475 = vmatpush.msra.mxu0 0.0
      %1476 = vmatpush.msra.mxu0 0.0
      %1477 = vmatpush.msra.mxu0 0.0
      %1478 = vmatpush.msra.mxu0 0.0
      %1479 = vmatpush.msra.mxu0 0.0
      %1480 = vmatpush.msra.mxu0 0.0
      %1481 = vmatpush.msra.mxu0 0.0
      %1482 = vmatpush.msra.mxu0 %v1104
      %1483 = vmatmul.f32.gmra.mxu0 %v1140
      %v1484 = vpop.f32.mrf.mxu0
      %v1485 = vadd.f32 %v1131, %v1484
      %1486 = vmatmul.f32.gmra.mxu0 %v1143
      %v1487 = vpop.f32.mrf.mxu0
      %v1488 = vadd.f32 %v1136, %v1487
      %1489 = vdwg.mxu0
      %1490 = vmatpush.msra.mxu0 0.0
      %1491 = vmatpush.msra.mxu0 0.0
      %1492 = vmatpush.msra.mxu0 0.0
      %1493 = vmatpush.msra.mxu0 0.0
      %1494 = vmatpush.msra.mxu0 0.0
      %1495 = vmatpush.msra.mxu0 0.0
      %1496 = vmatpush.msra.mxu0 0.0
      %1497 = vmatpush.msra.mxu0 0.0
      %1498 = vmatpush.msra.mxu0 0.0
      %1499 = vmatpush.msra.mxu0 0.0
      %1500 = vmatpush.msra.mxu0 0.0
      %1501 = vmatpush.msra.mxu0 0.0
      %1502 = vmatpush.msra.mxu0 0.0
      %1503 = vmatpush.msra.mxu0 0.0
      %1504 = vmatpush.msra.mxu0 0.0
      %1505 = vmatpush.msra.mxu0 %v1105
      %1506 = vmatmul.f32.gmra.mxu0 %v1140
      %v1507 = vpop.f32.mrf.mxu0
      %v1508 = vadd.f32 %v1131, %v1507
      %1509 = vmatmul.f32.gmra.mxu0 %v1143
      %v1510 = vpop.f32.mrf.mxu0
      %v1511 = vadd.f32 %v1136, %v1510
      %1512 = vdwg.mxu0
      %1513 = vmatpush.msra.mxu0 0.0
      %1514 = vmatpush.msra.mxu0 0.0
      %1515 = vmatpush.msra.mxu0 0.0
      %1516 = vmatpush.msra.mxu0 0.0
      %1517 = vmatpush.msra.mxu0 0.0
      %1518 = vmatpush.msra.mxu0 0.0
      %1519 = vmatpush.msra.mxu0 0.0
      %1520 = vmatpush.msra.mxu0 0.0
      %1521 = vmatpush.msra.mxu0 0.0
      %1522 = vmatpush.msra.mxu0 0.0
      %1523 = vmatpush.msra.mxu0 0.0
      %1524 = vmatpush.msra.mxu0 0.0
      %1525 = vmatpush.msra.mxu0 0.0
      %1526 = vmatpush.msra.mxu0 0.0
      %1527 = vmatpush.msra.mxu0 0.0
      %1528 = vmatpush.msra.mxu0 %v1106
      %1529 = vmatmul.f32.gmra.mxu0 %v1140
      %v1530 = vpop.f32.mrf.mxu0
      %v1531 = vadd.f32 %v1131, %v1530
      %1532 = vmatmul.f32.gmra.mxu0 %v1143
      %v1533 = vpop.f32.mrf.mxu0
      %v1534 = vadd.f32 %v1136, %v1533
      %1535 = vdwg.mxu0
      %1536 = vmatpush.msra.mxu0 0.0
      %1537 = vmatpush.msra.mxu0 0.0
      %1538 = vmatpush.msra.mxu0 0.0
      %1539 = vmatpush.msra.mxu0 0.0
      %1540 = vmatpush.msra.mxu0 0.0
      %1541 = vmatpush.msra.mxu0 0.0
      %1542 = vmatpush.msra.mxu0 0.0
      %1543 = vmatpush.msra.mxu0 0.0
      %1544 = vmatpush.msra.mxu0 0.0
      %1545 = vmatpush.msra.mxu0 0.0
      %1546 = vmatpush.msra.mxu0 0.0
      %1547 = vmatpush.msra.mxu0 0.0
      %1548 = vmatpush.msra.mxu0 0.0
      %1549 = vmatpush.msra.mxu0 0.0
      %1550 = vmatpush.msra.mxu0 0.0
      %1551 = vmatpush.msra.mxu0 %v1107
      %1552 = vmatmul.f32.gmra.mxu0 %v1140
      %v1553 = vpop.f32.mrf.mxu0
      %v1554 = vadd.f32 %v1131, %v1553
      %1555 = vmatmul.f32.gmra.mxu0 %v1143
      %v1556 = vpop.f32.mrf.mxu0
      %v1557 = vadd.f32 %v1136, %v1556
      %1558 = vdwg.mxu0
      %1559 = vmatpush.msra.mxu0 0.0
      %1560 = vmatpush.msra.mxu0 0.0
      %1561 = vmatpush.msra.mxu0 0.0
      %1562 = vmatpush.msra.mxu0 0.0
      %1563 = vmatpush.msra.mxu0 0.0
      %1564 = vmatpush.msra.mxu0 0.0
      %1565 = vmatpush.msra.mxu0 0.0
      %1566 = vmatpush.msra.mxu0 0.0
      %1567 = vmatpush.msra.mxu0 0.0
      %1568 = vmatpush.msra.mxu0 0.0
      %1569 = vmatpush.msra.mxu0 0.0
      %1570 = vmatpush.msra.mxu0 0.0
      %1571 = vmatpush.msra.mxu0 0.0
      %1572 = vmatpush.msra.mxu0 0.0
      %1573 = vmatpush.msra.mxu0 0.0
      %1574 = vmatpush.msra.mxu0 %v1108
      %1575 = vmatmul.f32.gmra.mxu0 %v1140
      %v1576 = vpop.f32.mrf.mxu0
      %v1577 = vadd.f32 %v1131, %v1576
      %1578 = vmatmul.f32.gmra.mxu0 %v1143
      %v1579 = vpop.f32.mrf.mxu0
      %v1580 = vadd.f32 %v1136, %v1579
      %1581 = vdwg.mxu0
      %1582 = vmatpush.msra.mxu0 0.0
      %1583 = vmatpush.msra.mxu0 0.0
      %1584 = vmatpush.msra.mxu0 0.0
      %1585 = vmatpush.msra.mxu0 0.0
      %1586 = vmatpush.msra.mxu0 0.0
      %1587 = vmatpush.msra.mxu0 0.0
      %1588 = vmatpush.msra.mxu0 0.0
      %1589 = vmatpush.msra.mxu0 0.0
      %1590 = vmatpush.msra.mxu0 0.0
      %1591 = vmatpush.msra.mxu0 0.0
      %1592 = vmatpush.msra.mxu0 0.0
      %1593 = vmatpush.msra.mxu0 0.0
      %1594 = vmatpush.msra.mxu0 0.0
      %1595 = vmatpush.msra.mxu0 0.0
      %1596 = vmatpush.msra.mxu0 0.0
      %1597 = vmatpush.msra.mxu0 %v1109
      %1598 = vmatmul.f32.gmra.mxu0 %v1140
      %v1599 = vpop.f32.mrf.mxu0
      %v1600 = vadd.f32 %v1131, %v1599
      %1601 = vmatmul.f32.gmra.mxu0 %v1143
      %v1602 = vpop.f32.mrf.mxu0
      %v1603 = vadd.f32 %v1136, %v1602
      %1604 = vdwg.mxu0
      %1605 = vmatpush.msra.mxu0 0.0
      %1606 = vmatpush.msra.mxu0 0.0
      %1607 = vmatpush.msra.mxu0 0.0
      %1608 = vmatpush.msra.mxu0 0.0
      %1609 = vmatpush.msra.mxu0 0.0
      %1610 = vmatpush.msra.mxu0 0.0
      %1611 = vmatpush.msra.mxu0 0.0
      %1612 = vmatpush.msra.mxu0 0.0
      %1613 = vmatpush.msra.mxu0 0.0
      %1614 = vmatpush.msra.mxu0 0.0
      %1615 = vmatpush.msra.mxu0 0.0
      %1616 = vmatpush.msra.mxu0 0.0
      %1617 = vmatpush.msra.mxu0 0.0
      %1618 = vmatpush.msra.mxu0 0.0
      %1619 = vmatpush.msra.mxu0 0.0
      %1620 = vmatpush.msra.mxu0 %v1110
      %1621 = vmatmul.f32.gmra.mxu0 %v1140
      %v1622 = vpop.f32.mrf.mxu0
      %v1623 = vadd.f32 %v1131, %v1622
      %1624 = vmatmul.f32.gmra.mxu0 %v1143
      %v1625 = vpop.f32.mrf.mxu0
      %v1626 = vadd.f32 %v1136, %v1625
      %1627 = vdwg.mxu0
      %1628 = vmatpush.msra.mxu0 0.0
      %1629 = vmatpush.msra.mxu0 0.0
      %1630 = vmatpush.msra.mxu0 0.0
      %1631 = vmatpush.msra.mxu0 0.0
      %1632 = vmatpush.msra.mxu0 0.0
      %1633 = vmatpush.msra.mxu0 0.0
      %1634 = vmatpush.msra.mxu0 0.0
      %1635 = vmatpush.msra.mxu0 0.0
      %1636 = vmatpush.msra.mxu0 0.0
      %1637 = vmatpush.msra.mxu0 0.0
      %1638 = vmatpush.msra.mxu0 0.0
      %1639 = vmatpush.msra.mxu0 0.0
      %1640 = vmatpush.msra.mxu0 0.0
      %1641 = vmatpush.msra.mxu0 0.0
      %1642 = vmatpush.msra.mxu0 0.0
      %1643 = vmatpush.msra.mxu0 %v1111
      %1644 = vmatmul.f32.gmra.mxu0 %v1140
      %v1645 = vpop.f32.mrf.mxu0
      %v1646 = vadd.f32 %v1131, %v1645
      %1647 = vmatmul.f32.gmra.mxu0 %v1143
      %v1648 = vpop.f32.mrf.mxu0
      %v1649 = vadd.f32 %v1136, %v1648
      %1650 = vdwg.mxu0
      %1651 = vmatpush.msra.mxu0 0.0
      %1652 = vmatpush.msra.mxu0 0.0
      %1653 = vmatpush.msra.mxu0 0.0
      %1654 = vmatpush.msra.mxu0 0.0
      %1655 = vmatpush.msra.mxu0 0.0
      %1656 = vmatpush.msra.mxu0 0.0
      %1657 = vmatpush.msra.mxu0 0.0
      %1658 = vmatpush.msra.mxu0 0.0
      %1659 = vmatpush.msra.mxu0 0.0
      %1660 = vmatpush.msra.mxu0 0.0
      %1661 = vmatpush.msra.mxu0 0.0
      %1662 = vmatpush.msra.mxu0 0.0
      %1663 = vmatpush.msra.mxu0 0.0
      %1664 = vmatpush.msra.mxu0 0.0
      %1665 = vmatpush.msra.mxu0 0.0
      %1666 = vmatpush.msra.mxu0 %v1112
      %1667 = vmatmul.f32.gmra.mxu0 %v1140
      %v1668 = vpop.f32.mrf.mxu0
      %v1669 = vadd.f32 %v1131, %v1668
      %1670 = vmatmul.f32.gmra.mxu0 %v1143
      %v1671 = vpop.f32.mrf.mxu0
      %v1672 = vadd.f32 %v1136, %v1671
      %1673 = vdwg.mxu0
      %1674 = vmatpush.msra.mxu0 0.0
      %1675 = vmatpush.msra.mxu0 0.0
      %1676 = vmatpush.msra.mxu0 0.0
      %1677 = vmatpush.msra.mxu0 0.0
      %1678 = vmatpush.msra.mxu0 0.0
      %1679 = vmatpush.msra.mxu0 0.0
      %1680 = vmatpush.msra.mxu0 0.0
      %1681 = vmatpush.msra.mxu0 0.0
      %1682 = vmatpush.msra.mxu0 0.0
      %1683 = vmatpush.msra.mxu0 0.0
      %1684 = vmatpush.msra.mxu0 0.0
      %1685 = vmatpush.msra.mxu0 0.0
      %1686 = vmatpush.msra.mxu0 0.0
      %1687 = vmatpush.msra.mxu0 0.0
      %1688 = vmatpush.msra.mxu0 0.0
      %1689 = vmatpush.msra.mxu0 %v1113
      %1690 = vmatmul.f32.gmra.mxu0 %v1140
      %v1691 = vpop.f32.mrf.mxu0
      %v1692 = vadd.f32 %v1131, %v1691
      %1693 = vmatmul.f32.gmra.mxu0 %v1143
      %v1694 = vpop.f32.mrf.mxu0
      %v1695 = vadd.f32 %v1136, %v1694
      %1696 = vdwg.mxu0
      %1697 = vmatpush.msra.mxu0 0.0
      %1698 = vmatpush.msra.mxu0 0.0
      %1699 = vmatpush.msra.mxu0 0.0
      %1700 = vmatpush.msra.mxu0 0.0
      %1701 = vmatpush.msra.mxu0 0.0
      %1702 = vmatpush.msra.mxu0 0.0
      %1703 = vmatpush.msra.mxu0 0.0
      %1704 = vmatpush.msra.mxu0 0.0
      %1705 = vmatpush.msra.mxu0 0.0
      %1706 = vmatpush.msra.mxu0 0.0
      %1707 = vmatpush.msra.mxu0 0.0
      %1708 = vmatpush.msra.mxu0 0.0
      %1709 = vmatpush.msra.mxu0 0.0
      %1710 = vmatpush.msra.mxu0 0.0
      %1711 = vmatpush.msra.mxu0 0.0
      %1712 = vmatpush.msra.mxu0 %v1114
      %1713 = vmatmul.f32.gmra.mxu0 %v1140
      %v1714 = vpop.f32.mrf.mxu0
      %v1715 = vadd.f32 %v1131, %v1714
      %1716 = vmatmul.f32.gmra.mxu0 %v1143
      %v1717 = vpop.f32.mrf.mxu0
      %v1718 = vadd.f32 %v1136, %v1717
      %1719 = vdwg.mxu0
      %1720 = vmatpush.msra.mxu0 0.0
      %1721 = vmatpush.msra.mxu0 0.0
      %1722 = vmatpush.msra.mxu0 0.0
      %1723 = vmatpush.msra.mxu0 0.0
      %1724 = vmatpush.msra.mxu0 0.0
      %1725 = vmatpush.msra.mxu0 0.0
      %1726 = vmatpush.msra.mxu0 0.0
      %1727 = vmatpush.msra.mxu0 0.0
      %1728 = vmatpush.msra.mxu0 0.0
      %1729 = vmatpush.msra.mxu0 0.0
      %1730 = vmatpush.msra.mxu0 0.0
      %1731 = vmatpush.msra.mxu0 0.0
      %1732 = vmatpush.msra.mxu0 0.0
      %1733 = vmatpush.msra.mxu0 0.0
      %1734 = vmatpush.msra.mxu0 0.0
      %1735 = vmatpush.msra.mxu0 %v1115
      %1736 = vmatmul.f32.gmra.mxu0 %v1140
      %v1737 = vpop.f32.mrf.mxu0
      %v1738 = vadd.f32 %v1131, %v1737
      %1739 = vmatmul.f32.gmra.mxu0 %v1143
      %v1740 = vpop.f32.mrf.mxu0
      %v1741 = vadd.f32 %v1136, %v1740
      %1742 = vdwg.mxu0
      %1743 = vmatpush.msra.mxu0 0.0
      %1744 = vmatpush.msra.mxu0 0.0
      %1745 = vmatpush.msra.mxu0 0.0
      %1746 = vmatpush.msra.mxu0 0.0
      %1747 = vmatpush.msra.mxu0 0.0
      %1748 = vmatpush.msra.mxu0 0.0
      %1749 = vmatpush.msra.mxu0 0.0
      %1750 = vmatpush.msra.mxu0 0.0
      %1751 = vmatpush.msra.mxu0 0.0
      %1752 = vmatpush.msra.mxu0 0.0
      %1753 = vmatpush.msra.mxu0 0.0
      %1754 = vmatpush.msra.mxu0 0.0
      %1755 = vmatpush.msra.mxu0 0.0
      %1756 = vmatpush.msra.mxu0 0.0
      %1757 = vmatpush.msra.mxu0 0.0
      %1758 = vmatpush.msra.mxu0 %v1116
      %1759 = vmatmul.f32.gmra.mxu0 %v1140
      %v1760 = vpop.f32.mrf.mxu0
      %v1761 = vadd.f32 %v1131, %v1760
      %1762 = vmatmul.f32.gmra.mxu0 %v1143
      %v1763 = vpop.f32.mrf.mxu0
      %v1764 = vadd.f32 %v1136, %v1763
      %1765 = vdwg.mxu0
      %1766 = vmatpush.msra.mxu0 0.0
      %1767 = vmatpush.msra.mxu0 0.0
      %1768 = vmatpush.msra.mxu0 0.0
      %1769 = vmatpush.msra.mxu0 0.0
      %1770 = vmatpush.msra.mxu0 0.0
      %1771 = vmatpush.msra.mxu0 0.0
      %1772 = vmatpush.msra.mxu0 0.0
      %1773 = vmatpush.msra.mxu0 0.0
      %1774 = vmatpush.msra.mxu0 0.0
      %1775 = vmatpush.msra.mxu0 0.0
      %1776 = vmatpush.msra.mxu0 0.0
      %1777 = vmatpush.msra.mxu0 0.0
      %1778 = vmatpush.msra.mxu0 0.0
      %1779 = vmatpush.msra.mxu0 0.0
      %1780 = vmatpush.msra.mxu0 0.0
      %1781 = vmatpush.msra.mxu0 %v1117
      %1782 = vmatmul.f32.gmra.mxu0 %v1140
      %v1783 = vpop.f32.mrf.mxu0
      %v1784 = vadd.f32 %v1131, %v1783
      %1785 = vmatmul.f32.gmra.mxu0 %v1143
      %v1786 = vpop.f32.mrf.mxu0
      %v1787 = vadd.f32 %v1136, %v1786
      %1788 = vdwg.mxu0
      %1789 = vmatpush.msra.mxu0 0.0
      %1790 = vmatpush.msra.mxu0 0.0
      %1791 = vmatpush.msra.mxu0 0.0
      %1792 = vmatpush.msra.mxu0 0.0
      %1793 = vmatpush.msra.mxu0 0.0
      %1794 = vmatpush.msra.mxu0 0.0
      %1795 = vmatpush.msra.mxu0 0.0
      %1796 = vmatpush.msra.mxu0 0.0
      %1797 = vmatpush.msra.mxu0 0.0
      %1798 = vmatpush.msra.mxu0 0.0
      %1799 = vmatpush.msra.mxu0 0.0
      %1800 = vmatpush.msra.mxu0 0.0
      %1801 = vmatpush.msra.mxu0 0.0
      %1802 = vmatpush.msra.mxu0 0.0
      %1803 = vmatpush.msra.mxu0 0.0
      %1804 = vmatpush.msra.mxu0 %v1118
      %1805 = vmatmul.f32.gmra.mxu0 %v1140
      %v1806 = vpop.f32.mrf.mxu0
      %v1807 = vadd.f32 %v1131, %v1806
      %1808 = vmatmul.f32.gmra.mxu0 %v1143
      %v1809 = vpop.f32.mrf.mxu0
      %v1810 = vadd.f32 %v1136, %v1809
      %1811 = vdwg.mxu0
      %1812 = vmatpush.msra.mxu0 0.0
      %1813 = vmatpush.msra.mxu0 0.0
      %1814 = vmatpush.msra.mxu0 0.0
      %1815 = vmatpush.msra.mxu0 0.0
      %1816 = vmatpush.msra.mxu0 0.0
      %1817 = vmatpush.msra.mxu0 0.0
      %1818 = vmatpush.msra.mxu0 0.0
      %1819 = vmatpush.msra.mxu0 0.0
      %1820 = vmatpush.msra.mxu0 0.0
      %1821 = vmatpush.msra.mxu0 0.0
      %1822 = vmatpush.msra.mxu0 0.0
      %1823 = vmatpush.msra.mxu0 0.0
      %1824 = vmatpush.msra.mxu0 0.0
      %1825 = vmatpush.msra.mxu0 0.0
      %1826 = vmatpush.msra.mxu0 0.0
      %1827 = vmatpush.msra.mxu0 %v1119
      %1828 = vmatmul.f32.gmra.mxu0 %v1140
      %v1829 = vpop.f32.mrf.mxu0
      %v1830 = vadd.f32 %v1131, %v1829
      %1831 = vmatmul.f32.gmra.mxu0 %v1143
      %v1832 = vpop.f32.mrf.mxu0
      %v1833 = vadd.f32 %v1136, %v1832
      %1834 = vdwg.mxu0
      %1835 = vmatpush.msra.mxu0 0.0
      %1836 = vmatpush.msra.mxu0 0.0
      %1837 = vmatpush.msra.mxu0 0.0
      %1838 = vmatpush.msra.mxu0 0.0
      %1839 = vmatpush.msra.mxu0 0.0
      %1840 = vmatpush.msra.mxu0 0.0
      %1841 = vmatpush.msra.mxu0 0.0
      %1842 = vmatpush.msra.mxu0 0.0
      %1843 = vmatpush.msra.mxu0 0.0
      %1844 = vmatpush.msra.mxu0 0.0
      %1845 = vmatpush.msra.mxu0 0.0
      %1846 = vmatpush.msra.mxu0 0.0
      %1847 = vmatpush.msra.mxu0 0.0
      %1848 = vmatpush.msra.mxu0 0.0
      %1849 = vmatpush.msra.mxu0 0.0
      %1850 = vmatpush.msra.mxu0 %v1120
      %1851 = vmatmul.f32.gmra.mxu0 %v1140
      %v1852 = vpop.f32.mrf.mxu0
      %v1853 = vadd.f32 %v1131, %v1852
      %1854 = vmatmul.f32.gmra.mxu0 %v1143
      %v1855 = vpop.f32.mrf.mxu0
      %v1856 = vadd.f32 %v1136, %v1855
      %1857 = vdwg.mxu0
      %1858 = vmatpush.msra.mxu0 0.0
      %1859 = vmatpush.msra.mxu0 0.0
      %1860 = vmatpush.msra.mxu0 0.0
      %1861 = vmatpush.msra.mxu0 0.0
      %1862 = vmatpush.msra.mxu0 0.0
      %1863 = vmatpush.msra.mxu0 0.0
      %1864 = vmatpush.msra.mxu0 0.0
      %1865 = vmatpush.msra.mxu0 0.0
      %1866 = vmatpush.msra.mxu0 0.0
      %1867 = vmatpush.msra.mxu0 0.0
      %1868 = vmatpush.msra.mxu0 0.0
      %1869 = vmatpush.msra.mxu0 0.0
      %1870 = vmatpush.msra.mxu0 0.0
      %1871 = vmatpush.msra.mxu0 0.0
      %1872 = vmatpush.msra.mxu0 0.0
      %1873 = vmatpush.msra.mxu0 %v1121
      %1874 = vmatmul.f32.gmra.mxu0 %v1140
      %v1875 = vpop.f32.mrf.mxu0
      %v1876 = vadd.f32 %v1131, %v1875
      %1877 = vmatmul.f32.gmra.mxu0 %v1143
      %v1878 = vpop.f32.mrf.mxu0
      %v1879 = vadd.f32 %v1136, %v1878
      %1880 = vdwg.mxu0
      %v1881 = vmax.f32 %v1163, 0.0
      %v1882 = vmax.f32 %v1186, 0.0
      %v1883 = vmax.f32 %v1209, 0.0
      %v1884 = vmax.f32 %v1232, 0.0
      %v1885 = vmax.f32 %v1255, 0.0
      %v1886 = vmax.f32 %v1278, 0.0
      %v1887 = vmax.f32 %v1301, 0.0
      %v1888 = vmax.f32 %v1324, 0.0
      %v1889 = vmax.f32 %v1347, 0.0
      %v1890 = vmax.f32 %v1370, 0.0
      %v1891 = vmax.f32 %v1393, 0.0
      %v1892 = vmax.f32 %v1416, 0.0
      %v1893 = vmax.f32 %v1439, 0.0
      %v1894 = vmax.f32 %v1462, 0.0
      %v1895 = vmax.f32 %v1485, 0.0
      %v1896 = vmax.f32 %v1508, 0.0
      %v1897 = vmax.f32 %v1531, 0.0
      %v1898 = vmax.f32 %v1554, 0.0
      %v1899 = vmax.f32 %v1577, 0.0
      %v1900 = vmax.f32 %v1600, 0.0
      %v1901 = vmax.f32 %v1623, 0.0
      %v1902 = vmax.f32 %v1646, 0.0
      %v1903 = vmax.f32 %v1669, 0.0
      %v1904 = vmax.f32 %v1692, 0.0
      %v1905 = vmax.f32 %v1715, 0.0
      %v1906 = vmax.f32 %v1738, 0.0
      %v1907 = vmax.f32 %v1761, 0.0
      %v1908 = vmax.f32 %v1784, 0.0
      %v1909 = vmax.f32 %v1807, 0.0
      %v1910 = vmax.f32 %v1830, 0.0
      %v1911 = vmax.f32 %v1853, 0.0
      %v1912 = vmax.f32 %v1876, 0.0
      %v1913 = vmax.f32 %v1166, 0.0
      %v1914 = vmax.f32 %v1189, 0.0
      %v1915 = vmax.f32 %v1212, 0.0
      %v1916 = vmax.f32 %v1235, 0.0
      %v1917 = vmax.f32 %v1258, 0.0
      %v1918 = vmax.f32 %v1281, 0.0
      %v1919 = vmax.f32 %v1304, 0.0
      %v1920 = vmax.f32 %v1327, 0.0
      %v1921 = vmax.f32 %v1350, 0.0
      %v1922 = vmax.f32 %v1373, 0.0
      %v1923 = vmax.f32 %v1396, 0.0
      %v1924 = vmax.f32 %v1419, 0.0
      %v1925 = vmax.f32 %v1442, 0.0
      %v1926 = vmax.f32 %v1465, 0.0
      %v1927 = vmax.f32 %v1488, 0.0
      %v1928 = vmax.f32 %v1511, 0.0
      %v1929 = vmax.f32 %v1534, 0.0
      %v1930 = vmax.f32 %v1557, 0.0
      %v1931 = vmax.f32 %v1580, 0.0
      %v1932 = vmax.f32 %v1603, 0.0
      %v1933 = vmax.f32 %v1626, 0.0
      %v1934 = vmax.f32 %v1649, 0.0
      %v1935 = vmax.f32 %v1672, 0.0
      %v1936 = vmax.f32 %v1695, 0.0
      %v1937 = vmax.f32 %v1718, 0.0
      %v1938 = vmax.f32 %v1741, 0.0
      %v1939 = vmax.f32 %v1764, 0.0
      %v1940 = vmax.f32 %v1787, 0.0
      %v1941 = vmax.f32 %v1810, 0.0
      %v1942 = vmax.f32 %v1833, 0.0
      %v1943 = vmax.f32 %v1856, 0.0
      %v1944 = vmax.f32 %v1879, 0.0
      %v1945 = vld [vmem:[#allocation3] sm:$0xff]
      %v1946 = vld [vmem:[#allocation3 + $0x8] sm:$0xff]
      %v1947 = vadd.f32 %v1881, %v1882
      %v1948 = vadd.f32 %v1913, %v1914
      %v1949 = vadd.f32 %v1947, %v1883
      %v1950 = vadd.f32 %v1948, %v1915
      %v1951 = vadd.f32 %v1949, %v1884
      %v1952 = vadd.f32 %v1950, %v1916
      %v1953 = vadd.f32 %v1951, %v1885
      %v1954 = vadd.f32 %v1952, %v1917
      %v1955 = vadd.f32 %v1953, %v1886
      %v1956 = vadd.f32 %v1954, %v1918
      %v1957 = vadd.f32 %v1955, %v1887
      %v1958 = vadd.f32 %v1956, %v1919
      %v1959 = vadd.f32 %v1957, %v1888
      %v1960 = vadd.f32 %v1958, %v1920
      %v1961 = vadd.f32 %v1959, %v1889
      %v1962 = vadd.f32 %v1960, %v1921
      %v1963 = vadd.f32 %v1961, %v1890
      %v1964 = vadd.f32 %v1962, %v1922
      %v1965 = vadd.f32 %v1963, %v1891
      %v1966 = vadd.f32 %v1964, %v1923
      %v1967 = vadd.f32 %v1965, %v1892
      %v1968 = vadd.f32 %v1966, %v1924
      %v1969 = vadd.f32 %v1967, %v1893
      %v1970 = vadd.f32 %v1968, %v1925
      %v1971 = vadd.f32 %v1969, %v1894
      %v1972 = vadd.f32 %v1970, %v1926
      %v1973 = vadd.f32 %v1971, %v1895
      %v1974 = vadd.f32 %v1972, %v1927
      %v1975 = vadd.f32 %v1973, %v1896
      %v1976 = vadd.f32 %v1974, %v1928
      %v1977 = vadd.f32 %v1975, %v1897
      %v1978 = vadd.f32 %v1976, %v1929
      %v1979 = vadd.f32 %v1977, %v1898
      %v1980 = vadd.f32 %v1978, %v1930
      %v1981 = vadd.f32 %v1979, %v1899
      %v1982 = vadd.f32 %v1980, %v1931
      %v1983 = vadd.f32 %v1981, %v1900
      %v1984 = vadd.f32 %v1982, %v1932
      %v1985 = vadd.f32 %v1983, %v1901
      %v1986 = vadd.f32 %v1984, %v1933
      %v1987 = vadd.f32 %v1985, %v1902
      %v1988 = vadd.f32 %v1986, %v1934
      %v1989 = vadd.f32 %v1987, %v1903
      %v1990 = vadd.f32 %v1988, %v1935
      %v1991 = vadd.f32 %v1989, %v1904
      %v1992 = vadd.f32 %v1990, %v1936
      %v1993 = vadd.f32 %v1991, %v1905
      %v1994 = vadd.f32 %v1992, %v1937
      %v1995 = vadd.f32 %v1993, %v1906
      %v1996 = vadd.f32 %v1994, %v1938
      %v1997 = vadd.f32 %v1995, %v1907
      %v1998 = vadd.f32 %v1996, %v1939
      %v1999 = vadd.f32 %v1997, %v1908
      %v2000 = vadd.f32 %v1998, %v1940
      %v2001 = vadd.f32 %v1999, %v1909
      %v2002 = vadd.f32 %v2000, %v1941
      %v2003 = vadd.f32 %v2001, %v1910
      %v2004 = vadd.f32 %v2002, %v1942
      %v2005 = vadd.f32 %v2003, %v1911
      %v2006 = vadd.f32 %v2004, %v1943
      %v2007 = vadd.f32 %v2005, %v1912
      %v2008 = vadd.f32 %v2006, %v1944
      %v2009 = vadd.f32 %v1945, %v2007
      %v2010 = vadd.f32 %v1946, %v2008
      %2011 = vst [vmem:[#allocation3] sm:$0xff] %v2009
      %2012 = vst [vmem:[#allocation3 + $0x8] sm:$0xff] %v2010
      %s2013 = scalar_lea.vmem %s2, 256
      %v2014 = vld [vmem:[%s2013] sm:$0xff]
      %v2015 = vld [vmem:[%s2013 + $0x8] sm:$0xff]
      %s2016 = scalar_lea.vmem %s2, 320
      %v2017 = vld [vmem:[%s2016] sm:$0xff]
      %v2018 = vld [vmem:[%s2016 + $0x8] sm:$0xff]
      %2020 = vset.pattern.permute.xlu0 0
      %2021 = vperm.xlu0 %2020, %v2017
      %v2022 = vpop.permute.xlu0 %2021
      %2025 = vset.pattern.permute.xlu0 0
      %2026 = vperm.xlu0 %2025, %v2018
      %v2027 = vpop.permute.xlu0 %2026
      %v2030 = vsel %vm1138, %v2014, 0
      %v2033 = vsel %vm1138, %v2015, 0
      %2035 = vmatpush.msra.mxu0 0.0
      %2036 = vmatpush.msra.mxu0 0.0
      %2037 = vmatpush.msra.mxu0 0.0
      %2038 = vmatpush.msra.mxu0 0.0
      %2039 = vmatpush.msra.mxu0 0.0
      %2040 = vmatpush.msra.mxu0 0.0
      %2041 = vmatpush.msra.mxu0 0.0
      %2042 = vmatpush.msra.mxu0 0.0
      %2043 = vmatpush.msra.mxu0 0.0
      %2044 = vmatpush.msra.mxu0 0.0
      %2045 = vmatpush.msra.mxu0 0.0
      %2046 = vmatpush.msra.mxu0 0.0
      %2047 = vmatpush.msra.mxu0 0.0
      %2048 = vmatpush.msra.mxu0 0.0
      %2049 = vmatpush.msra.mxu0 0.0
      %2050 = vmatpush.msra.mxu0 %v1090
      %2051 = vmatmul.f32.gmra.mxu0 %v2030
      %v2052 = vpop.f32.mrf.mxu0
      %v2053 = vadd.f32 %v2022, %v2052
      %2054 = vmatmul.f32.gmra.mxu0 %v2033
      %v2055 = vpop.f32.mrf.mxu0
      %v2056 = vadd.f32 %v2027, %v2055
      %2057 = vdwg.mxu0
      %2058 = vmatpush.msra.mxu0 0.0
      %2059 = vmatpush.msra.mxu0 0.0
      %2060 = vmatpush.msra.mxu0 0.0
      %2061 = vmatpush.msra.mxu0 0.0
      %2062 = vmatpush.msra.mxu0 0.0
      %2063 = vmatpush.msra.mxu0 0.0
      %2064 = vmatpush.msra.mxu0 0.0
      %2065 = vmatpush.msra.mxu0 0.0
      %2066 = vmatpush.msra.mxu0 0.0
      %2067 = vmatpush.msra.mxu0 0.0
      %2068 = vmatpush.msra.mxu0 0.0
      %2069 = vmatpush.msra.mxu0 0.0
      %2070 = vmatpush.msra.mxu0 0.0
      %2071 = vmatpush.msra.mxu0 0.0
      %2072 = vmatpush.msra.mxu0 0.0
      %2073 = vmatpush.msra.mxu0 %v1091
      %2074 = vmatmul.f32.gmra.mxu0 %v2030
      %v2075 = vpop.f32.mrf.mxu0
      %v2076 = vadd.f32 %v2022, %v2075
      %2077 = vmatmul.f32.gmra.mxu0 %v2033
      %v2078 = vpop.f32.mrf.mxu0
      %v2079 = vadd.f32 %v2027, %v2078
      %2080 = vdwg.mxu0
      %2081 = vmatpush.msra.mxu0 0.0
      %2082 = vmatpush.msra.mxu0 0.0
      %2083 = vmatpush.msra.mxu0 0.0
      %2084 = vmatpush.msra.mxu0 0.0
      %2085 = vmatpush.msra.mxu0 0.0
      %2086 = vmatpush.msra.mxu0 0.0
      %2087 = vmatpush.msra.mxu0 0.0
      %2088 = vmatpush.msra.mxu0 0.0
      %2089 = vmatpush.msra.mxu0 0.0
      %2090 = vmatpush.msra.mxu0 0.0
      %2091 = vmatpush.msra.mxu0 0.0
      %2092 = vmatpush.msra.mxu0 0.0
      %2093 = vmatpush.msra.mxu0 0.0
      %2094 = vmatpush.msra.mxu0 0.0
      %2095 = vmatpush.msra.mxu0 0.0
      %2096 = vmatpush.msra.mxu0 %v1098
      %2097 = vmatmul.f32.gmra.mxu0 %v2030
      %v2098 = vpop.f32.mrf.mxu0
      %v2099 = vadd.f32 %v2022, %v2098
      %2100 = vmatmul.f32.gmra.mxu0 %v2033
      %v2101 = vpop.f32.mrf.mxu0
      %v2102 = vadd.f32 %v2027, %v2101
      %2103 = vdwg.mxu0
      %2104 = vmatpush.msra.mxu0 0.0
      %2105 = vmatpush.msra.mxu0 0.0
      %2106 = vmatpush.msra.mxu0 0.0
      %2107 = vmatpush.msra.mxu0 0.0
      %2108 = vmatpush.msra.mxu0 0.0
      %2109 = vmatpush.msra.mxu0 0.0
      %2110 = vmatpush.msra.mxu0 0.0
      %2111 = vmatpush.msra.mxu0 0.0
      %2112 = vmatpush.msra.mxu0 0.0
      %2113 = vmatpush.msra.mxu0 0.0
      %2114 = vmatpush.msra.mxu0 0.0
      %2115 = vmatpush.msra.mxu0 0.0
      %2116 = vmatpush.msra.mxu0 0.0
      %2117 = vmatpush.msra.mxu0 0.0
      %2118 = vmatpush.msra.mxu0 0.0
      %2119 = vmatpush.msra.mxu0 %v1099
      %2120 = vmatmul.f32.gmra.mxu0 %v2030
      %v2121 = vpop.f32.mrf.mxu0
      %v2122 = vadd.f32 %v2022, %v2121
      %2123 = vmatmul.f32.gmra.mxu0 %v2033
      %v2124 = vpop.f32.mrf.mxu0
      %v2125 = vadd.f32 %v2027, %v2124
      %2126 = vdwg.mxu0
      %2127 = vmatpush.msra.mxu0 0.0
      %2128 = vmatpush.msra.mxu0 0.0
      %2129 = vmatpush.msra.mxu0 0.0
      %2130 = vmatpush.msra.mxu0 0.0
      %2131 = vmatpush.msra.mxu0 0.0
      %2132 = vmatpush.msra.mxu0 0.0
      %2133 = vmatpush.msra.mxu0 0.0
      %2134 = vmatpush.msra.mxu0 0.0
      %2135 = vmatpush.msra.mxu0 0.0
      %2136 = vmatpush.msra.mxu0 0.0
      %2137 = vmatpush.msra.mxu0 0.0
      %2138 = vmatpush.msra.mxu0 0.0
      %2139 = vmatpush.msra.mxu0 0.0
      %2140 = vmatpush.msra.mxu0 0.0
      %2141 = vmatpush.msra.mxu0 0.0
      %2142 = vmatpush.msra.mxu0 %v1106
      %2143 = vmatmul.f32.gmra.mxu0 %v2030
      %v2144 = vpop.f32.mrf.mxu0
      %v2145 = vadd.f32 %v2022, %v2144
      %2146 = vmatmul.f32.gmra.mxu0 %v2033
      %v2147 = vpop.f32.mrf.mxu0
      %v2148 = vadd.f32 %v2027, %v2147
      %2149 = vdwg.mxu0
      %2150 = vmatpush.msra.mxu0 0.0
      %2151 = vmatpush.msra.mxu0 0.0
      %2152 = vmatpush.msra.mxu0 0.0
      %2153 = vmatpush.msra.mxu0 0.0
      %2154 = vmatpush.msra.mxu0 0.0
      %2155 = vmatpush.msra.mxu0 0.0
      %2156 = vmatpush.msra.mxu0 0.0
      %2157 = vmatpush.msra.mxu0 0.0
      %2158 = vmatpush.msra.mxu0 0.0
      %2159 = vmatpush.msra.mxu0 0.0
      %2160 = vmatpush.msra.mxu0 0.0
      %2161 = vmatpush.msra.mxu0 0.0
      %2162 = vmatpush.msra.mxu0 0.0
      %2163 = vmatpush.msra.mxu0 0.0
      %2164 = vmatpush.msra.mxu0 0.0
      %2165 = vmatpush.msra.mxu0 %v1107
      %2166 = vmatmul.f32.gmra.mxu0 %v2030
      %v2167 = vpop.f32.mrf.mxu0
      %v2168 = vadd.f32 %v2022, %v2167
      %2169 = vmatmul.f32.gmra.mxu0 %v2033
      %v2170 = vpop.f32.mrf.mxu0
      %v2171 = vadd.f32 %v2027, %v2170
      %2172 = vdwg.mxu0
      %2173 = vmatpush.msra.mxu0 0.0
      %2174 = vmatpush.msra.mxu0 0.0
      %2175 = vmatpush.msra.mxu0 0.0
      %2176 = vmatpush.msra.mxu0 0.0
      %2177 = vmatpush.msra.mxu0 0.0
      %2178 = vmatpush.msra.mxu0 0.0
      %2179 = vmatpush.msra.mxu0 0.0
      %2180 = vmatpush.msra.mxu0 0.0
      %2181 = vmatpush.msra.mxu0 0.0
      %2182 = vmatpush.msra.mxu0 0.0
      %2183 = vmatpush.msra.mxu0 0.0
      %2184 = vmatpush.msra.mxu0 0.0
      %2185 = vmatpush.msra.mxu0 0.0
      %2186 = vmatpush.msra.mxu0 0.0
      %2187 = vmatpush.msra.mxu0 0.0
      %2188 = vmatpush.msra.mxu0 %v1114
      %2189 = vmatmul.f32.gmra.mxu0 %v2030
      %v2190 = vpop.f32.mrf.mxu0
      %v2191 = vadd.f32 %v2022, %v2190
      %2192 = vmatmul.f32.gmra.mxu0 %v2033
      %v2193 = vpop.f32.mrf.mxu0
      %v2194 = vadd.f32 %v2027, %v2193
      %2195 = vdwg.mxu0
      %2196 = vmatpush.msra.mxu0 0.0
      %2197 = vmatpush.msra.mxu0 0.0
      %2198 = vmatpush.msra.mxu0 0.0
      %2199 = vmatpush.msra.mxu0 0.0
      %2200 = vmatpush.msra.mxu0 0.0
      %2201 = vmatpush.msra.mxu0 0.0
      %2202 = vmatpush.msra.mxu0 0.0
      %2203 = vmatpush.msra.mxu0 0.0
      %2204 = vmatpush.msra.mxu0 0.0
      %2205 = vmatpush.msra.mxu0 0.0
      %2206 = vmatpush.msra.mxu0 0.0
      %2207 = vmatpush.msra.mxu0 0.0
      %2208 = vmatpush.msra.mxu0 0.0
      %2209 = vmatpush.msra.mxu0 0.0
      %2210 = vmatpush.msra.mxu0 0.0
      %2211 = vmatpush.msra.mxu0 %v1115
      %2212 = vmatmul.f32.gmra.mxu0 %v2030
      %v2213 = vpop.f32.mrf.mxu0
      %v2214 = vadd.f32 %v2022, %v2213
      %2215 = vmatmul.f32.gmra.mxu0 %v2033
      %v2216 = vpop.f32.mrf.mxu0
      %v2217 = vadd.f32 %v2027, %v2216
      %2218 = vdwg.mxu0
      %v2219 = vmax.f32 %v2053, 0.0
      %v2220 = vmax.f32 %v2076, 0.0
      %v2221 = vmax.f32 %v2099, 0.0
      %v2222 = vmax.f32 %v2122, 0.0
      %v2223 = vmax.f32 %v2145, 0.0
      %v2224 = vmax.f32 %v2168, 0.0
      %v2225 = vmax.f32 %v2191, 0.0
      %v2226 = vmax.f32 %v2214, 0.0
      %v2227 = vmax.f32 %v2056, 0.0
      %v2228 = vmax.f32 %v2079, 0.0
      %v2229 = vmax.f32 %v2102, 0.0
      %v2230 = vmax.f32 %v2125, 0.0
      %v2231 = vmax.f32 %v2148, 0.0
      %v2232 = vmax.f32 %v2171, 0.0
      %v2233 = vmax.f32 %v2194, 0.0
      %v2234 = vmax.f32 %v2217, 0.0
      %v2235 = vld [vmem:[%s253] sm:$0x77]
      %v2236 = vld [vmem:[%s253 + $0x8] sm:$0x77]
      %v2237 = vld [vmem:[%s253 + $0x10] sm:$0x77]
      %v2238 = vld [vmem:[%s253 + $0x18] sm:$0x77]
      %v2239 = vld [vmem:[%s2] sm:$0xff]
      %v2240 = vld [vmem:[%s2 + $0x8] sm:$0xff]
      %v2241 = vld [vmem:[%s2 + $0x10] sm:$0xff]
      %v2242 = vld [vmem:[%s2 + $0x18] sm:$0xff]
      %s2243 = scalar_lea.vmem %s2, 64
      %v2244 = vld [vmem:[%s2243] sm:$0xff]
      %v2245 = vld [vmem:[%s2243 + $0x8] sm:$0xff]
      %v2246 = vld [vmem:[%s2243 + $0x10] sm:$0xff]
      %v2247 = vld [vmem:[%s2243 + $0x18] sm:$0xff]
      %2249 = vset.pattern.permute.xlu0 0
      %2250 = vperm.xlu0 %2249, %v2244
      %v2251 = vpop.permute.xlu0 %2250
      %2254 = vset.pattern.permute.xlu0 0
      %2255 = vperm.xlu0 %2254, %v2245
      %v2256 = vpop.permute.xlu0 %2255
      %2259 = vset.pattern.permute.xlu0 0
      %2260 = vperm.xlu0 %2259, %v2246
      %v2261 = vpop.permute.xlu0 %2260
      %2264 = vset.pattern.permute.xlu0 0
      %2265 = vperm.xlu0 %2264, %v2247
      %v2266 = vpop.permute.xlu0 %2265
      %2272 = vst [vmem:[#allocation1] ss:$2 sm:$0xff] %v2235
      %s2273 = scalar_lea.vmem [#allocation1], 16
      %2274 = vst [vmem:[%s2273] ss:$2 sm:$0xff] %v2236
      %s2275 = scalar_lea.vmem [#allocation1], 32
      %2276 = vst [vmem:[%s2275] ss:$2 sm:$0xff] %v2237
      %s2277 = scalar_lea.vmem [#allocation1], 48
      %2278 = vst [vmem:[%s2277] ss:$2 sm:$0xff] %v2238
      %v2279 = vld.sshfl [vmem:[#allocation1] sm:$0xff pattern:$0x75316420]
      %v2280 = vld.sshfl [vmem:[#allocation1 + $0x8] sm:$0xff pattern:$0x75316420]
      %v2281 = vld.sshfl [vmem:[#allocation1 + $0x10] sm:$0xff pattern:$0x75316420]
      %v2282 = vld.sshfl [vmem:[#allocation1 + $0x18] sm:$0xff pattern:$0x75316420]
      %v2283 = vld.sshfl [vmem:[#allocation1 + $0x20] sm:$0xff pattern:$0x75316420]
      %v2284 = vld.sshfl [vmem:[#allocation1 + $0x28] sm:$0xff pattern:$0x75316420]
      %v2285 = vld.sshfl [vmem:[#allocation1 + $0x30] sm:$0xff pattern:$0x75316420]
      %v2286 = vld.sshfl [vmem:[#allocation1 + $0x38] sm:$0xff pattern:$0x75316420]
      %v2288 = vsel %vm381, %v2239, 0
      %v2291 = vsel %vm381, %v2240, 0
      %v2294 = vsel %vm381, %v2241, 0
      %v2297 = vsel %vm381, %v2242, 0
      %v2299 = vsel %vm385, %v2279, 0
      %v2301 = vsel %vm385, %v2280, 0
      %v2303 = vsel %vm385, %v2281, 0
      %v2305 = vsel %vm385, %v2282, 0
      %v2307 = vsel %vm385, %v2283, 0
      %v2309 = vsel %vm385, %v2284, 0
      %v2311 = vsel %vm385, %v2285, 0
      %v2313 = vsel %vm385, %v2286, 0
      %2315 = vmatpush.msra.mxu0 0.0
      %2316 = vmatpush.msra.mxu0 0.0
      %2317 = vmatpush.msra.mxu0 0.0
      %2318 = vmatpush.msra.mxu0 0.0
      %2319 = vmatpush.msra.mxu0 0.0
      %2320 = vmatpush.msra.mxu0 0.0
      %2321 = vmatpush.msra.mxu0 0.0
      %2322 = vmatpush.msra.mxu0 0.0
      %2323 = vmatpush.msra.mxu0 0.0
      %2324 = vmatpush.msra.mxu0 0.0
      %2325 = vmatpush.msra.mxu0 0.0
      %2326 = vmatpush.msra.mxu0 0.0
      %2327 = vmatpush.msra.mxu0 0.0
      %2328 = vmatpush.msra.mxu0 0.0
      %2329 = vmatpush.msra.mxu0 0.0
      %2330 = vmatpush.msra.mxu0 %v2299
      %2331 = vmatmul.f32.gmra.mxu0 %v2288
      %v2332 = vpop.f32.mrf.mxu0
      %v2333 = vadd.f32 %v2251, %v2332
      %2334 = vmatmul.f32.gmra.mxu0 %v2291
      %v2335 = vpop.f32.mrf.mxu0
      %v2336 = vadd.f32 %v2256, %v2335
      %2337 = vmatmul.f32.gmra.mxu0 %v2294
      %v2338 = vpop.f32.mrf.mxu0
      %v2339 = vadd.f32 %v2261, %v2338
      %2340 = vmatmul.f32.gmra.mxu0 %v2297
      %v2341 = vpop.f32.mrf.mxu0
      %v2342 = vadd.f32 %v2266, %v2341
      %2343 = vdwg.mxu0
      %2344 = vmatpush.msra.mxu0 0.0
      %2345 = vmatpush.msra.mxu0 0.0
      %2346 = vmatpush.msra.mxu0 0.0
      %2347 = vmatpush.msra.mxu0 0.0
      %2348 = vmatpush.msra.mxu0 0.0
      %2349 = vmatpush.msra.mxu0 0.0
      %2350 = vmatpush.msra.mxu0 0.0
      %2351 = vmatpush.msra.mxu0 0.0
      %2352 = vmatpush.msra.mxu0 0.0
      %2353 = vmatpush.msra.mxu0 0.0
      %2354 = vmatpush.msra.mxu0 0.0
      %2355 = vmatpush.msra.mxu0 0.0
      %2356 = vmatpush.msra.mxu0 0.0
      %2357 = vmatpush.msra.mxu0 0.0
      %2358 = vmatpush.msra.mxu0 0.0
      %2359 = vmatpush.msra.mxu0 %v2301
      %2360 = vmatmul.f32.gmra.mxu0 %v2288
      %v2361 = vpop.f32.mrf.mxu0
      %v2362 = vadd.f32 %v2251, %v2361
      %2363 = vmatmul.f32.gmra.mxu0 %v2291
      %v2364 = vpop.f32.mrf.mxu0
      %v2365 = vadd.f32 %v2256, %v2364
      %2366 = vmatmul.f32.gmra.mxu0 %v2294
      %v2367 = vpop.f32.mrf.mxu0
      %v2368 = vadd.f32 %v2261, %v2367
      %2369 = vmatmul.f32.gmra.mxu0 %v2297
      %v2370 = vpop.f32.mrf.mxu0
      %v2371 = vadd.f32 %v2266, %v2370
      %2372 = vdwg.mxu0
      %2373 = vmatpush.msra.mxu0 0.0
      %2374 = vmatpush.msra.mxu0 0.0
      %2375 = vmatpush.msra.mxu0 0.0
      %2376 = vmatpush.msra.mxu0 0.0
      %2377 = vmatpush.msra.mxu0 0.0
      %2378 = vmatpush.msra.mxu0 0.0
      %2379 = vmatpush.msra.mxu0 0.0
      %2380 = vmatpush.msra.mxu0 0.0
      %2381 = vmatpush.msra.mxu0 0.0
      %2382 = vmatpush.msra.mxu0 0.0
      %2383 = vmatpush.msra.mxu0 0.0
      %2384 = vmatpush.msra.mxu0 0.0
      %2385 = vmatpush.msra.mxu0 0.0
      %2386 = vmatpush.msra.mxu0 0.0
      %2387 = vmatpush.msra.mxu0 0.0
      %2388 = vmatpush.msra.mxu0 %v2303
      %2389 = vmatmul.f32.gmra.mxu0 %v2288
      %v2390 = vpop.f32.mrf.mxu0
      %v2391 = vadd.f32 %v2251, %v2390
      %2392 = vmatmul.f32.gmra.mxu0 %v2291
      %v2393 = vpop.f32.mrf.mxu0
      %v2394 = vadd.f32 %v2256, %v2393
      %2395 = vmatmul.f32.gmra.mxu0 %v2294
      %v2396 = vpop.f32.mrf.mxu0
      %v2397 = vadd.f32 %v2261, %v2396
      %2398 = vmatmul.f32.gmra.mxu0 %v2297
      %v2399 = vpop.f32.mrf.mxu0
      %v2400 = vadd.f32 %v2266, %v2399
      %2401 = vdwg.mxu0
      %2402 = vmatpush.msra.mxu0 0.0
      %2403 = vmatpush.msra.mxu0 0.0
      %2404 = vmatpush.msra.mxu0 0.0
      %2405 = vmatpush.msra.mxu0 0.0
      %2406 = vmatpush.msra.mxu0 0.0
      %2407 = vmatpush.msra.mxu0 0.0
      %2408 = vmatpush.msra.mxu0 0.0
      %2409 = vmatpush.msra.mxu0 0.0
      %2410 = vmatpush.msra.mxu0 0.0
      %2411 = vmatpush.msra.mxu0 0.0
      %2412 = vmatpush.msra.mxu0 0.0
      %2413 = vmatpush.msra.mxu0 0.0
      %2414 = vmatpush.msra.mxu0 0.0
      %2415 = vmatpush.msra.mxu0 0.0
      %2416 = vmatpush.msra.mxu0 0.0
      %2417 = vmatpush.msra.mxu0 %v2305
      %2418 = vmatmul.f32.gmra.mxu0 %v2288
      %v2419 = vpop.f32.mrf.mxu0
      %v2420 = vadd.f32 %v2251, %v2419
      %2421 = vmatmul.f32.gmra.mxu0 %v2291
      %v2422 = vpop.f32.mrf.mxu0
      %v2423 = vadd.f32 %v2256, %v2422
      %2424 = vmatmul.f32.gmra.mxu0 %v2294
      %v2425 = vpop.f32.mrf.mxu0
      %v2426 = vadd.f32 %v2261, %v2425
      %2427 = vmatmul.f32.gmra.mxu0 %v2297
      %v2428 = vpop.f32.mrf.mxu0
      %v2429 = vadd.f32 %v2266, %v2428
      %2430 = vdwg.mxu0
      %2431 = vmatpush.msra.mxu0 0.0
      %2432 = vmatpush.msra.mxu0 0.0
      %2433 = vmatpush.msra.mxu0 0.0
      %2434 = vmatpush.msra.mxu0 0.0
      %2435 = vmatpush.msra.mxu0 0.0
      %2436 = vmatpush.msra.mxu0 0.0
      %2437 = vmatpush.msra.mxu0 0.0
      %2438 = vmatpush.msra.mxu0 0.0
      %2439 = vmatpush.msra.mxu0 0.0
      %2440 = vmatpush.msra.mxu0 0.0
      %2441 = vmatpush.msra.mxu0 0.0
      %2442 = vmatpush.msra.mxu0 0.0
      %2443 = vmatpush.msra.mxu0 0.0
      %2444 = vmatpush.msra.mxu0 0.0
      %2445 = vmatpush.msra.mxu0 0.0
      %2446 = vmatpush.msra.mxu0 %v2307
      %2447 = vmatmul.f32.gmra.mxu0 %v2288
      %v2448 = vpop.f32.mrf.mxu0
      %v2449 = vadd.f32 %v2251, %v2448
      %2450 = vmatmul.f32.gmra.mxu0 %v2291
      %v2451 = vpop.f32.mrf.mxu0
      %v2452 = vadd.f32 %v2256, %v2451
      %2453 = vmatmul.f32.gmra.mxu0 %v2294
      %v2454 = vpop.f32.mrf.mxu0
      %v2455 = vadd.f32 %v2261, %v2454
      %2456 = vmatmul.f32.gmra.mxu0 %v2297
      %v2457 = vpop.f32.mrf.mxu0
      %v2458 = vadd.f32 %v2266, %v2457
      %2459 = vdwg.mxu0
      %2460 = vmatpush.msra.mxu0 0.0
      %2461 = vmatpush.msra.mxu0 0.0
      %2462 = vmatpush.msra.mxu0 0.0
      %2463 = vmatpush.msra.mxu0 0.0
      %2464 = vmatpush.msra.mxu0 0.0
      %2465 = vmatpush.msra.mxu0 0.0
      %2466 = vmatpush.msra.mxu0 0.0
      %2467 = vmatpush.msra.mxu0 0.0
      %2468 = vmatpush.msra.mxu0 0.0
      %2469 = vmatpush.msra.mxu0 0.0
      %2470 = vmatpush.msra.mxu0 0.0
      %2471 = vmatpush.msra.mxu0 0.0
      %2472 = vmatpush.msra.mxu0 0.0
      %2473 = vmatpush.msra.mxu0 0.0
      %2474 = vmatpush.msra.mxu0 0.0
      %2475 = vmatpush.msra.mxu0 %v2309
      %2476 = vmatmul.f32.gmra.mxu0 %v2288
      %v2477 = vpop.f32.mrf.mxu0
      %v2478 = vadd.f32 %v2251, %v2477
      %2479 = vmatmul.f32.gmra.mxu0 %v2291
      %v2480 = vpop.f32.mrf.mxu0
      %v2481 = vadd.f32 %v2256, %v2480
      %2482 = vmatmul.f32.gmra.mxu0 %v2294
      %v2483 = vpop.f32.mrf.mxu0
      %v2484 = vadd.f32 %v2261, %v2483
      %2485 = vmatmul.f32.gmra.mxu0 %v2297
      %v2486 = vpop.f32.mrf.mxu0
      %v2487 = vadd.f32 %v2266, %v2486
      %2488 = vdwg.mxu0
      %2489 = vmatpush.msra.mxu0 0.0
      %2490 = vmatpush.msra.mxu0 0.0
      %2491 = vmatpush.msra.mxu0 0.0
      %2492 = vmatpush.msra.mxu0 0.0
      %2493 = vmatpush.msra.mxu0 0.0
      %2494 = vmatpush.msra.mxu0 0.0
      %2495 = vmatpush.msra.mxu0 0.0
      %2496 = vmatpush.msra.mxu0 0.0
      %2497 = vmatpush.msra.mxu0 0.0
      %2498 = vmatpush.msra.mxu0 0.0
      %2499 = vmatpush.msra.mxu0 0.0
      %2500 = vmatpush.msra.mxu0 0.0
      %2501 = vmatpush.msra.mxu0 0.0
      %2502 = vmatpush.msra.mxu0 0.0
      %2503 = vmatpush.msra.mxu0 0.0
      %2504 = vmatpush.msra.mxu0 %v2311
      %2505 = vmatmul.f32.gmra.mxu0 %v2288
      %v2506 = vpop.f32.mrf.mxu0
      %v2507 = vadd.f32 %v2251, %v2506
      %2508 = vmatmul.f32.gmra.mxu0 %v2291
      %v2509 = vpop.f32.mrf.mxu0
      %v2510 = vadd.f32 %v2256, %v2509
      %2511 = vmatmul.f32.gmra.mxu0 %v2294
      %v2512 = vpop.f32.mrf.mxu0
      %v2513 = vadd.f32 %v2261, %v2512
      %2514 = vmatmul.f32.gmra.mxu0 %v2297
      %v2515 = vpop.f32.mrf.mxu0
      %v2516 = vadd.f32 %v2266, %v2515
      %2517 = vdwg.mxu0
      %2518 = vmatpush.msra.mxu0 0.0
      %2519 = vmatpush.msra.mxu0 0.0
      %2520 = vmatpush.msra.mxu0 0.0
      %2521 = vmatpush.msra.mxu0 0.0
      %2522 = vmatpush.msra.mxu0 0.0
      %2523 = vmatpush.msra.mxu0 0.0
      %2524 = vmatpush.msra.mxu0 0.0
      %2525 = vmatpush.msra.mxu0 0.0
      %2526 = vmatpush.msra.mxu0 0.0
      %2527 = vmatpush.msra.mxu0 0.0
      %2528 = vmatpush.msra.mxu0 0.0
      %2529 = vmatpush.msra.mxu0 0.0
      %2530 = vmatpush.msra.mxu0 0.0
      %2531 = vmatpush.msra.mxu0 0.0
      %2532 = vmatpush.msra.mxu0 0.0
      %2533 = vmatpush.msra.mxu0 %v2313
      %2534 = vmatmul.f32.gmra.mxu0 %v2288
      %v2535 = vpop.f32.mrf.mxu0
      %v2536 = vadd.f32 %v2251, %v2535
      %2537 = vmatmul.f32.gmra.mxu0 %v2291
      %v2538 = vpop.f32.mrf.mxu0
      %v2539 = vadd.f32 %v2256, %v2538
      %2540 = vmatmul.f32.gmra.mxu0 %v2294
      %v2541 = vpop.f32.mrf.mxu0
      %v2542 = vadd.f32 %v2261, %v2541
      %2543 = vmatmul.f32.gmra.mxu0 %v2297
      %v2544 = vpop.f32.mrf.mxu0
      %v2545 = vadd.f32 %v2266, %v2544
      %2546 = vdwg.mxu0
      %v2547 = vmax.f32 %v2333, 0.0
      %v2548 = vmax.f32 %v2362, 0.0
      %v2549 = vmax.f32 %v2391, 0.0
      %v2550 = vmax.f32 %v2420, 0.0
      %v2551 = vmax.f32 %v2449, 0.0
      %v2552 = vmax.f32 %v2478, 0.0
      %v2553 = vmax.f32 %v2507, 0.0
      %v2554 = vmax.f32 %v2536, 0.0
      %v2555 = vmax.f32 %v2336, 0.0
      %v2556 = vmax.f32 %v2365, 0.0
      %v2557 = vmax.f32 %v2394, 0.0
      %v2558 = vmax.f32 %v2423, 0.0
      %v2559 = vmax.f32 %v2452, 0.0
      %v2560 = vmax.f32 %v2481, 0.0
      %v2561 = vmax.f32 %v2510, 0.0
      %v2562 = vmax.f32 %v2539, 0.0
      %v2563 = vmax.f32 %v2339, 0.0
      %v2564 = vmax.f32 %v2368, 0.0
      %v2565 = vmax.f32 %v2397, 0.0
      %v2566 = vmax.f32 %v2426, 0.0
      %v2567 = vmax.f32 %v2455, 0.0
      %v2568 = vmax.f32 %v2484, 0.0
      %v2569 = vmax.f32 %v2513, 0.0
      %v2570 = vmax.f32 %v2542, 0.0
      %v2571 = vmax.f32 %v2342, 0.0
      %v2572 = vmax.f32 %v2371, 0.0
      %v2573 = vmax.f32 %v2400, 0.0
      %v2574 = vmax.f32 %v2429, 0.0
      %v2575 = vmax.f32 %v2458, 0.0
      %v2576 = vmax.f32 %v2487, 0.0
      %v2577 = vmax.f32 %v2516, 0.0
      %v2578 = vmax.f32 %v2545, 0.0
      %s2579 = scalar_lea.vmem %s2, 384
      %v2580 = vld [vmem:[%s2579] sm:$0xff]
      %v2581 = vld [vmem:[%s2579 + $0x8] sm:$0xff]
      %v2582 = vld [vmem:[%s2579 + $0x10] sm:$0xff]
      %v2583 = vld [vmem:[%s2579 + $0x18] sm:$0xff]
      %v2584 = vld [vmem:[%s2579 + $0x20] sm:$0xff]
      %v2585 = vld [vmem:[%s2579 + $0x28] sm:$0xff]
      %v2586 = vld [vmem:[%s2579 + $0x30] sm:$0xff]
      %v2587 = vld [vmem:[%s2579 + $0x38] sm:$0xff]
      %s2588 = scalar_lea.vmem %s2, 448
      %v2589 = vld [vmem:[%s2588] sm:$0xff]
      %v2590 = vld [vmem:[%s2588 + $0x8] sm:$0xff]
      %v2591 = vld [vmem:[%s2588 + $0x10] sm:$0xff]
      %v2592 = vld [vmem:[%s2588 + $0x18] sm:$0xff]
      %v2593 = vld [vmem:[%s2588 + $0x20] sm:$0xff]
      %v2594 = vld [vmem:[%s2588 + $0x28] sm:$0xff]
      %v2595 = vld [vmem:[%s2588 + $0x30] sm:$0xff]
      %v2596 = vld [vmem:[%s2588 + $0x38] sm:$0xff]
      %vm2597 = vcmask 130048
      %v2599 = vsel %vm2597, %v2589, 0
      %v2602 = vsel %vm2597, %v2590, 0
      %v2605 = vsel %vm2597, %v2591, 0
      %v2608 = vsel %vm2597, %v2592, 0
      %v2611 = vsel %vm2597, %v2593, 0
      %v2614 = vsel %vm2597, %v2594, 0
      %v2617 = vsel %vm2597, %v2595, 0
      %v2620 = vsel %vm2597, %v2596, 0
      %2622 = vmatpush.msra.mxu0 0.0
      %2623 = vmatpush.msra.mxu0 0.0
      %2624 = vmatpush.msra.mxu0 0.0
      %2625 = vmatpush.msra.mxu0 0.0
      %2626 = vmatpush.msra.mxu0 0.0
      %2627 = vmatpush.msra.mxu0 0.0
      %2628 = vmatpush.msra.mxu0 0.0
      %2629 = vmatpush.msra.mxu0 0.0
      %2630 = vmatpush.msra.mxu0 0.0
      %2631 = vmatpush.msra.mxu0 0.0
      %2632 = vmatpush.msra.mxu0 0.0
      %2633 = vmatpush.msra.mxu0 0.0
      %2634 = vmatpush.msra.mxu0 0.0
      %2635 = vmatpush.msra.mxu0 0.0
      %2636 = vmatpush.msra.mxu0 %v2227
      %2637 = vmatpush.msra.mxu0 %v2219
      %2638 = vmatmul.f32.gmra.mxu0 %v2599
      %v2639 = vpop.f32.mrf.mxu0
      %v2640 = vadd.f32 0.0, %v2639
      %2641 = vmatmul.f32.gmra.mxu0 %v2602
      %v2642 = vpop.f32.mrf.mxu0
      %v2643 = vadd.f32 0.0, %v2642
      %2644 = vmatmul.f32.gmra.mxu0 %v2605
      %v2645 = vpop.f32.mrf.mxu0
      %v2646 = vadd.f32 0.0, %v2645
      %2647 = vmatmul.f32.gmra.mxu0 %v2608
      %v2648 = vpop.f32.mrf.mxu0
      %v2649 = vadd.f32 0.0, %v2648
      %2650 = vmatmul.f32.gmra.mxu0 %v2611
      %v2651 = vpop.f32.mrf.mxu0
      %v2652 = vadd.f32 0.0, %v2651
      %2653 = vmatmul.f32.gmra.mxu0 %v2614
      %v2654 = vpop.f32.mrf.mxu0
      %v2655 = vadd.f32 0.0, %v2654
      %2656 = vmatmul.f32.gmra.mxu0 %v2617
      %v2657 = vpop.f32.mrf.mxu0
      %v2658 = vadd.f32 0.0, %v2657
      %2659 = vmatmul.f32.gmra.mxu0 %v2620
      %v2660 = vpop.f32.mrf.mxu0
      %v2661 = vadd.f32 0.0, %v2660
      %2662 = vdwg.mxu0
      %2663 = vmatpush.msra.mxu0 0.0
      %2664 = vmatpush.msra.mxu0 0.0
      %2665 = vmatpush.msra.mxu0 0.0
      %2666 = vmatpush.msra.mxu0 0.0
      %2667 = vmatpush.msra.mxu0 0.0
      %2668 = vmatpush.msra.mxu0 0.0
      %2669 = vmatpush.msra.mxu0 0.0
      %2670 = vmatpush.msra.mxu0 0.0
      %2671 = vmatpush.msra.mxu0 0.0
      %2672 = vmatpush.msra.mxu0 0.0
      %2673 = vmatpush.msra.mxu0 0.0
      %2674 = vmatpush.msra.mxu0 0.0
      %2675 = vmatpush.msra.mxu0 0.0
      %2676 = vmatpush.msra.mxu0 0.0
      %2677 = vmatpush.msra.mxu0 %v2228
      %2678 = vmatpush.msra.mxu0 %v2220
      %2679 = vmatmul.f32.gmra.mxu0 %v2599
      %v2680 = vpop.f32.mrf.mxu0
      %v2681 = vadd.f32 0.0, %v2680
      %2682 = vmatmul.f32.gmra.mxu0 %v2602
      %v2683 = vpop.f32.mrf.mxu0
      %v2684 = vadd.f32 0.0, %v2683
      %2685 = vmatmul.f32.gmra.mxu0 %v2605
      %v2686 = vpop.f32.mrf.mxu0
      %v2687 = vadd.f32 0.0, %v2686
      %2688 = vmatmul.f32.gmra.mxu0 %v2608
      %v2689 = vpop.f32.mrf.mxu0
      %v2690 = vadd.f32 0.0, %v2689
      %2691 = vmatmul.f32.gmra.mxu0 %v2611
      %v2692 = vpop.f32.mrf.mxu0
      %v2693 = vadd.f32 0.0, %v2692
      %2694 = vmatmul.f32.gmra.mxu0 %v2614
      %v2695 = vpop.f32.mrf.mxu0
      %v2696 = vadd.f32 0.0, %v2695
      %2697 = vmatmul.f32.gmra.mxu0 %v2617
      %v2698 = vpop.f32.mrf.mxu0
      %v2699 = vadd.f32 0.0, %v2698
      %2700 = vmatmul.f32.gmra.mxu0 %v2620
      %v2701 = vpop.f32.mrf.mxu0
      %v2702 = vadd.f32 0.0, %v2701
      %2703 = vdwg.mxu0
      %2704 = vmatpush.msra.mxu0 0.0
      %2705 = vmatpush.msra.mxu0 0.0
      %2706 = vmatpush.msra.mxu0 0.0
      %2707 = vmatpush.msra.mxu0 0.0
      %2708 = vmatpush.msra.mxu0 0.0
      %2709 = vmatpush.msra.mxu0 0.0
      %2710 = vmatpush.msra.mxu0 0.0
      %2711 = vmatpush.msra.mxu0 0.0
      %2712 = vmatpush.msra.mxu0 0.0
      %2713 = vmatpush.msra.mxu0 0.0
      %2714 = vmatpush.msra.mxu0 0.0
      %2715 = vmatpush.msra.mxu0 0.0
      %2716 = vmatpush.msra.mxu0 0.0
      %2717 = vmatpush.msra.mxu0 0.0
      %2718 = vmatpush.msra.mxu0 %v2229
      %2719 = vmatpush.msra.mxu0 %v2221
      %2720 = vmatmul.f32.gmra.mxu0 %v2599
      %v2721 = vpop.f32.mrf.mxu0
      %v2722 = vadd.f32 0.0, %v2721
      %2723 = vmatmul.f32.gmra.mxu0 %v2602
      %v2724 = vpop.f32.mrf.mxu0
      %v2725 = vadd.f32 0.0, %v2724
      %2726 = vmatmul.f32.gmra.mxu0 %v2605
      %v2727 = vpop.f32.mrf.mxu0
      %v2728 = vadd.f32 0.0, %v2727
      %2729 = vmatmul.f32.gmra.mxu0 %v2608
      %v2730 = vpop.f32.mrf.mxu0
      %v2731 = vadd.f32 0.0, %v2730
      %2732 = vmatmul.f32.gmra.mxu0 %v2611
      %v2733 = vpop.f32.mrf.mxu0
      %v2734 = vadd.f32 0.0, %v2733
      %2735 = vmatmul.f32.gmra.mxu0 %v2614
      %v2736 = vpop.f32.mrf.mxu0
      %v2737 = vadd.f32 0.0, %v2736
      %2738 = vmatmul.f32.gmra.mxu0 %v2617
      %v2739 = vpop.f32.mrf.mxu0
      %v2740 = vadd.f32 0.0, %v2739
      %2741 = vmatmul.f32.gmra.mxu0 %v2620
      %v2742 = vpop.f32.mrf.mxu0
      %v2743 = vadd.f32 0.0, %v2742
      %2744 = vdwg.mxu0
      %2745 = vmatpush.msra.mxu0 0.0
      %2746 = vmatpush.msra.mxu0 0.0
      %2747 = vmatpush.msra.mxu0 0.0
      %2748 = vmatpush.msra.mxu0 0.0
      %2749 = vmatpush.msra.mxu0 0.0
      %2750 = vmatpush.msra.mxu0 0.0
      %2751 = vmatpush.msra.mxu0 0.0
      %2752 = vmatpush.msra.mxu0 0.0
      %2753 = vmatpush.msra.mxu0 0.0
      %2754 = vmatpush.msra.mxu0 0.0
      %2755 = vmatpush.msra.mxu0 0.0
      %2756 = vmatpush.msra.mxu0 0.0
      %2757 = vmatpush.msra.mxu0 0.0
      %2758 = vmatpush.msra.mxu0 0.0
      %2759 = vmatpush.msra.mxu0 %v2230
      %2760 = vmatpush.msra.mxu0 %v2222
      %2761 = vmatmul.f32.gmra.mxu0 %v2599
      %v2762 = vpop.f32.mrf.mxu0
      %v2763 = vadd.f32 0.0, %v2762
      %2764 = vmatmul.f32.gmra.mxu0 %v2602
      %v2765 = vpop.f32.mrf.mxu0
      %v2766 = vadd.f32 0.0, %v2765
      %2767 = vmatmul.f32.gmra.mxu0 %v2605
      %v2768 = vpop.f32.mrf.mxu0
      %v2769 = vadd.f32 0.0, %v2768
      %2770 = vmatmul.f32.gmra.mxu0 %v2608
      %v2771 = vpop.f32.mrf.mxu0
      %v2772 = vadd.f32 0.0, %v2771
      %2773 = vmatmul.f32.gmra.mxu0 %v2611
      %v2774 = vpop.f32.mrf.mxu0
      %v2775 = vadd.f32 0.0, %v2774
      %2776 = vmatmul.f32.gmra.mxu0 %v2614
      %v2777 = vpop.f32.mrf.mxu0
      %v2778 = vadd.f32 0.0, %v2777
      %2779 = vmatmul.f32.gmra.mxu0 %v2617
      %v2780 = vpop.f32.mrf.mxu0
      %v2781 = vadd.f32 0.0, %v2780
      %2782 = vmatmul.f32.gmra.mxu0 %v2620
      %v2783 = vpop.f32.mrf.mxu0
      %v2784 = vadd.f32 0.0, %v2783
      %2785 = vdwg.mxu0
      %2786 = vmatpush.msra.mxu0 0.0
      %2787 = vmatpush.msra.mxu0 0.0
      %2788 = vmatpush.msra.mxu0 0.0
      %2789 = vmatpush.msra.mxu0 0.0
      %2790 = vmatpush.msra.mxu0 0.0
      %2791 = vmatpush.msra.mxu0 0.0
      %2792 = vmatpush.msra.mxu0 0.0
      %2793 = vmatpush.msra.mxu0 0.0
      %2794 = vmatpush.msra.mxu0 0.0
      %2795 = vmatpush.msra.mxu0 0.0
      %2796 = vmatpush.msra.mxu0 0.0
      %2797 = vmatpush.msra.mxu0 0.0
      %2798 = vmatpush.msra.mxu0 0.0
      %2799 = vmatpush.msra.mxu0 0.0
      %2800 = vmatpush.msra.mxu0 %v2231
      %2801 = vmatpush.msra.mxu0 %v2223
      %2802 = vmatmul.f32.gmra.mxu0 %v2599
      %v2803 = vpop.f32.mrf.mxu0
      %v2804 = vadd.f32 0.0, %v2803
      %2805 = vmatmul.f32.gmra.mxu0 %v2602
      %v2806 = vpop.f32.mrf.mxu0
      %v2807 = vadd.f32 0.0, %v2806
      %2808 = vmatmul.f32.gmra.mxu0 %v2605
      %v2809 = vpop.f32.mrf.mxu0
      %v2810 = vadd.f32 0.0, %v2809
      %2811 = vmatmul.f32.gmra.mxu0 %v2608
      %v2812 = vpop.f32.mrf.mxu0
      %v2813 = vadd.f32 0.0, %v2812
      %2814 = vmatmul.f32.gmra.mxu0 %v2611
      %v2815 = vpop.f32.mrf.mxu0
      %v2816 = vadd.f32 0.0, %v2815
      %2817 = vmatmul.f32.gmra.mxu0 %v2614
      %v2818 = vpop.f32.mrf.mxu0
      %v2819 = vadd.f32 0.0, %v2818
      %2820 = vmatmul.f32.gmra.mxu0 %v2617
      %v2821 = vpop.f32.mrf.mxu0
      %v2822 = vadd.f32 0.0, %v2821
      %2823 = vmatmul.f32.gmra.mxu0 %v2620
      %v2824 = vpop.f32.mrf.mxu0
      %v2825 = vadd.f32 0.0, %v2824
      %2826 = vdwg.mxu0
      %2827 = vmatpush.msra.mxu0 0.0
      %2828 = vmatpush.msra.mxu0 0.0
      %2829 = vmatpush.msra.mxu0 0.0
      %2830 = vmatpush.msra.mxu0 0.0
      %2831 = vmatpush.msra.mxu0 0.0
      %2832 = vmatpush.msra.mxu0 0.0
      %2833 = vmatpush.msra.mxu0 0.0
      %2834 = vmatpush.msra.mxu0 0.0
      %2835 = vmatpush.msra.mxu0 0.0
      %2836 = vmatpush.msra.mxu0 0.0
      %2837 = vmatpush.msra.mxu0 0.0
      %2838 = vmatpush.msra.mxu0 0.0
      %2839 = vmatpush.msra.mxu0 0.0
      %2840 = vmatpush.msra.mxu0 0.0
      %2841 = vmatpush.msra.mxu0 %v2232
      %2842 = vmatpush.msra.mxu0 %v2224
      %2843 = vmatmul.f32.gmra.mxu0 %v2599
      %v2844 = vpop.f32.mrf.mxu0
      %v2845 = vadd.f32 0.0, %v2844
      %2846 = vmatmul.f32.gmra.mxu0 %v2602
      %v2847 = vpop.f32.mrf.mxu0
      %v2848 = vadd.f32 0.0, %v2847
      %2849 = vmatmul.f32.gmra.mxu0 %v2605
      %v2850 = vpop.f32.mrf.mxu0
      %v2851 = vadd.f32 0.0, %v2850
      %2852 = vmatmul.f32.gmra.mxu0 %v2608
      %v2853 = vpop.f32.mrf.mxu0
      %v2854 = vadd.f32 0.0, %v2853
      %2855 = vmatmul.f32.gmra.mxu0 %v2611
      %v2856 = vpop.f32.mrf.mxu0
      %v2857 = vadd.f32 0.0, %v2856
      %2858 = vmatmul.f32.gmra.mxu0 %v2614
      %v2859 = vpop.f32.mrf.mxu0
      %v2860 = vadd.f32 0.0, %v2859
      %2861 = vmatmul.f32.gmra.mxu0 %v2617
      %v2862 = vpop.f32.mrf.mxu0
      %v2863 = vadd.f32 0.0, %v2862
      %2864 = vmatmul.f32.gmra.mxu0 %v2620
      %v2865 = vpop.f32.mrf.mxu0
      %v2866 = vadd.f32 0.0, %v2865
      %2867 = vdwg.mxu0
      %2868 = vmatpush.msra.mxu0 0.0
      %2869 = vmatpush.msra.mxu0 0.0
      %2870 = vmatpush.msra.mxu0 0.0
      %2871 = vmatpush.msra.mxu0 0.0
      %2872 = vmatpush.msra.mxu0 0.0
      %2873 = vmatpush.msra.mxu0 0.0
      %2874 = vmatpush.msra.mxu0 0.0
      %2875 = vmatpush.msra.mxu0 0.0
      %2876 = vmatpush.msra.mxu0 0.0
      %2877 = vmatpush.msra.mxu0 0.0
      %2878 = vmatpush.msra.mxu0 0.0
      %2879 = vmatpush.msra.mxu0 0.0
      %2880 = vmatpush.msra.mxu0 0.0
      %2881 = vmatpush.msra.mxu0 0.0
      %2882 = vmatpush.msra.mxu0 %v2233
      %2883 = vmatpush.msra.mxu0 %v2225
      %2884 = vmatmul.f32.gmra.mxu0 %v2599
      %v2885 = vpop.f32.mrf.mxu0
      %v2886 = vadd.f32 0.0, %v2885
      %2887 = vmatmul.f32.gmra.mxu0 %v2602
      %v2888 = vpop.f32.mrf.mxu0
      %v2889 = vadd.f32 0.0, %v2888
      %2890 = vmatmul.f32.gmra.mxu0 %v2605
      %v2891 = vpop.f32.mrf.mxu0
      %v2892 = vadd.f32 0.0, %v2891
      %2893 = vmatmul.f32.gmra.mxu0 %v2608
      %v2894 = vpop.f32.mrf.mxu0
      %v2895 = vadd.f32 0.0, %v2894
      %2896 = vmatmul.f32.gmra.mxu0 %v2611
      %v2897 = vpop.f32.mrf.mxu0
      %v2898 = vadd.f32 0.0, %v2897
      %2899 = vmatmul.f32.gmra.mxu0 %v2614
      %v2900 = vpop.f32.mrf.mxu0
      %v2901 = vadd.f32 0.0, %v2900
      %2902 = vmatmul.f32.gmra.mxu0 %v2617
      %v2903 = vpop.f32.mrf.mxu0
      %v2904 = vadd.f32 0.0, %v2903
      %2905 = vmatmul.f32.gmra.mxu0 %v2620
      %v2906 = vpop.f32.mrf.mxu0
      %v2907 = vadd.f32 0.0, %v2906
      %2908 = vdwg.mxu0
      %2909 = vmatpush.msra.mxu0 0.0
      %2910 = vmatpush.msra.mxu0 0.0
      %2911 = vmatpush.msra.mxu0 0.0
      %2912 = vmatpush.msra.mxu0 0.0
      %2913 = vmatpush.msra.mxu0 0.0
      %2914 = vmatpush.msra.mxu0 0.0
      %2915 = vmatpush.msra.mxu0 0.0
      %2916 = vmatpush.msra.mxu0 0.0
      %2917 = vmatpush.msra.mxu0 0.0
      %2918 = vmatpush.msra.mxu0 0.0
      %2919 = vmatpush.msra.mxu0 0.0
      %2920 = vmatpush.msra.mxu0 0.0
      %2921 = vmatpush.msra.mxu0 0.0
      %2922 = vmatpush.msra.mxu0 0.0
      %2923 = vmatpush.msra.mxu0 %v2234
      %2924 = vmatpush.msra.mxu0 %v2226
      %2925 = vmatmul.f32.gmra.mxu0 %v2599
      %v2926 = vpop.f32.mrf.mxu0
      %v2927 = vadd.f32 0.0, %v2926
      %2928 = vmatmul.f32.gmra.mxu0 %v2602
      %v2929 = vpop.f32.mrf.mxu0
      %v2930 = vadd.f32 0.0, %v2929
      %2931 = vmatmul.f32.gmra.mxu0 %v2605
      %v2932 = vpop.f32.mrf.mxu0
      %v2933 = vadd.f32 0.0, %v2932
      %2934 = vmatmul.f32.gmra.mxu0 %v2608
      %v2935 = vpop.f32.mrf.mxu0
      %v2936 = vadd.f32 0.0, %v2935
      %2937 = vmatmul.f32.gmra.mxu0 %v2611
      %v2938 = vpop.f32.mrf.mxu0
      %v2939 = vadd.f32 0.0, %v2938
      %2940 = vmatmul.f32.gmra.mxu0 %v2614
      %v2941 = vpop.f32.mrf.mxu0
      %v2942 = vadd.f32 0.0, %v2941
      %2943 = vmatmul.f32.gmra.mxu0 %v2617
      %v2944 = vpop.f32.mrf.mxu0
      %v2945 = vadd.f32 0.0, %v2944
      %2946 = vmatmul.f32.gmra.mxu0 %v2620
      %v2947 = vpop.f32.mrf.mxu0
      %v2948 = vadd.f32 0.0, %v2947
      %2949 = vdwg.mxu0
      %vm2950 = vcmask 261120
      %v2952 = vsel %vm2950, %v2580, 0
      %v2955 = vsel %vm2950, %v2581, 0
      %v2958 = vsel %vm2950, %v2582, 0
      %v2961 = vsel %vm2950, %v2583, 0
      %v2964 = vsel %vm2950, %v2584, 0
      %v2967 = vsel %vm2950, %v2585, 0
      %v2970 = vsel %vm2950, %v2586, 0
      %v2973 = vsel %vm2950, %v2587, 0
      %2975 = vmatpush.msra.mxu0 0.0
      %2976 = vmatpush.msra.mxu0 0.0
      %2977 = vmatpush.msra.mxu0 0.0
      %2978 = vmatpush.msra.mxu0 0.0
      %2979 = vmatpush.msra.mxu0 0.0
      %2980 = vmatpush.msra.mxu0 0.0
      %2981 = vmatpush.msra.mxu0 0.0
      %2982 = vmatpush.msra.mxu0 0.0
      %2983 = vmatpush.msra.mxu0 0.0
      %2984 = vmatpush.msra.mxu0 0.0
      %2985 = vmatpush.msra.mxu0 0.0
      %2986 = vmatpush.msra.mxu0 0.0
      %2987 = vmatpush.msra.mxu0 %v2571
      %2988 = vmatpush.msra.mxu0 %v2563
      %2989 = vmatpush.msra.mxu0 %v2555
      %2990 = vmatpush.msra.mxu0 %v2547
      %2991 = vmatmul.f32.gmra.mxu0 %v2952
      %v2992 = vpop.f32.mrf.mxu0
      %v2993 = vadd.f32 %v2640, %v2992
      %2994 = vmatmul.f32.gmra.mxu0 %v2955
      %v2995 = vpop.f32.mrf.mxu0
      %v2996 = vadd.f32 %v2643, %v2995
      %2997 = vmatmul.f32.gmra.mxu0 %v2958
      %v2998 = vpop.f32.mrf.mxu0
      %v2999 = vadd.f32 %v2646, %v2998
      %3000 = vmatmul.f32.gmra.mxu0 %v2961
      %v3001 = vpop.f32.mrf.mxu0
      %v3002 = vadd.f32 %v2649, %v3001
      %3003 = vmatmul.f32.gmra.mxu0 %v2964
      %v3004 = vpop.f32.mrf.mxu0
      %v3005 = vadd.f32 %v2652, %v3004
      %3006 = vmatmul.f32.gmra.mxu0 %v2967
      %v3007 = vpop.f32.mrf.mxu0
      %v3008 = vadd.f32 %v2655, %v3007
      %3009 = vmatmul.f32.gmra.mxu0 %v2970
      %v3010 = vpop.f32.mrf.mxu0
      %v3011 = vadd.f32 %v2658, %v3010
      %3012 = vmatmul.f32.gmra.mxu0 %v2973
      %v3013 = vpop.f32.mrf.mxu0
      %v3014 = vadd.f32 %v2661, %v3013
      %3015 = vdwg.mxu0
      %3016 = vmatpush.msra.mxu0 0.0
      %3017 = vmatpush.msra.mxu0 0.0
      %3018 = vmatpush.msra.mxu0 0.0
      %3019 = vmatpush.msra.mxu0 0.0
      %3020 = vmatpush.msra.mxu0 0.0
      %3021 = vmatpush.msra.mxu0 0.0
      %3022 = vmatpush.msra.mxu0 0.0
      %3023 = vmatpush.msra.mxu0 0.0
      %3024 = vmatpush.msra.mxu0 0.0
      %3025 = vmatpush.msra.mxu0 0.0
      %3026 = vmatpush.msra.mxu0 0.0
      %3027 = vmatpush.msra.mxu0 0.0
      %3028 = vmatpush.msra.mxu0 %v2572
      %3029 = vmatpush.msra.mxu0 %v2564
      %3030 = vmatpush.msra.mxu0 %v2556
      %3031 = vmatpush.msra.mxu0 %v2548
      %3032 = vmatmul.f32.gmra.mxu0 %v2952
      %v3033 = vpop.f32.mrf.mxu0
      %v3034 = vadd.f32 %v2681, %v3033
      %3035 = vmatmul.f32.gmra.mxu0 %v2955
      %v3036 = vpop.f32.mrf.mxu0
      %v3037 = vadd.f32 %v2684, %v3036
      %3038 = vmatmul.f32.gmra.mxu0 %v2958
      %v3039 = vpop.f32.mrf.mxu0
      %v3040 = vadd.f32 %v2687, %v3039
      %3041 = vmatmul.f32.gmra.mxu0 %v2961
      %v3042 = vpop.f32.mrf.mxu0
      %v3043 = vadd.f32 %v2690, %v3042
      %3044 = vmatmul.f32.gmra.mxu0 %v2964
      %v3045 = vpop.f32.mrf.mxu0
      %v3046 = vadd.f32 %v2693, %v3045
      %3047 = vmatmul.f32.gmra.mxu0 %v2967
      %v3048 = vpop.f32.mrf.mxu0
      %v3049 = vadd.f32 %v2696, %v3048
      %3050 = vmatmul.f32.gmra.mxu0 %v2970
      %v3051 = vpop.f32.mrf.mxu0
      %v3052 = vadd.f32 %v2699, %v3051
      %3053 = vmatmul.f32.gmra.mxu0 %v2973
      %v3054 = vpop.f32.mrf.mxu0
      %v3055 = vadd.f32 %v2702, %v3054
      %3056 = vdwg.mxu0
      %3057 = vmatpush.msra.mxu0 0.0
      %3058 = vmatpush.msra.mxu0 0.0
      %3059 = vmatpush.msra.mxu0 0.0
      %3060 = vmatpush.msra.mxu0 0.0
      %3061 = vmatpush.msra.mxu0 0.0
      %3062 = vmatpush.msra.mxu0 0.0
      %3063 = vmatpush.msra.mxu0 0.0
      %3064 = vmatpush.msra.mxu0 0.0
      %3065 = vmatpush.msra.mxu0 0.0
      %3066 = vmatpush.msra.mxu0 0.0
      %3067 = vmatpush.msra.mxu0 0.0
      %3068 = vmatpush.msra.mxu0 0.0
      %3069 = vmatpush.msra.mxu0 %v2573
      %3070 = vmatpush.msra.mxu0 %v2565
      %3071 = vmatpush.msra.mxu0 %v2557
      %3072 = vmatpush.msra.mxu0 %v2549
      %3073 = vmatmul.f32.gmra.mxu0 %v2952
      %v3074 = vpop.f32.mrf.mxu0
      %v3075 = vadd.f32 %v2722, %v3074
      %3076 = vmatmul.f32.gmra.mxu0 %v2955
      %v3077 = vpop.f32.mrf.mxu0
      %v3078 = vadd.f32 %v2725, %v3077
      %3079 = vmatmul.f32.gmra.mxu0 %v2958
      %v3080 = vpop.f32.mrf.mxu0
      %v3081 = vadd.f32 %v2728, %v3080
      %3082 = vmatmul.f32.gmra.mxu0 %v2961
      %v3083 = vpop.f32.mrf.mxu0
      %v3084 = vadd.f32 %v2731, %v3083
      %3085 = vmatmul.f32.gmra.mxu0 %v2964
      %v3086 = vpop.f32.mrf.mxu0
      %v3087 = vadd.f32 %v2734, %v3086
      %3088 = vmatmul.f32.gmra.mxu0 %v2967
      %v3089 = vpop.f32.mrf.mxu0
      %v3090 = vadd.f32 %v2737, %v3089
      %3091 = vmatmul.f32.gmra.mxu0 %v2970
      %v3092 = vpop.f32.mrf.mxu0
      %v3093 = vadd.f32 %v2740, %v3092
      %3094 = vmatmul.f32.gmra.mxu0 %v2973
      %v3095 = vpop.f32.mrf.mxu0
      %v3096 = vadd.f32 %v2743, %v3095
      %3097 = vdwg.mxu0
      %3098 = vmatpush.msra.mxu0 0.0
      %3099 = vmatpush.msra.mxu0 0.0
      %3100 = vmatpush.msra.mxu0 0.0
      %3101 = vmatpush.msra.mxu0 0.0
      %3102 = vmatpush.msra.mxu0 0.0
      %3103 = vmatpush.msra.mxu0 0.0
      %3104 = vmatpush.msra.mxu0 0.0
      %3105 = vmatpush.msra.mxu0 0.0
      %3106 = vmatpush.msra.mxu0 0.0
      %3107 = vmatpush.msra.mxu0 0.0
      %3108 = vmatpush.msra.mxu0 0.0
      %3109 = vmatpush.msra.mxu0 0.0
      %3110 = vmatpush.msra.mxu0 %v2574
      %3111 = vmatpush.msra.mxu0 %v2566
      %3112 = vmatpush.msra.mxu0 %v2558
      %3113 = vmatpush.msra.mxu0 %v2550
      %3114 = vmatmul.f32.gmra.mxu0 %v2952
      %v3115 = vpop.f32.mrf.mxu0
      %v3116 = vadd.f32 %v2763, %v3115
      %3117 = vmatmul.f32.gmra.mxu0 %v2955
      %v3118 = vpop.f32.mrf.mxu0
      %v3119 = vadd.f32 %v2766, %v3118
      %3120 = vmatmul.f32.gmra.mxu0 %v2958
      %v3121 = vpop.f32.mrf.mxu0
      %v3122 = vadd.f32 %v2769, %v3121
      %3123 = vmatmul.f32.gmra.mxu0 %v2961
      %v3124 = vpop.f32.mrf.mxu0
      %v3125 = vadd.f32 %v2772, %v3124
      %3126 = vmatmul.f32.gmra.mxu0 %v2964
      %v3127 = vpop.f32.mrf.mxu0
      %v3128 = vadd.f32 %v2775, %v3127
      %3129 = vmatmul.f32.gmra.mxu0 %v2967
      %v3130 = vpop.f32.mrf.mxu0
      %v3131 = vadd.f32 %v2778, %v3130
      %3132 = vmatmul.f32.gmra.mxu0 %v2970
      %v3133 = vpop.f32.mrf.mxu0
      %v3134 = vadd.f32 %v2781, %v3133
      %3135 = vmatmul.f32.gmra.mxu0 %v2973
      %v3136 = vpop.f32.mrf.mxu0
      %v3137 = vadd.f32 %v2784, %v3136
      %3138 = vdwg.mxu0
      %3139 = vmatpush.msra.mxu0 0.0
      %3140 = vmatpush.msra.mxu0 0.0
      %3141 = vmatpush.msra.mxu0 0.0
      %3142 = vmatpush.msra.mxu0 0.0
      %3143 = vmatpush.msra.mxu0 0.0
      %3144 = vmatpush.msra.mxu0 0.0
      %3145 = vmatpush.msra.mxu0 0.0
      %3146 = vmatpush.msra.mxu0 0.0
      %3147 = vmatpush.msra.mxu0 0.0
      %3148 = vmatpush.msra.mxu0 0.0
      %3149 = vmatpush.msra.mxu0 0.0
      %3150 = vmatpush.msra.mxu0 0.0
      %3151 = vmatpush.msra.mxu0 %v2575
      %3152 = vmatpush.msra.mxu0 %v2567
      %3153 = vmatpush.msra.mxu0 %v2559
      %3154 = vmatpush.msra.mxu0 %v2551
      %3155 = vmatmul.f32.gmra.mxu0 %v2952
      %v3156 = vpop.f32.mrf.mxu0
      %v3157 = vadd.f32 %v2804, %v3156
      %3158 = vmatmul.f32.gmra.mxu0 %v2955
      %v3159 = vpop.f32.mrf.mxu0
      %v3160 = vadd.f32 %v2807, %v3159
      %3161 = vmatmul.f32.gmra.mxu0 %v2958
      %v3162 = vpop.f32.mrf.mxu0
      %v3163 = vadd.f32 %v2810, %v3162
      %3164 = vmatmul.f32.gmra.mxu0 %v2961
      %v3165 = vpop.f32.mrf.mxu0
      %v3166 = vadd.f32 %v2813, %v3165
      %3167 = vmatmul.f32.gmra.mxu0 %v2964
      %v3168 = vpop.f32.mrf.mxu0
      %v3169 = vadd.f32 %v2816, %v3168
      %3170 = vmatmul.f32.gmra.mxu0 %v2967
      %v3171 = vpop.f32.mrf.mxu0
      %v3172 = vadd.f32 %v2819, %v3171
      %3173 = vmatmul.f32.gmra.mxu0 %v2970
      %v3174 = vpop.f32.mrf.mxu0
      %v3175 = vadd.f32 %v2822, %v3174
      %3176 = vmatmul.f32.gmra.mxu0 %v2973
      %v3177 = vpop.f32.mrf.mxu0
      %v3178 = vadd.f32 %v2825, %v3177
      %3179 = vdwg.mxu0
      %3180 = vmatpush.msra.mxu0 0.0
      %3181 = vmatpush.msra.mxu0 0.0
      %3182 = vmatpush.msra.mxu0 0.0
      %3183 = vmatpush.msra.mxu0 0.0
      %3184 = vmatpush.msra.mxu0 0.0
      %3185 = vmatpush.msra.mxu0 0.0
      %3186 = vmatpush.msra.mxu0 0.0
      %3187 = vmatpush.msra.mxu0 0.0
      %3188 = vmatpush.msra.mxu0 0.0
      %3189 = vmatpush.msra.mxu0 0.0
      %3190 = vmatpush.msra.mxu0 0.0
      %3191 = vmatpush.msra.mxu0 0.0
      %3192 = vmatpush.msra.mxu0 %v2576
      %3193 = vmatpush.msra.mxu0 %v2568
      %3194 = vmatpush.msra.mxu0 %v2560
      %3195 = vmatpush.msra.mxu0 %v2552
      %3196 = vmatmul.f32.gmra.mxu0 %v2952
      %v3197 = vpop.f32.mrf.mxu0
      %v3198 = vadd.f32 %v2845, %v3197
      %3199 = vmatmul.f32.gmra.mxu0 %v2955
      %v3200 = vpop.f32.mrf.mxu0
      %v3201 = vadd.f32 %v2848, %v3200
      %3202 = vmatmul.f32.gmra.mxu0 %v2958
      %v3203 = vpop.f32.mrf.mxu0
      %v3204 = vadd.f32 %v2851, %v3203
      %3205 = vmatmul.f32.gmra.mxu0 %v2961
      %v3206 = vpop.f32.mrf.mxu0
      %v3207 = vadd.f32 %v2854, %v3206
      %3208 = vmatmul.f32.gmra.mxu0 %v2964
      %v3209 = vpop.f32.mrf.mxu0
      %v3210 = vadd.f32 %v2857, %v3209
      %3211 = vmatmul.f32.gmra.mxu0 %v2967
      %v3212 = vpop.f32.mrf.mxu0
      %v3213 = vadd.f32 %v2860, %v3212
      %3214 = vmatmul.f32.gmra.mxu0 %v2970
      %v3215 = vpop.f32.mrf.mxu0
      %v3216 = vadd.f32 %v2863, %v3215
      %3217 = vmatmul.f32.gmra.mxu0 %v2973
      %v3218 = vpop.f32.mrf.mxu0
      %v3219 = vadd.f32 %v2866, %v3218
      %3220 = vdwg.mxu0
      %3221 = vmatpush.msra.mxu0 0.0
      %3222 = vmatpush.msra.mxu0 0.0
      %3223 = vmatpush.msra.mxu0 0.0
      %3224 = vmatpush.msra.mxu0 0.0
      %3225 = vmatpush.msra.mxu0 0.0
      %3226 = vmatpush.msra.mxu0 0.0
      %3227 = vmatpush.msra.mxu0 0.0
      %3228 = vmatpush.msra.mxu0 0.0
      %3229 = vmatpush.msra.mxu0 0.0
      %3230 = vmatpush.msra.mxu0 0.0
      %3231 = vmatpush.msra.mxu0 0.0
      %3232 = vmatpush.msra.mxu0 0.0
      %3233 = vmatpush.msra.mxu0 %v2577
      %3234 = vmatpush.msra.mxu0 %v2569
      %3235 = vmatpush.msra.mxu0 %v2561
      %3236 = vmatpush.msra.mxu0 %v2553
      %3237 = vmatmul.f32.gmra.mxu0 %v2952
      %v3238 = vpop.f32.mrf.mxu0
      %v3239 = vadd.f32 %v2886, %v3238
      %3240 = vmatmul.f32.gmra.mxu0 %v2955
      %v3241 = vpop.f32.mrf.mxu0
      %v3242 = vadd.f32 %v2889, %v3241
      %3243 = vmatmul.f32.gmra.mxu0 %v2958
      %v3244 = vpop.f32.mrf.mxu0
      %v3245 = vadd.f32 %v2892, %v3244
      %3246 = vmatmul.f32.gmra.mxu0 %v2961
      %v3247 = vpop.f32.mrf.mxu0
      %v3248 = vadd.f32 %v2895, %v3247
      %3249 = vmatmul.f32.gmra.mxu0 %v2964
      %v3250 = vpop.f32.mrf.mxu0
      %v3251 = vadd.f32 %v2898, %v3250
      %3252 = vmatmul.f32.gmra.mxu0 %v2967
      %v3253 = vpop.f32.mrf.mxu0
      %v3254 = vadd.f32 %v2901, %v3253
      %3255 = vmatmul.f32.gmra.mxu0 %v2970
      %v3256 = vpop.f32.mrf.mxu0
      %v3257 = vadd.f32 %v2904, %v3256
      %3258 = vmatmul.f32.gmra.mxu0 %v2973
      %v3259 = vpop.f32.mrf.mxu0
      %v3260 = vadd.f32 %v2907, %v3259
      %3261 = vdwg.mxu0
      %3262 = vmatpush.msra.mxu0 0.0
      %3263 = vmatpush.msra.mxu0 0.0
      %3264 = vmatpush.msra.mxu0 0.0
      %3265 = vmatpush.msra.mxu0 0.0
      %3266 = vmatpush.msra.mxu0 0.0
      %3267 = vmatpush.msra.mxu0 0.0
      %3268 = vmatpush.msra.mxu0 0.0
      %3269 = vmatpush.msra.mxu0 0.0
      %3270 = vmatpush.msra.mxu0 0.0
      %3271 = vmatpush.msra.mxu0 0.0
      %3272 = vmatpush.msra.mxu0 0.0
      %3273 = vmatpush.msra.mxu0 0.0
      %3274 = vmatpush.msra.mxu0 %v2578
      %3275 = vmatpush.msra.mxu0 %v2570
      %3276 = vmatpush.msra.mxu0 %v2562
      %3277 = vmatpush.msra.mxu0 %v2554
      %3278 = vmatmul.f32.gmra.mxu0 %v2952
      %v3279 = vpop.f32.mrf.mxu0
      %v3280 = vadd.f32 %v2927, %v3279
      %3281 = vmatmul.f32.gmra.mxu0 %v2955
      %v3282 = vpop.f32.mrf.mxu0
      %v3283 = vadd.f32 %v2930, %v3282
      %3284 = vmatmul.f32.gmra.mxu0 %v2958
      %v3285 = vpop.f32.mrf.mxu0
      %v3286 = vadd.f32 %v2933, %v3285
      %3287 = vmatmul.f32.gmra.mxu0 %v2961
      %v3288 = vpop.f32.mrf.mxu0
      %v3289 = vadd.f32 %v2936, %v3288
      %3290 = vmatmul.f32.gmra.mxu0 %v2964
      %v3291 = vpop.f32.mrf.mxu0
      %v3292 = vadd.f32 %v2939, %v3291
      %3293 = vmatmul.f32.gmra.mxu0 %v2967
      %v3294 = vpop.f32.mrf.mxu0
      %v3295 = vadd.f32 %v2942, %v3294
      %3296 = vmatmul.f32.gmra.mxu0 %v2970
      %v3297 = vpop.f32.mrf.mxu0
      %v3298 = vadd.f32 %v2945, %v3297
      %3299 = vmatmul.f32.gmra.mxu0 %v2973
      %v3300 = vpop.f32.mrf.mxu0
      %v3301 = vadd.f32 %v2948, %v3300
      %3302 = vdwg.mxu0
      %s3303 = scalar_lea.vmem %s2, 512
      %v3304 = vld [vmem:[%s3303] sm:$0xff]
      %v3305 = vld [vmem:[%s3303 + $0x8] sm:$0xff]
      %v3306 = vld [vmem:[%s3303 + $0x10] sm:$0xff]
      %v3307 = vld [vmem:[%s3303 + $0x18] sm:$0xff]
      %v3308 = vld [vmem:[%s3303 + $0x20] sm:$0xff]
      %v3309 = vld [vmem:[%s3303 + $0x28] sm:$0xff]
      %v3310 = vld [vmem:[%s3303 + $0x30] sm:$0xff]
      %v3311 = vld [vmem:[%s3303 + $0x38] sm:$0xff]
      %3313 = vset.pattern.permute.xlu0 0
      %3314 = vperm.xlu0 %3313, %v3304
      %v3315 = vpop.permute.xlu0 %3314
      %3318 = vset.pattern.permute.xlu0 0
      %3319 = vperm.xlu0 %3318, %v3305
      %v3320 = vpop.permute.xlu0 %3319
      %3323 = vset.pattern.permute.xlu0 0
      %3324 = vperm.xlu0 %3323, %v3306
      %v3325 = vpop.permute.xlu0 %3324
      %3328 = vset.pattern.permute.xlu0 0
      %3329 = vperm.xlu0 %3328, %v3307
      %v3330 = vpop.permute.xlu0 %3329
      %3333 = vset.pattern.permute.xlu0 0
      %3334 = vperm.xlu0 %3333, %v3308
      %v3335 = vpop.permute.xlu0 %3334
      %3338 = vset.pattern.permute.xlu0 0
      %3339 = vperm.xlu0 %3338, %v3309
      %v3340 = vpop.permute.xlu0 %3339
      %3343 = vset.pattern.permute.xlu0 0
      %3344 = vperm.xlu0 %3343, %v3310
      %v3345 = vpop.permute.xlu0 %3344
      %3348 = vset.pattern.permute.xlu0 0
      %3349 = vperm.xlu0 %3348, %v3311
      %v3350 = vpop.permute.xlu0 %3349
      %v3352 = vadd.f32 %v2993, %v3315
      %v3353 = vadd.f32 %v3034, %v3315
      %v3354 = vadd.f32 %v3075, %v3315
      %v3355 = vadd.f32 %v3116, %v3315
      %v3356 = vadd.f32 %v3157, %v3315
      %v3357 = vadd.f32 %v3198, %v3315
      %v3358 = vadd.f32 %v3239, %v3315
      %v3359 = vadd.f32 %v3280, %v3315
      %v3360 = vadd.f32 %v2996, %v3320
      %v3361 = vadd.f32 %v3037, %v3320
      %v3362 = vadd.f32 %v3078, %v3320
      %v3363 = vadd.f32 %v3119, %v3320
      %v3364 = vadd.f32 %v3160, %v3320
      %v3365 = vadd.f32 %v3201, %v3320
      %v3366 = vadd.f32 %v3242, %v3320
      %v3367 = vadd.f32 %v3283, %v3320
      %v3368 = vadd.f32 %v2999, %v3325
      %v3369 = vadd.f32 %v3040, %v3325
      %v3370 = vadd.f32 %v3081, %v3325
      %v3371 = vadd.f32 %v3122, %v3325
      %v3372 = vadd.f32 %v3163, %v3325
      %v3373 = vadd.f32 %v3204, %v3325
      %v3374 = vadd.f32 %v3245, %v3325
      %v3375 = vadd.f32 %v3286, %v3325
      %v3376 = vadd.f32 %v3002, %v3330
      %v3377 = vadd.f32 %v3043, %v3330
      %v3378 = vadd.f32 %v3084, %v3330
      %v3379 = vadd.f32 %v3125, %v3330
      %v3380 = vadd.f32 %v3166, %v3330
      %v3381 = vadd.f32 %v3207, %v3330
      %v3382 = vadd.f32 %v3248, %v3330
      %v3383 = vadd.f32 %v3289, %v3330
      %v3384 = vadd.f32 %v3005, %v3335
      %v3385 = vadd.f32 %v3046, %v3335
      %v3386 = vadd.f32 %v3087, %v3335
      %v3387 = vadd.f32 %v3128, %v3335
      %v3388 = vadd.f32 %v3169, %v3335
      %v3389 = vadd.f32 %v3210, %v3335
      %v3390 = vadd.f32 %v3251, %v3335
      %v3391 = vadd.f32 %v3292, %v3335
      %v3392 = vadd.f32 %v3008, %v3340
      %v3393 = vadd.f32 %v3049, %v3340
      %v3394 = vadd.f32 %v3090, %v3340
      %v3395 = vadd.f32 %v3131, %v3340
      %v3396 = vadd.f32 %v3172, %v3340
      %v3397 = vadd.f32 %v3213, %v3340
      %v3398 = vadd.f32 %v3254, %v3340
      %v3399 = vadd.f32 %v3295, %v3340
      %v3400 = vadd.f32 %v3011, %v3345
      %v3401 = vadd.f32 %v3052, %v3345
      %v3402 = vadd.f32 %v3093, %v3345
      %v3403 = vadd.f32 %v3134, %v3345
      %v3404 = vadd.f32 %v3175, %v3345
      %v3405 = vadd.f32 %v3216, %v3345
      %v3406 = vadd.f32 %v3257, %v3345
      %v3407 = vadd.f32 %v3298, %v3345
      %v3408 = vadd.f32 %v3014, %v3350
      %v3409 = vadd.f32 %v3055, %v3350
      %v3410 = vadd.f32 %v3096, %v3350
      %v3411 = vadd.f32 %v3137, %v3350
      %v3412 = vadd.f32 %v3178, %v3350
      %v3413 = vadd.f32 %v3219, %v3350
      %v3414 = vadd.f32 %v3260, %v3350
      %v3415 = vadd.f32 %v3301, %v3350
      %v3416 = vmax.f32 %v3352, 0.0
      %v3417 = vmax.f32 %v3353, 0.0
      %v3418 = vmax.f32 %v3354, 0.0
      %v3419 = vmax.f32 %v3355, 0.0
      %v3420 = vmax.f32 %v3356, 0.0
      %v3421 = vmax.f32 %v3357, 0.0
      %v3422 = vmax.f32 %v3358, 0.0
      %v3423 = vmax.f32 %v3359, 0.0
      %v3424 = vmax.f32 %v3360, 0.0
      %v3425 = vmax.f32 %v3361, 0.0
      %v3426 = vmax.f32 %v3362, 0.0
      %v3427 = vmax.f32 %v3363, 0.0
      %v3428 = vmax.f32 %v3364, 0.0
      %v3429 = vmax.f32 %v3365, 0.0
      %v3430 = vmax.f32 %v3366, 0.0
      %v3431 = vmax.f32 %v3367, 0.0
      %v3432 = vmax.f32 %v3368, 0.0
      %v3433 = vmax.f32 %v3369, 0.0
      %v3434 = vmax.f32 %v3370, 0.0
      %v3435 = vmax.f32 %v3371, 0.0
      %v3436 = vmax.f32 %v3372, 0.0
      %v3437 = vmax.f32 %v3373, 0.0
      %v3438 = vmax.f32 %v3374, 0.0
      %v3439 = vmax.f32 %v3375, 0.0
      %v3440 = vmax.f32 %v3376, 0.0
      %v3441 = vmax.f32 %v3377, 0.0
      %v3442 = vmax.f32 %v3378, 0.0
      %v3443 = vmax.f32 %v3379, 0.0
      %v3444 = vmax.f32 %v3380, 0.0
      %v3445 = vmax.f32 %v3381, 0.0
      %v3446 = vmax.f32 %v3382, 0.0
      %v3447 = vmax.f32 %v3383, 0.0
      %v3448 = vmax.f32 %v3384, 0.0
      %v3449 = vmax.f32 %v3385, 0.0
      %v3450 = vmax.f32 %v3386, 0.0
      %v3451 = vmax.f32 %v3387, 0.0
      %v3452 = vmax.f32 %v3388, 0.0
      %v3453 = vmax.f32 %v3389, 0.0
      %v3454 = vmax.f32 %v3390, 0.0
      %v3455 = vmax.f32 %v3391, 0.0
      %v3456 = vmax.f32 %v3392, 0.0
      %v3457 = vmax.f32 %v3393, 0.0
      %v3458 = vmax.f32 %v3394, 0.0
      %v3459 = vmax.f32 %v3395, 0.0
      %v3460 = vmax.f32 %v3396, 0.0
      %v3461 = vmax.f32 %v3397, 0.0
      %v3462 = vmax.f32 %v3398, 0.0
      %v3463 = vmax.f32 %v3399, 0.0
      %v3464 = vmax.f32 %v3400, 0.0
      %v3465 = vmax.f32 %v3401, 0.0
      %v3466 = vmax.f32 %v3402, 0.0
      %v3467 = vmax.f32 %v3403, 0.0
      %v3468 = vmax.f32 %v3404, 0.0
      %v3469 = vmax.f32 %v3405, 0.0
      %v3470 = vmax.f32 %v3406, 0.0
      %v3471 = vmax.f32 %v3407, 0.0
      %v3472 = vmax.f32 %v3408, 0.0
      %v3473 = vmax.f32 %v3409, 0.0
      %v3474 = vmax.f32 %v3410, 0.0
      %v3475 = vmax.f32 %v3411, 0.0
      %v3476 = vmax.f32 %v3412, 0.0
      %v3477 = vmax.f32 %v3413, 0.0
      %v3478 = vmax.f32 %v3414, 0.0
      %v3479 = vmax.f32 %v3415, 0.0
      %v3480 = vld [vmem:[#allocation2] sm:$0xff]
      %v3481 = vld [vmem:[#allocation2 + $0x8] sm:$0xff]
      %v3482 = vld [vmem:[#allocation2 + $0x10] sm:$0xff]
      %v3483 = vld [vmem:[#allocation2 + $0x18] sm:$0xff]
      %v3484 = vld [vmem:[#allocation2 + $0x20] sm:$0xff]
      %v3485 = vld [vmem:[#allocation2 + $0x28] sm:$0xff]
      %v3486 = vld [vmem:[#allocation2 + $0x30] sm:$0xff]
      %v3487 = vld [vmem:[#allocation2 + $0x38] sm:$0xff]
      %v3488 = vadd.f32 %v3416, %v3417
      %v3489 = vadd.f32 %v3424, %v3425
      %v3490 = vadd.f32 %v3432, %v3433
      %v3491 = vadd.f32 %v3440, %v3441
      %v3492 = vadd.f32 %v3448, %v3449
      %v3493 = vadd.f32 %v3456, %v3457
      %v3494 = vadd.f32 %v3464, %v3465
      %v3495 = vadd.f32 %v3472, %v3473
      %v3496 = vadd.f32 %v3488, %v3418
      %v3497 = vadd.f32 %v3489, %v3426
      %v3498 = vadd.f32 %v3490, %v3434
      %v3499 = vadd.f32 %v3491, %v3442
      %v3500 = vadd.f32 %v3492, %v3450
      %v3501 = vadd.f32 %v3493, %v3458
      %v3502 = vadd.f32 %v3494, %v3466
      %v3503 = vadd.f32 %v3495, %v3474
      %v3504 = vadd.f32 %v3496, %v3419
      %v3505 = vadd.f32 %v3497, %v3427
      %v3506 = vadd.f32 %v3498, %v3435
      %v3507 = vadd.f32 %v3499, %v3443
      %v3508 = vadd.f32 %v3500, %v3451
      %v3509 = vadd.f32 %v3501, %v3459
      %v3510 = vadd.f32 %v3502, %v3467
      %v3511 = vadd.f32 %v3503, %v3475
      %v3512 = vadd.f32 %v3504, %v3420
      %v3513 = vadd.f32 %v3505, %v3428
      %v3514 = vadd.f32 %v3506, %v3436
      %v3515 = vadd.f32 %v3507, %v3444
      %v3516 = vadd.f32 %v3508, %v3452
      %v3517 = vadd.f32 %v3509, %v3460
      %v3518 = vadd.f32 %v3510, %v3468
      %v3519 = vadd.f32 %v3511, %v3476
      %v3520 = vadd.f32 %v3512, %v3421
      %v3521 = vadd.f32 %v3513, %v3429
      %v3522 = vadd.f32 %v3514, %v3437
      %v3523 = vadd.f32 %v3515, %v3445
      %v3524 = vadd.f32 %v3516, %v3453
      %v3525 = vadd.f32 %v3517, %v3461
      %v3526 = vadd.f32 %v3518, %v3469
      %v3527 = vadd.f32 %v3519, %v3477
      %v3528 = vadd.f32 %v3520, %v3422
      %v3529 = vadd.f32 %v3521, %v3430
      %v3530 = vadd.f32 %v3522, %v3438
      %v3531 = vadd.f32 %v3523, %v3446
      %v3532 = vadd.f32 %v3524, %v3454
      %v3533 = vadd.f32 %v3525, %v3462
      %v3534 = vadd.f32 %v3526, %v3470
      %v3535 = vadd.f32 %v3527, %v3478
      %v3536 = vadd.f32 %v3528, %v3423
      %v3537 = vadd.f32 %v3529, %v3431
      %v3538 = vadd.f32 %v3530, %v3439
      %v3539 = vadd.f32 %v3531, %v3447
      %v3540 = vadd.f32 %v3532, %v3455
      %v3541 = vadd.f32 %v3533, %v3463
      %v3542 = vadd.f32 %v3534, %v3471
      %v3543 = vadd.f32 %v3535, %v3479
      %v3544 = vadd.f32 %v3480, %v3536
      %v3545 = vadd.f32 %v3481, %v3537
      %v3546 = vadd.f32 %v3482, %v3538
      %v3547 = vadd.f32 %v3483, %v3539
      %v3548 = vadd.f32 %v3484, %v3540
      %v3549 = vadd.f32 %v3485, %v3541
      %v3550 = vadd.f32 %v3486, %v3542
      %v3551 = vadd.f32 %v3487, %v3543
      %3552 = vst [vmem:[#allocation2] sm:$0xff] %v3544
      %3553 = vst [vmem:[#allocation2 + $0x8] sm:$0xff] %v3545
      %3554 = vst [vmem:[#allocation2 + $0x10] sm:$0xff] %v3546
      %3555 = vst [vmem:[#allocation2 + $0x18] sm:$0xff] %v3547
      %3556 = vst [vmem:[#allocation2 + $0x20] sm:$0xff] %v3548
      %3557 = vst [vmem:[#allocation2 + $0x28] sm:$0xff] %v3549
      %3558 = vst [vmem:[#allocation2 + $0x30] sm:$0xff] %v3550
      %3559 = vst [vmem:[#allocation2 + $0x38] sm:$0xff] %v3551
      // Predicated region
      $region37: #{slowfast_forward.1} parent=31 // pred_check
        %p3560 = pneg %p275
      $region38: #{slowfast_forward.1} parent=31 // pred_check_branch
        %3562 = sbr.rel (%p3560) target = $region40
      $region39: #{slowfast_forward.1} parent=31 // pred_region
        %v3563 = vld [vmem:[#allocation2] sm:$0xff]
        %v3564 = vld [vmem:[#allocation2 + $0x8] sm:$0xff]
        %v3565 = vld [vmem:[#allocation2 + $0x10] sm:$0xff]
        %v3566 = vld [vmem:[#allocation2 + $0x18] sm:$0xff]
        %v3567 = vld [vmem:[#allocation2 + $0x20] sm:$0xff]
        %v3568 = vld [vmem:[#allocation2 + $0x28] sm:$0xff]
        %v3569 = vld [vmem:[#allocation2 + $0x30] sm:$0xff]
        %v3570 = vld [vmem:[#allocation2 + $0x38] sm:$0xff]
        %3571 = vadd.xlane.f32.xlu0 %v3563
        %v3572 = vpop.xlane.xlu0 %3571
        %3573 = vadd.xlane.f32.xlu0 %v3564
        %v3574 = vpop.xlane.xlu0 %3573
        %3575 = vadd.xlane.f32.xlu0 %v3565
        %v3576 = vpop.xlane.xlu0 %3575
        %3577 = vadd.xlane.f32.xlu0 %v3566
        %v3578 = vpop.xlane.xlu0 %3577
        %3579 = vadd.xlane.f32.xlu0 %v3567
        %v3580 = vpop.xlane.xlu0 %3579
        %3581 = vadd.xlane.f32.xlu0 %v3568
        %v3582 = vpop.xlane.xlu0 %3581
        %3583 = vadd.xlane.f32.xlu0 %v3569
        %v3584 = vpop.xlane.xlu0 %3583
        %3585 = vadd.xlane.f32.xlu0 %v3570
        %v3586 = vpop.xlane.xlu0 %3585
        %v3587 = vld [vmem:[#allocation3] sm:$0xff]
        %v3588 = vld [vmem:[#allocation3 + $0x8] sm:$0xff]
        %3589 = vadd.xlane.f32.xlu0 %v3587
        %v3590 = vpop.xlane.xlu0 %3589
        %3591 = vadd.xlane.f32.xlu0 %v3588
        %v3592 = vpop.xlane.xlu0 %3591
        %v3593 = vmul.f32 %v3572, 0.0009765625
        %v3594 = vmul.f32 %v3574, 0.0009765625
        %v3595 = vmul.f32 %v3576, 0.0009765625
        %v3596 = vmul.f32 %v3578, 0.0009765625
        %v3597 = vmul.f32 %v3580, 0.0009765625
        %v3598 = vmul.f32 %v3582, 0.0009765625
        %v3599 = vmul.f32 %v3584, 0.0009765625
        %v3600 = vmul.f32 %v3586, 0.0009765625
        %vm3601 = vcmask 7168
        %3602 = vst.msk [vmem:[%s269] sm:$0xff] %vm3601, %v3593
        %3603 = vst.msk [vmem:[%s269 + $0x8] sm:$0xff] %vm3601, %v3594
        %3604 = vst.msk [vmem:[%s269 + $0x10] sm:$0xff] %vm3601, %v3595
        %3605 = vst.msk [vmem:[%s269 + $0x18] sm:$0xff] %vm3601, %v3596
        %3606 = vst.msk [vmem:[%s269 + $0x20] sm:$0xff] %vm3601, %v3597
        %3607 = vst.msk [vmem:[%s269 + $0x28] sm:$0xff] %vm3601, %v3598
        %3608 = vst.msk [vmem:[%s269 + $0x30] sm:$0xff] %vm3601, %v3599
        %3609 = vst.msk [vmem:[%s269 + $0x38] sm:$0xff] %vm3601, %v3600
        %v3610 = vmul.f32 %v3590, 0.00024414063
        %v3611 = vmul.f32 %v3592, 0.00024414063
        %3612 = vst.msk [vmem:[%s274] sm:$0xff] %vm3601, %v3610
        %3613 = vst.msk [vmem:[%s274 + $0x8] sm:$0xff] %vm3601, %v3611
      $region40: #{slowfast_forward.1} parent=31 // pred_fallthru
        _
      %p3614 = scmp.lt.s32.totalorder %s20, 1
      %s3615 = scalar_select %p3614, %s20, 1
      %s3616 = smul.addr %s3615, 8
      %s3617 = smul.addr %s3616, 8
      %s3618 = scalar_lea.vmem %s3, %s3617
      %p3619 = scmp.lt.s32.totalorder %s20, 1
      %s3620 = scalar_select %p3619, %s20, 1
      %s3621 = smul.addr %s3620, 2
      %s3622 = smul.addr %s3621, 8
      %s3623 = scalar_lea.vmem %s4, %s3622
      // Predicated region
      $region41: #{slowfast_forward.1} parent=31 // pred_check
        %p3624 = pneg %p123
      $region42: #{slowfast_forward.1} parent=31 // pred_check_branch
        %3626 = sbr.rel (%p3624) target = $region44
      $region43: #{slowfast_forward.1} parent=31 // pred_region
        _
      $region44: #{slowfast_forward.1} parent=31 // pred_fallthru
        _
      // Predicated region
      $region45: #{slowfast_forward.1} parent=31 // pred_check
        %p3627 = pneg %p149
      $region46: #{slowfast_forward.1} parent=31 // pred_check_branch
        %3629 = sbr.rel (%p3627) target = $region48
      $region47: #{slowfast_forward.1} parent=31 // pred_region
        _
      $region48: #{slowfast_forward.1} parent=31 // pred_fallthru
        _
    $region32: #{slowfast_forward.1} parent=5 // pred_fallthru
      _
    %p3630 = scmp.le.s32.totalorder 2, %s11
    // Predicated region
    $region49: #{slowfast_forward.1} parent=5 // pred_check
      %p3631 = pneg %p3630
    $region50: #{slowfast_forward.1} parent=5 // pred_check_branch
      %3633 = sbr.rel (%p3631) target = $region52
    $region51: #{slowfast_forward.1} parent=5 // pred_region
      %s3634 = ssub.s32 %s11, 2
      // Predicated region
      $region53: #{slowfast_forward.1} parent=51 // pred_check
        %p3635 = pneg %p129
      $region54: #{slowfast_forward.1} parent=51 // pred_check_branch
        %3637 = sbr.rel (%p3635) target = $region56
      $region55: #{slowfast_forward.1} parent=51 // pred_region
        %p3638 = scmp.lt.s32.totalorder %s22, 1
        %s3639 = scalar_select %p3638, %s22, 1
        %s3640 = smul.addr %s3639, 8
        %s3641 = smul.addr %s3640, 8
        %s3642 = scalar_lea.vmem %s3, %s3641
      $region56: #{slowfast_forward.1} parent=51 // pred_fallthru
        _
      // Predicated region
      $region57: #{slowfast_forward.1} parent=51 // pred_check
        %p3643 = pneg %p155
      $region58: #{slowfast_forward.1} parent=51 // pred_check_branch
        %3645 = sbr.rel (%p3643) target = $region60
      $region59: #{slowfast_forward.1} parent=51 // pred_region
        %p3646 = scmp.lt.s32.totalorder %s22, 1
        %s3647 = scalar_select %p3646, %s22, 1
        %s3648 = smul.addr %s3647, 2
        %s3649 = smul.addr %s3648, 8
        %s3650 = scalar_lea.vmem %s4, %s3649
      $region60: #{slowfast_forward.1} parent=51 // pred_fallthru
        _
    $region52: #{slowfast_forward.1} parent=5 // pred_fallthru
      _
  $region6: #{slowfast_forward.1} parent=0 // loop_footer
    %s15 = sadd.s32 1, %s11
  $region7: #{slowfast_forward.1} parent=0 // loop_footer_branch
    %10 = sbr.rel target = $region3
  $region8: #{slowfast_forward.1} parent=0 // loop_exit
    _

</llo_original>
